<compile_context>
chip_gen: v6e
topology: v6e:2x2x1
jax: 0.10.0
libtpu: 0.0.40
codegen_flags: <defaults>
</compile_context>

<pallas_src>
import functools

import jax
import jax.numpy as jnp
from jax.experimental import pallas as pl
from jax.experimental.pallas import tpu as pltpu

EPS = 1e-5
HIGHEST = jax.lax.Precision.HIGHEST


def _round_up(x, m):
    return ((x + m - 1) // m) * m


# ---------------------------------------------------------------------------
# Fused per-layer Pallas kernel (one batch element per grid step)
# ---------------------------------------------------------------------------
def _dense_layer_kernel(x_ref, rmask_ref, s1_ref, b1_ref, w1_ref, c1_ref,
                        band_ref, b2_ref, o_ref, *, hs, wg, out_lanes):
    """x_ref:(R, W*Cin) folded rows; o_ref:(R, out_lanes), lanes [0,W*G) used."""
    r = x_ref.shape[0]
    lh = w1_ref.shape[1]

    # Stage 1: BN1 + ReLU + 1x1x1 conv (BN2 folded into w1/c1) + ReLU.
    # bf16 matmul operands, f32 accumulate.  rmask zeroes all pad rows.
    a = jnp.maximum(x_ref[...] * s1_ref[...] + b1_ref[...], 0.0)
    h = jnp.dot(a.astype(jnp.bfloat16), w1_ref[...],
                preferred_element_type=jnp.float32) + c1_ref[...]
    h = jnp.maximum(h, 0.0) * rmask_ref[...]

    # Stage 2: 3x3x3 conv as ONE wide matmul.  Each of the 9 (kd, kh) taps is
    # a (W*C4, W*G) band slab (the 3 kw taps folded in, zero padding along w
    # implicit in the band).  Zero-extend rows so every shifted slice of the
    # result is in range; the extension rows realize the d/h zero padding.
    ext = hs + 1
    zrow = jnp.zeros((ext, lh), jnp.float32)
    h_ext = jnp.concatenate([zrow, h, zrow], axis=0).astype(jnp.bfloat16)
    res = jnp.dot(h_ext, band_ref[...],
                  preferred_element_type=jnp.float32)      # (r + 2*ext, 9*wg)

    acc = None
    for t in range(9):
        kd, kh = divmod(t, 3)
        start = kd * hs + kh      # kd shifts HS-aligned; kh shifts are +-1 rows
        contrib = res[start:start + r, t * wg:(t + 1) * wg]
        acc = contrib if acc is None else acc + contrib
    out = (acc + b2_ref[...]) * rmask_ref[...]

    # Lane-dense store: pad the minor dim up to out_lanes (>= 128).
    if out_lanes > wg:
        pad = jnp.zeros((r, out_lanes - wg), jnp.float32)
        out = jnp.concatenate([out, pad], axis=-1)
    o_ref[...] = out


# ---------------------------------------------------------------------------
# One-time host-side parameter folding (pure JAX, outside the forward path)
# ---------------------------------------------------------------------------
def _fold_bn(gamma, beta, mean, var):
    scale = gamma / jnp.sqrt(var + EPS)
    return scale, beta - mean * scale


def prepare_layer(p, cin, growth, W):
    """Fold BN into the convs and build the lane-folded kernel operands."""
    c4 = 4 * growth
    s1, b1 = _fold_bn(p["gamma1"], p["beta1"], p["mean1"], p["var1"])
    s2, b2bn = _fold_bn(p["gamma2"], p["beta2"], p["mean2"], p["var2"])

    w1m = p["w1"].reshape(c4, cin).T                       # (cin, c4)
    w1f = w1m * s2[None, :]                                # BN2 folded (exact: ReLU follows affine)
    c1f = p["b1"] * s2 + b2bn

    w1bd = jnp.kron(jnp.eye(W, dtype=jnp.float32), w1f)    # (W*cin, W*c4) block-diag over w
    s1w = jnp.tile(s1, W)[None, :]
    b1w = jnp.tile(b1, W)[None, :]
    c1w = jnp.tile(c1f, W)[None, :]

    # Banded 3x3x3 weights: one (W*c4, W*g) slab per (kd, kh) tap, kw folded.
    w2 = p["w2"]                                           # (g, c4, 3, 3, 3) torch layout
    slabs = []
    for kd in range(3):
        for kh in range(3):
            slab = sum(jnp.kron(jnp.eye(W, k=1 - kw, dtype=jnp.float32),
                                w2[:, :, kd, kh, kw].T) for kw in range(3))
            slabs.append(slab)
    band = jnp.concatenate(slabs, axis=1)                  # (W*c4, 9*W*g)
    b2w = jnp.tile(p["b2"], W)[None, :]

    return dict(s1=s1w, b1=b1w, w1=w1bd.astype(jnp.bfloat16), c1=c1w,
                band=band.astype(jnp.bfloat16), b2=b2w)


def make_row_mask(D, H, hs):
    m = jnp.zeros((D + 2, hs), jnp.float32).at[1:D + 1, 1:H + 1].set(1.0)
    return m.reshape((D + 2) * hs, 1)


# ---------------------------------------------------------------------------
# Folded activation layout (resident across layers)
# ---------------------------------------------------------------------------
def fold_activation(x5, hs):
    # (N, D, H, W, C) -> (N, (D+2)*hs, W*C); voxel (d, h) lives at row
    # (d+1)*hs + (h+1); all other rows are zero padding.
    n, d, h, w, c = x5.shape
    xp = jnp.pad(x5, ((0, 0), (1, 1), (1, hs - h - 1), (0, 0), (0, 0)))
    return xp.reshape(n, (d + 2) * hs, w * c)


def unfold_activation(xf, D, H, W, C, hs):
    n = xf.shape[0]
    return xf.reshape(n, D + 2, hs, W, C)[:, 1:D + 1, 1:H + 1]


# ---------------------------------------------------------------------------
# Fused dense layer (one pallas_call) and block forward
# ---------------------------------------------------------------------------
def fused_dense_layer(xf, rmask, prep, *, hs, W, growth):
    n, r, lx = xf.shape
    lh = prep["w1"].shape[1]
    wg = W * growth
    out_lanes = max(128, _round_up(wg, 128))

    kernel = functools.partial(_dense_layer_kernel, hs=hs, wg=wg,
                               out_lanes=out_lanes)
    flops = n * (2 * r * lx * lh + 2 * (r + 2 * (hs + 1)) * lh * 9 * wg)
    bytes_accessed = (4 * (xf.size + n * r * out_lanes + rmask.size)
                      + 2 * (prep["w1"].size + prep["band"].size)
                      + 4 * (prep["s1"].size + prep["b1"].size
                             + prep["c1"].size + prep["b2"].size))

    return pl.pallas_call(
        kernel,
        out_shape=jax.ShapeDtypeStruct((n, r, out_lanes), jnp.float32),
        grid=(n,),
        in_specs=[
            pl.BlockSpec((None, r, lx), lambda i: (i, 0, 0)),   # folded x
            pl.BlockSpec((r, 1), lambda i: (0, 0)),             # row mask
            pl.BlockSpec((1, lx), lambda i: (0, 0)),            # BN1 scale
            pl.BlockSpec((1, lx), lambda i: (0, 0)),            # BN1 shift
            pl.BlockSpec((lx, lh), lambda i: (0, 0)),           # 1x1x1 weight (bf16)
            pl.BlockSpec((1, lh), lambda i: (0, 0)),            # stage-1 bias
            pl.BlockSpec((lh, 9 * wg), lambda i: (0, 0)),       # banded 3x3x3 (bf16)
            pl.BlockSpec((1, wg), lambda i: (0, 0)),            # conv2 bias
        ],
        out_specs=pl.BlockSpec((None, r, out_lanes), lambda i: (i, 0, 0)),
        compiler_params=pltpu.CompilerParams(
            dimension_semantics=("parallel",),
            vmem_limit_bytes=32 * 1024 * 1024),
        cost_estimate=pl.CostEstimate(flops=int(flops), transcendentals=0,
                                      bytes_accessed=int(bytes_accessed)),
    )(xf, rmask, prep["s1"], prep["b1"], prep["w1"], prep["c1"],
      prep["band"], prep["b2"])


def dense_block_forward(x_ncdhw, prepped, rmask, *, D, H, W, growth):
    n = x_ncdhw.shape[0]
    hs = _round_up(H + 2, 8)
    x5 = jnp.transpose(x_ncdhw, (0, 2, 3, 4, 1))           # NCDHW -> NDHWC
    c = x5.shape[-1]
    xf = fold_activation(x5, hs)                           # (N, R, W*C)
    r = xf.shape[1]
    wg = W * growth
    for prep in prepped:
        out = fused_dense_layer(xf, rmask, prep, hs=hs, W=W, growth=growth)
        xf4 = xf.reshape(n, r, W, c)
        o4 = out[..., :wg].reshape(n, r, W, growth)
        c += growth
        xf = jnp.concatenate([xf4, o4], axis=-1).reshape(n, r, W * c)
    x5_out = unfold_activation(xf, D, H, W, c, hs)
    return jnp.transpose(x5_out, (0, 4, 1, 2, 3))          # back to NCDHW


# ---------------------------------------------------------------------------
# Pure-JAX f32 reference (im2col, HIGHEST precision) for validation
# ---------------------------------------------------------------------------
def _im2col(h5):
    n, d, h, w, c = h5.shape
    hp = jnp.pad(h5, ((0, 0), (1, 1), (1, 1), (1, 1), (0, 0)))
    taps = []
    for kd in range(3):
        for kh in range(3):
            for kw in range(3):
                taps.append(hp[:, kd:kd + d, kh:kh + h, kw:kw + w, :])
    return jnp.concatenate(taps, axis=-1).reshape(n * d * h * w, 27 * c)


def dense_layer_reference(x5, p):
    n, d, h, w, cin = x5.shape
    growth = p["w2"].shape[0]
    c4 = 4 * growth
    s1, b1 = _fold_bn(p["gamma1"], p["beta1"], p["mean1"], p["var1"])
    s2, b2 = _fold_bn(p["gamma2"], p["beta2"], p["mean2"], p["var2"])
    w1m = p["w1"].reshape(c4, cin).T
    w2m = jnp.transpose(p["w2"], (2, 3, 4, 1, 0)).reshape(27 * c4, growth)

    x2d = x5.reshape(-1, cin)
    a = jnp.maximum(x2d * s1 + b1, 0.0)
    y = jnp.dot(a, w1m, precision=HIGHEST) + p["b1"]
    hh = jnp.maximum(y * s2 + b2, 0.0)
    patches = _im2col(hh.reshape(n, d, h, w, c4))
    out2d = jnp.dot(patches, w2m, precision=HIGHEST) + p["b2"]
    return jnp.concatenate([x5, out2d.reshape(n, d, h, w, growth)], axis=-1)


def dense_block_reference(x_ncdhw, params):
    x5 = jnp.transpose(x_ncdhw, (0, 2, 3, 4, 1))
    for p in params:
        x5 = dense_layer_reference(x5, p)
    return jnp.transpose(x5, (0, 4, 1, 2, 3))


# ---------------------------------------------------------------------------
# Deterministic synthetic parameters (torch Conv3d / BatchNorm3d layouts)
# ---------------------------------------------------------------------------
def init_dense_layer(key, cin, growth):
    c4 = 4 * growth
    ks = jax.random.split(key, 12)
    n = jax.random.normal
    u = jax.random.uniform
    return dict(
        gamma1=u(ks[0], (cin,), minval=0.5, maxval=1.5),
        beta1=0.1 * n(ks[1], (cin,)),
        mean1=0.1 * n(ks[2], (cin,)),
        var1=u(ks[3], (cin,), minval=0.5, maxval=1.5),
        w1=0.1 * n(ks[4], (c4, cin, 1, 1, 1)),
        b1=0.1 * n(ks[5], (c4,)),
        gamma2=u(ks[6], (c4,), minval=0.5, maxval=1.5),
        beta2=0.1 * n(ks[7], (c4,)),
        mean2=0.1 * n(ks[8], (c4,)),
        var2=u(ks[9], (c4,), minval=0.5, maxval=1.5),
        w2=0.05 * n(ks[10], (growth, c4, 3, 3, 3)),
        b2=0.1 * n(ks[11], (growth,)),
    )


# ---------------------------------------------------------------------------
if __name__ == "__main__":
    key = jax.random.PRNGKey(0)
    N, C, D, H, W = 2, 4, 8, 8, 8
    growth, num_layers = 4, 3

    kx, kp = jax.random.split(key)
    x = jax.random.normal(kx, (N, C, D, H, W), dtype=jnp.float32)
    layer_keys = jax.random.split(kp, num_layers)
    params = [init_dense_layer(layer_keys[i], C + i * growth, growth)
              for i in range(num_layers)]

    # Fold BN + conv weights into the kernel's lane layout ONCE, outside the
    # jitted forward path (inference-mode running statistics).
    hs = _round_up(H + 2, 8)
    prepped = [prepare_layer(params[i], C + i * growth, growth, W)
               for i in range(num_layers)]
    rmask = make_row_mask(D, H, hs)

    fwd = jax.jit(functools.partial(dense_block_forward,
                                    D=D, H=H, W=W, growth=growth))
    out = jax.block_until_ready(fwd(x, prepped, rmask))
    assert out.shape == (N, C + growth * num_layers, D, H, W), out.shape

    ref = jax.block_until_ready(jax.jit(dense_block_reference)(x, params))
    max_err = float(jnp.max(jnp.abs(out - ref)))
    # Kernel uses bf16 matmul operands (f32 accumulation); reference is f32
    # HIGHEST, so allow ~1e-2 absolute error across the 3 stacked layers.
    assert max_err < 1e-2, f"mismatch vs reference: {max_err}"
    print("KERNEL_OK")
</pallas_src>

<mosaic_0001>
module attributes {stable_mosaic.version = 11 : i64} {
  func.func @_dense_layer_kernel(%arg0: i32, %arg1: memref<1x160x32xf32, #tpu.memory_space<vmem>>, %arg2: memref<160x1xf32, #tpu.memory_space<vmem>>, %arg3: memref<1x32xf32, #tpu.memory_space<vmem>>, %arg4: memref<1x32xf32, #tpu.memory_space<vmem>>, %arg5: memref<32x128xbf16, #tpu.memory_space<vmem>>, %arg6: memref<1x128xf32, #tpu.memory_space<vmem>>, %arg7: memref<128x288xbf16, #tpu.memory_space<vmem>>, %arg8: memref<1x32xf32, #tpu.memory_space<vmem>>, %arg9: memref<1x160x128xf32, #tpu.memory_space<vmem>>) attributes {dimension_semantics = [#tpu.dimension_semantics<parallel>], iteration_bounds = array<i64: 2>, scalar_prefetch = 0 : i64, scratch_operands = 0 : i64, tpu.core_type = #tpu.core_type<tc>, window_params = [{transform_indices = @transform_0, window_bounds = array<i64: 1, 160, 32>}, {pipeline_mode = #tpu.pipeline_mode<synchronous>, transform_indices = @transform_1, window_bounds = array<i64: 160, 1>}, {pipeline_mode = #tpu.pipeline_mode<synchronous>, transform_indices = @transform_2, window_bounds = array<i64: 1, 32>}, {pipeline_mode = #tpu.pipeline_mode<synchronous>, transform_indices = @transform_3, window_bounds = array<i64: 1, 32>}, {pipeline_mode = #tpu.pipeline_mode<synchronous>, transform_indices = @transform_4, window_bounds = array<i64: 32, 128>}, {pipeline_mode = #tpu.pipeline_mode<synchronous>, transform_indices = @transform_5, window_bounds = array<i64: 1, 128>}, {pipeline_mode = #tpu.pipeline_mode<synchronous>, transform_indices = @transform_6, window_bounds = array<i64: 128, 288>}, {pipeline_mode = #tpu.pipeline_mode<synchronous>, transform_indices = @transform_7, window_bounds = array<i64: 1, 32>}, {transform_indices = @transform_8, window_bounds = array<i64: 1, 160, 128>}]} {
    %c0 = arith.constant 0 : index
    %c0_0 = arith.constant 0 : index
    %c0_1 = arith.constant 0 : index
    %0 = vector.load %arg1[%c0, %c0_0, %c0_1] : memref<1x160x32xf32, #tpu.memory_space<vmem>>, vector<1x160x32xf32>
    %1 = vector.shape_cast %0 : vector<1x160x32xf32> to vector<160x32xf32>
    %c0_2 = arith.constant 0 : index
    %c0_3 = arith.constant 0 : index
    %2 = vector.load %arg3[%c0_2, %c0_3] : memref<1x32xf32, #tpu.memory_space<vmem>>, vector<1x32xf32>
    %3 = vector.broadcast %2 : vector<1x32xf32> to vector<160x32xf32>
    %4 = arith.mulf %1, %3 : vector<160x32xf32>
    %c0_4 = arith.constant 0 : index
    %c0_5 = arith.constant 0 : index
    %5 = vector.load %arg4[%c0_4, %c0_5] : memref<1x32xf32, #tpu.memory_space<vmem>>, vector<1x32xf32>
    %6 = vector.broadcast %5 : vector<1x32xf32> to vector<160x32xf32>
    %7 = arith.addf %4, %6 : vector<160x32xf32>
    %cst = arith.constant 0.000000e+00 : f32
    %8 = vector.broadcast %cst : f32 to vector<160x32xf32>
    %9 = arith.maximumf %7, %8 : vector<160x32xf32>
    %10 = arith.truncf %9 : vector<160x32xf32> to vector<160x32xbf16>
    %c0_6 = arith.constant 0 : index
    %c0_7 = arith.constant 0 : index
    %11 = vector.load %arg5[%c0_6, %c0_7] : memref<32x128xbf16, #tpu.memory_space<vmem>>, vector<32x128xbf16>
    %cst_8 = arith.constant dense<0.000000e+00> : vector<160x128xf32>
    %12 = tpu.matmul %10, %11, %cst_8 {dimension_numbers = #tpu.dot_dimension_numbers<[1], [0], [0], [1], [0, 0, 1, 1], [], []>} : vector<160x32xbf16>, vector<32x128xbf16>, vector<160x128xf32> -> vector<160x128xf32>
    %c0_9 = arith.constant 0 : index
    %c0_10 = arith.constant 0 : index
    %13 = vector.load %arg6[%c0_9, %c0_10] : memref<1x128xf32, #tpu.memory_space<vmem>>, vector<1x128xf32>
    %14 = vector.broadcast %13 : vector<1x128xf32> to vector<160x128xf32>
    %15 = arith.addf %12, %14 : vector<160x128xf32>
    %cst_11 = arith.constant 0.000000e+00 : f32
    %16 = vector.broadcast %cst_11 : f32 to vector<160x128xf32>
    %17 = arith.maximumf %15, %16 : vector<160x128xf32>
    %c0_12 = arith.constant 0 : index
    %c0_13 = arith.constant 0 : index
    %18 = vector.load %arg2[%c0_12, %c0_13] : memref<160x1xf32, #tpu.memory_space<vmem>>, vector<160x1xf32>
    %19 = vector.broadcast %18 : vector<160x1xf32> to vector<160x128xf32>
    %20 = arith.mulf %17, %19 : vector<160x128xf32>
    %cst_14 = arith.constant 0.000000e+00 : f32
    %21 = vector.broadcast %cst_14 : f32 to vector<17x128xf32>
    %22 = tpu.concatenate %21, %20, %21 in 0 : vector<17x128xf32>, vector<160x128xf32>, vector<17x128xf32> -> vector<194x128xf32>
    %23 = arith.truncf %22 : vector<194x128xf32> to vector<194x128xbf16>
    %c0_15 = arith.constant 0 : index
    %c0_16 = arith.constant 0 : index
    %24 = vector.load %arg7[%c0_15, %c0_16] : memref<128x288xbf16, #tpu.memory_space<vmem>>, vector<128x288xbf16>
    %cst_17 = arith.constant dense<0.000000e+00> : vector<194x288xf32>
    %25 = tpu.matmul %23, %24, %cst_17 {dimension_numbers = #tpu.dot_dimension_numbers<[1], [0], [0], [1], [0, 0, 1, 1], [], []>} : vector<194x128xbf16>, vector<128x288xbf16>, vector<194x288xf32> -> vector<194x288xf32>
    %26 = vector.extract_strided_slice %25 {offsets = [0, 0], sizes = [160, 32], strides = [1, 1]} : vector<194x288xf32> to vector<160x32xf32>
    %27 = vector.extract_strided_slice %25 {offsets = [1, 32], sizes = [160, 32], strides = [1, 1]} : vector<194x288xf32> to vector<160x32xf32>
    %28 = arith.addf %26, %27 : vector<160x32xf32>
    %29 = vector.extract_strided_slice %25 {offsets = [2, 64], sizes = [160, 32], strides = [1, 1]} : vector<194x288xf32> to vector<160x32xf32>
    %30 = arith.addf %28, %29 : vector<160x32xf32>
    %31 = vector.extract_strided_slice %25 {offsets = [16, 96], sizes = [160, 32], strides = [1, 1]} : vector<194x288xf32> to vector<160x32xf32>
    %32 = arith.addf %30, %31 : vector<160x32xf32>
    %33 = vector.extract_strided_slice %25 {offsets = [17, 128], sizes = [160, 32], strides = [1, 1]} : vector<194x288xf32> to vector<160x32xf32>
    %34 = arith.addf %32, %33 : vector<160x32xf32>
    %35 = vector.extract_strided_slice %25 {offsets = [18, 160], sizes = [160, 32], strides = [1, 1]} : vector<194x288xf32> to vector<160x32xf32>
    %36 = arith.addf %34, %35 : vector<160x32xf32>
    %37 = vector.extract_strided_slice %25 {offsets = [32, 192], sizes = [160, 32], strides = [1, 1]} : vector<194x288xf32> to vector<160x32xf32>
    %38 = arith.addf %36, %37 : vector<160x32xf32>
    %39 = vector.extract_strided_slice %25 {offsets = [33, 224], sizes = [160, 32], strides = [1, 1]} : vector<194x288xf32> to vector<160x32xf32>
    %40 = arith.addf %38, %39 : vector<160x32xf32>
    %41 = vector.extract_strided_slice %25 {offsets = [34, 256], sizes = [160, 32], strides = [1, 1]} : vector<194x288xf32> to vector<160x32xf32>
    %42 = arith.addf %40, %41 : vector<160x32xf32>
    %c0_18 = arith.constant 0 : index
    %c0_19 = arith.constant 0 : index
    %43 = vector.load %arg8[%c0_18, %c0_19] : memref<1x32xf32, #tpu.memory_space<vmem>>, vector<1x32xf32>
    %44 = vector.broadcast %43 : vector<1x32xf32> to vector<160x32xf32>
    %45 = arith.addf %42, %44 : vector<160x32xf32>
    %c0_20 = arith.constant 0 : index
    %c0_21 = arith.constant 0 : index
    %46 = vector.load %arg2[%c0_20, %c0_21] : memref<160x1xf32, #tpu.memory_space<vmem>>, vector<160x1xf32>
    %47 = vector.broadcast %46 : vector<160x1xf32> to vector<160x32xf32>
    %48 = arith.mulf %45, %47 : vector<160x32xf32>
    %cst_22 = arith.constant 0.000000e+00 : f32
    %49 = vector.broadcast %cst_22 : f32 to vector<160x96xf32>
    %50 = tpu.concatenate %48, %49 in 1 : vector<160x32xf32>, vector<160x96xf32> -> vector<160x128xf32>
    %c0_23 = arith.constant 0 : index
    %c0_24 = arith.constant 0 : index
    %c0_25 = arith.constant 0 : index
    %51 = vector.load %arg9[%c0_23, %c0_24, %c0_25] : memref<1x160x128xf32, #tpu.memory_space<vmem>>, vector<1x160x128xf32>
    %52 = vector.shape_cast %51 : vector<1x160x128xf32> to vector<160x128xf32>
    %53 = vector.shape_cast %50 : vector<160x128xf32> to vector<1x160x128xf32>
    tpu.vector_store %arg9[%c0_23, %c0_24, %c0_25], %53 {strides = array<i32>} : memref<1x160x128xf32, #tpu.memory_space<vmem>>, vector<1x160x128xf32>,
    return
  }
  func.func @transform_0(%arg0: i32) -> (i32, i32, i32) {
    %c0_i32 = arith.constant 0 : i32
    %c0_i32_0 = arith.constant 0 : i32
    %c0_i32_1 = arith.constant 0 : i32
    return %arg0, %c0_i32, %c0_i32_0 : i32, i32, i32
  }
  func.func @transform_1(%arg0: i32) -> (i32, i32) {
    %c0_i32 = arith.constant 0 : i32
    %c0_i32_0 = arith.constant 0 : i32
    %c0_i32_1 = arith.constant 0 : i32
    return %c0_i32, %c0_i32_0 : i32, i32
  }
  func.func @transform_2(%arg0: i32) -> (i32, i32) {
    %c0_i32 = arith.constant 0 : i32
    %c0_i32_0 = arith.constant 0 : i32
    %c0_i32_1 = arith.constant 0 : i32
    return %c0_i32, %c0_i32_0 : i32, i32
  }
  func.func @transform_3(%arg0: i32) -> (i32, i32) {
    %c0_i32 = arith.constant 0 : i32
    %c0_i32_0 = arith.constant 0 : i32
    %c0_i32_1 = arith.constant 0 : i32
    return %c0_i32, %c0_i32_0 : i32, i32
  }
  func.func @transform_4(%arg0: i32) -> (i32, i32) {
    %c0_i32 = arith.constant 0 : i32
    %c0_i32_0 = arith.constant 0 : i32
    %c0_i32_1 = arith.constant 0 : i32
    return %c0_i32, %c0_i32_0 : i32, i32
  }
  func.func @transform_5(%arg0: i32) -> (i32, i32) {
    %c0_i32 = arith.constant 0 : i32
    %c0_i32_0 = arith.constant 0 : i32
    %c0_i32_1 = arith.constant 0 : i32
    return %c0_i32, %c0_i32_0 : i32, i32
  }
  func.func @transform_6(%arg0: i32) -> (i32, i32) {
    %c0_i32 = arith.constant 0 : i32
    %c0_i32_0 = arith.constant 0 : i32
    %c0_i32_1 = arith.constant 0 : i32
    return %c0_i32, %c0_i32_0 : i32, i32
  }
  func.func @transform_7(%arg0: i32) -> (i32, i32) {
    %c0_i32 = arith.constant 0 : i32
    %c0_i32_0 = arith.constant 0 : i32
    %c0_i32_1 = arith.constant 0 : i32
    return %c0_i32, %c0_i32_0 : i32, i32
  }
  func.func @transform_8(%arg0: i32) -> (i32, i32, i32) {
    %c0_i32 = arith.constant 0 : i32
    %c0_i32_0 = arith.constant 0 : i32
    %c0_i32_1 = arith.constant 0 : i32
    return %arg0, %c0_i32, %c0_i32_0 : i32, i32, i32
  }
}

module attributes {stable_mosaic.version = 11 : i64} {
  func.func @_dense_layer_kernel(%arg0: i32, %arg1: memref<1x160x64xf32, #tpu.memory_space<vmem>>, %arg2: memref<160x1xf32, #tpu.memory_space<vmem>>, %arg3: memref<1x64xf32, #tpu.memory_space<vmem>>, %arg4: memref<1x64xf32, #tpu.memory_space<vmem>>, %arg5: memref<64x128xbf16, #tpu.memory_space<vmem>>, %arg6: memref<1x128xf32, #tpu.memory_space<vmem>>, %arg7: memref<128x288xbf16, #tpu.memory_space<vmem>>, %arg8: memref<1x32xf32, #tpu.memory_space<vmem>>, %arg9: memref<1x160x128xf32, #tpu.memory_space<vmem>>) attributes {dimension_semantics = [#tpu.dimension_semantics<parallel>], iteration_bounds = array<i64: 2>, scalar_prefetch = 0 : i64, scratch_operands = 0 : i64, tpu.core_type = #tpu.core_type<tc>, window_params = [{transform_indices = @transform_0, window_bounds = array<i64: 1, 160, 64>}, {pipeline_mode = #tpu.pipeline_mode<synchronous>, transform_indices = @transform_1, window_bounds = array<i64: 160, 1>}, {pipeline_mode = #tpu.pipeline_mode<synchronous>, transform_indices = @transform_2, window_bounds = array<i64: 1, 64>}, {pipeline_mode = #tpu.pipeline_mode<synchronous>, transform_indices = @transform_3, window_bounds = array<i64: 1, 64>}, {pipeline_mode = #tpu.pipeline_mode<synchronous>, transform_indices = @transform_4, window_bounds = array<i64: 64, 128>}, {pipeline_mode = #tpu.pipeline_mode<synchronous>, transform_indices = @transform_5, window_bounds = array<i64: 1, 128>}, {pipeline_mode = #tpu.pipeline_mode<synchronous>, transform_indices = @transform_6, window_bounds = array<i64: 128, 288>}, {pipeline_mode = #tpu.pipeline_mode<synchronous>, transform_indices = @transform_7, window_bounds = array<i64: 1, 32>}, {transform_indices = @transform_8, window_bounds = array<i64: 1, 160, 128>}]} {
    %c0 = arith.constant 0 : index
    %c0_0 = arith.constant 0 : index
    %c0_1 = arith.constant 0 : index
    %0 = vector.load %arg1[%c0, %c0_0, %c0_1] : memref<1x160x64xf32, #tpu.memory_space<vmem>>, vector<1x160x64xf32>
    %1 = vector.shape_cast %0 : vector<1x160x64xf32> to vector<160x64xf32>
    %c0_2 = arith.constant 0 : index
    %c0_3 = arith.constant 0 : index
    %2 = vector.load %arg3[%c0_2, %c0_3] : memref<1x64xf32, #tpu.memory_space<vmem>>, vector<1x64xf32>
    %3 = vector.broadcast %2 : vector<1x64xf32> to vector<160x64xf32>
    %4 = arith.mulf %1, %3 : vector<160x64xf32>
    %c0_4 = arith.constant 0 : index
    %c0_5 = arith.constant 0 : index
    %5 = vector.load %arg4[%c0_4, %c0_5] : memref<1x64xf32, #tpu.memory_space<vmem>>, vector<1x64xf32>
    %6 = vector.broadcast %5 : vector<1x64xf32> to vector<160x64xf32>
    %7 = arith.addf %4, %6 : vector<160x64xf32>
    %cst = arith.constant 0.000000e+00 : f32
    %8 = vector.broadcast %cst : f32 to vector<160x64xf32>
    %9 = arith.maximumf %7, %8 : vector<160x64xf32>
    %10 = arith.truncf %9 : vector<160x64xf32> to vector<160x64xbf16>
    %c0_6 = arith.constant 0 : index
    %c0_7 = arith.constant 0 : index
    %11 = vector.load %arg5[%c0_6, %c0_7] : memref<64x128xbf16, #tpu.memory_space<vmem>>, vector<64x128xbf16>
    %cst_8 = arith.constant dense<0.000000e+00> : vector<160x128xf32>
    %12 = tpu.matmul %10, %11, %cst_8 {dimension_numbers = #tpu.dot_dimension_numbers<[1], [0], [0], [1], [0, 0, 1, 1], [], []>} : vector<160x64xbf16>, vector<64x128xbf16>, vector<160x128xf32> -> vector<160x128xf32>
    %c0_9 = arith.constant 0 : index
    %c0_10 = arith.constant 0 : index
    %13 = vector.load %arg6[%c0_9, %c0_10] : memref<1x128xf32, #tpu.memory_space<vmem>>, vector<1x128xf32>
    %14 = vector.broadcast %13 : vector<1x128xf32> to vector<160x128xf32>
    %15 = arith.addf %12, %14 : vector<160x128xf32>
    %cst_11 = arith.constant 0.000000e+00 : f32
    %16 = vector.broadcast %cst_11 : f32 to vector<160x128xf32>
    %17 = arith.maximumf %15, %16 : vector<160x128xf32>
    %c0_12 = arith.constant 0 : index
    %c0_13 = arith.constant 0 : index
    %18 = vector.load %arg2[%c0_12, %c0_13] : memref<160x1xf32, #tpu.memory_space<vmem>>, vector<160x1xf32>
    %19 = vector.broadcast %18 : vector<160x1xf32> to vector<160x128xf32>
    %20 = arith.mulf %17, %19 : vector<160x128xf32>
    %cst_14 = arith.constant 0.000000e+00 : f32
    %21 = vector.broadcast %cst_14 : f32 to vector<17x128xf32>
    %22 = tpu.concatenate %21, %20, %21 in 0 : vector<17x128xf32>, vector<160x128xf32>, vector<17x128xf32> -> vector<194x128xf32>
    %23 = arith.truncf %22 : vector<194x128xf32> to vector<194x128xbf16>
    %c0_15 = arith.constant 0 : index
    %c0_16 = arith.constant 0 : index
    %24 = vector.load %arg7[%c0_15, %c0_16] : memref<128x288xbf16, #tpu.memory_space<vmem>>, vector<128x288xbf16>
    %cst_17 = arith.constant dense<0.000000e+00> : vector<194x288xf32>
    %25 = tpu.matmul %23, %24, %cst_17 {dimension_numbers = #tpu.dot_dimension_numbers<[1], [0], [0], [1], [0, 0, 1, 1], [], []>} : vector<194x128xbf16>, vector<128x288xbf16>, vector<194x288xf32> -> vector<194x288xf32>
    %26 = vector.extract_strided_slice %25 {offsets = [0, 0], sizes = [160, 32], strides = [1, 1]} : vector<194x288xf32> to vector<160x32xf32>
    %27 = vector.extract_strided_slice %25 {offsets = [1, 32], sizes = [160, 32], strides = [1, 1]} : vector<194x288xf32> to vector<160x32xf32>
    %28 = arith.addf %26, %27 : vector<160x32xf32>
    %29 = vector.extract_strided_slice %25 {offsets = [2, 64], sizes = [160, 32], strides = [1, 1]} : vector<194x288xf32> to vector<160x32xf32>
    %30 = arith.addf %28, %29 : vector<160x32xf32>
    %31 = vector.extract_strided_slice %25 {offsets = [16, 96], sizes = [160, 32], strides = [1, 1]} : vector<194x288xf32> to vector<160x32xf32>
    %32 = arith.addf %30, %31 : vector<160x32xf32>
    %33 = vector.extract_strided_slice %25 {offsets = [17, 128], sizes = [160, 32], strides = [1, 1]} : vector<194x288xf32> to vector<160x32xf32>
    %34 = arith.addf %32, %33 : vector<160x32xf32>
    %35 = vector.extract_strided_slice %25 {offsets = [18, 160], sizes = [160, 32], strides = [1, 1]} : vector<194x288xf32> to vector<160x32xf32>
    %36 = arith.addf %34, %35 : vector<160x32xf32>
    %37 = vector.extract_strided_slice %25 {offsets = [32, 192], sizes = [160, 32], strides = [1, 1]} : vector<194x288xf32> to vector<160x32xf32>
    %38 = arith.addf %36, %37 : vector<160x32xf32>
    %39 = vector.extract_strided_slice %25 {offsets = [33, 224], sizes = [160, 32], strides = [1, 1]} : vector<194x288xf32> to vector<160x32xf32>
    %40 = arith.addf %38, %39 : vector<160x32xf32>
    %41 = vector.extract_strided_slice %25 {offsets = [34, 256], sizes = [160, 32], strides = [1, 1]} : vector<194x288xf32> to vector<160x32xf32>
    %42 = arith.addf %40, %41 : vector<160x32xf32>
    %c0_18 = arith.constant 0 : index
    %c0_19 = arith.constant 0 : index
    %43 = vector.load %arg8[%c0_18, %c0_19] : memref<1x32xf32, #tpu.memory_space<vmem>>, vector<1x32xf32>
    %44 = vector.broadcast %43 : vector<1x32xf32> to vector<160x32xf32>
    %45 = arith.addf %42, %44 : vector<160x32xf32>
    %c0_20 = arith.constant 0 : index
    %c0_21 = arith.constant 0 : index
    %46 = vector.load %arg2[%c0_20, %c0_21] : memref<160x1xf32, #tpu.memory_space<vmem>>, vector<160x1xf32>
    %47 = vector.broadcast %46 : vector<160x1xf32> to vector<160x32xf32>
    %48 = arith.mulf %45, %47 : vector<160x32xf32>
    %cst_22 = arith.constant 0.000000e+00 : f32
    %49 = vector.broadcast %cst_22 : f32 to vector<160x96xf32>
    %50 = tpu.concatenate %48, %49 in 1 : vector<160x32xf32>, vector<160x96xf32> -> vector<160x128xf32>
    %c0_23 = arith.constant 0 : index
    %c0_24 = arith.constant 0 : index
    %c0_25 = arith.constant 0 : index
    %51 = vector.load %arg9[%c0_23, %c0_24, %c0_25] : memref<1x160x128xf32, #tpu.memory_space<vmem>>, vector<1x160x128xf32>
    %52 = vector.shape_cast %51 : vector<1x160x128xf32> to vector<160x128xf32>
    %53 = vector.shape_cast %50 : vector<160x128xf32> to vector<1x160x128xf32>
    tpu.vector_store %arg9[%c0_23, %c0_24, %c0_25], %53 {strides = array<i32>} : memref<1x160x128xf32, #tpu.memory_space<vmem>>, vector<1x160x128xf32>,
    return
  }
  func.func @transform_0(%arg0: i32) -> (i32, i32, i32) {
    %c0_i32 = arith.constant 0 : i32
    %c0_i32_0 = arith.constant 0 : i32
    %c0_i32_1 = arith.constant 0 : i32
    return %arg0, %c0_i32, %c0_i32_0 : i32, i32, i32
  }
  func.func @transform_1(%arg0: i32) -> (i32, i32) {
    %c0_i32 = arith.constant 0 : i32
    %c0_i32_0 = arith.constant 0 : i32
    %c0_i32_1 = arith.constant 0 : i32
    return %c0_i32, %c0_i32_0 : i32, i32
  }
  func.func @transform_2(%arg0: i32) -> (i32, i32) {
    %c0_i32 = arith.constant 0 : i32
    %c0_i32_0 = arith.constant 0 : i32
    %c0_i32_1 = arith.constant 0 : i32
    return %c0_i32, %c0_i32_0 : i32, i32
  }
  func.func @transform_3(%arg0: i32) -> (i32, i32) {
    %c0_i32 = arith.constant 0 : i32
    %c0_i32_0 = arith.constant 0 : i32
    %c0_i32_1 = arith.constant 0 : i32
    return %c0_i32, %c0_i32_0 : i32, i32
  }
  func.func @transform_4(%arg0: i32) -> (i32, i32) {
    %c0_i32 = arith.constant 0 : i32
    %c0_i32_0 = arith.constant 0 : i32
    %c0_i32_1 = arith.constant 0 : i32
    return %c0_i32, %c0_i32_0 : i32, i32
  }
  func.func @transform_5(%arg0: i32) -> (i32, i32) {
    %c0_i32 = arith.constant 0 : i32
    %c0_i32_0 = arith.constant 0 : i32
    %c0_i32_1 = arith.constant 0 : i32
    return %c0_i32, %c0_i32_0 : i32, i32
  }
  func.func @transform_6(%arg0: i32) -> (i32, i32) {
    %c0_i32 = arith.constant 0 : i32
    %c0_i32_0 = arith.constant 0 : i32
    %c0_i32_1 = arith.constant 0 : i32
    return %c0_i32, %c0_i32_0 : i32, i32
  }
  func.func @transform_7(%arg0: i32) -> (i32, i32) {
    %c0_i32 = arith.constant 0 : i32
    %c0_i32_0 = arith.constant 0 : i32
    %c0_i32_1 = arith.constant 0 : i32
    return %c0_i32, %c0_i32_0 : i32, i32
  }
  func.func @transform_8(%arg0: i32) -> (i32, i32, i32) {
    %c0_i32 = arith.constant 0 : i32
    %c0_i32_0 = arith.constant 0 : i32
    %c0_i32_1 = arith.constant 0 : i32
    return %arg0, %c0_i32, %c0_i32_0 : i32, i32, i32
  }
}

module attributes {stable_mosaic.version = 11 : i64} {
  func.func @_dense_layer_kernel(%arg0: i32, %arg1: memref<1x160x96xf32, #tpu.memory_space<vmem>>, %arg2: memref<160x1xf32, #tpu.memory_space<vmem>>, %arg3: memref<1x96xf32, #tpu.memory_space<vmem>>, %arg4: memref<1x96xf32, #tpu.memory_space<vmem>>, %arg5: memref<96x128xbf16, #tpu.memory_space<vmem>>, %arg6: memref<1x128xf32, #tpu.memory_space<vmem>>, %arg7: memref<128x288xbf16, #tpu.memory_space<vmem>>, %arg8: memref<1x32xf32, #tpu.memory_space<vmem>>, %arg9: memref<1x160x128xf32, #tpu.memory_space<vmem>>) attributes {dimension_semantics = [#tpu.dimension_semantics<parallel>], iteration_bounds = array<i64: 2>, scalar_prefetch = 0 : i64, scratch_operands = 0 : i64, tpu.core_type = #tpu.core_type<tc>, window_params = [{transform_indices = @transform_0, window_bounds = array<i64: 1, 160, 96>}, {pipeline_mode = #tpu.pipeline_mode<synchronous>, transform_indices = @transform_1, window_bounds = array<i64: 160, 1>}, {pipeline_mode = #tpu.pipeline_mode<synchronous>, transform_indices = @transform_2, window_bounds = array<i64: 1, 96>}, {pipeline_mode = #tpu.pipeline_mode<synchronous>, transform_indices = @transform_3, window_bounds = array<i64: 1, 96>}, {pipeline_mode = #tpu.pipeline_mode<synchronous>, transform_indices = @transform_4, window_bounds = array<i64: 96, 128>}, {pipeline_mode = #tpu.pipeline_mode<synchronous>, transform_indices = @transform_5, window_bounds = array<i64: 1, 128>}, {pipeline_mode = #tpu.pipeline_mode<synchronous>, transform_indices = @transform_6, window_bounds = array<i64: 128, 288>}, {pipeline_mode = #tpu.pipeline_mode<synchronous>, transform_indices = @transform_7, window_bounds = array<i64: 1, 32>}, {transform_indices = @transform_8, window_bounds = array<i64: 1, 160, 128>}]} {
    %c0 = arith.constant 0 : index
    %c0_0 = arith.constant 0 : index
    %c0_1 = arith.constant 0 : index
    %0 = vector.load %arg1[%c0, %c0_0, %c0_1] : memref<1x160x96xf32, #tpu.memory_space<vmem>>, vector<1x160x96xf32>
    %1 = vector.shape_cast %0 : vector<1x160x96xf32> to vector<160x96xf32>
    %c0_2 = arith.constant 0 : index
    %c0_3 = arith.constant 0 : index
    %2 = vector.load %arg3[%c0_2, %c0_3] : memref<1x96xf32, #tpu.memory_space<vmem>>, vector<1x96xf32>
    %3 = vector.broadcast %2 : vector<1x96xf32> to vector<160x96xf32>
    %4 = arith.mulf %1, %3 : vector<160x96xf32>
    %c0_4 = arith.constant 0 : index
    %c0_5 = arith.constant 0 : index
    %5 = vector.load %arg4[%c0_4, %c0_5] : memref<1x96xf32, #tpu.memory_space<vmem>>, vector<1x96xf32>
    %6 = vector.broadcast %5 : vector<1x96xf32> to vector<160x96xf32>
    %7 = arith.addf %4, %6 : vector<160x96xf32>
    %cst = arith.constant 0.000000e+00 : f32
    %8 = vector.broadcast %cst : f32 to vector<160x96xf32>
    %9 = arith.maximumf %7, %8 : vector<160x96xf32>
    %10 = arith.truncf %9 : vector<160x96xf32> to vector<160x96xbf16>
    %c0_6 = arith.constant 0 : index
    %c0_7 = arith.constant 0 : index
    %11 = vector.load %arg5[%c0_6, %c0_7] : memref<96x128xbf16, #tpu.memory_space<vmem>>, vector<96x128xbf16>
    %cst_8 = arith.constant dense<0.000000e+00> : vector<160x128xf32>
    %12 = tpu.matmul %10, %11, %cst_8 {dimension_numbers = #tpu.dot_dimension_numbers<[1], [0], [0], [1], [0, 0, 1, 1], [], []>} : vector<160x96xbf16>, vector<96x128xbf16>, vector<160x128xf32> -> vector<160x128xf32>
    %c0_9 = arith.constant 0 : index
    %c0_10 = arith.constant 0 : index
    %13 = vector.load %arg6[%c0_9, %c0_10] : memref<1x128xf32, #tpu.memory_space<vmem>>, vector<1x128xf32>
    %14 = vector.broadcast %13 : vector<1x128xf32> to vector<160x128xf32>
    %15 = arith.addf %12, %14 : vector<160x128xf32>
    %cst_11 = arith.constant 0.000000e+00 : f32
    %16 = vector.broadcast %cst_11 : f32 to vector<160x128xf32>
    %17 = arith.maximumf %15, %16 : vector<160x128xf32>
    %c0_12 = arith.constant 0 : index
    %c0_13 = arith.constant 0 : index
    %18 = vector.load %arg2[%c0_12, %c0_13] : memref<160x1xf32, #tpu.memory_space<vmem>>, vector<160x1xf32>
    %19 = vector.broadcast %18 : vector<160x1xf32> to vector<160x128xf32>
    %20 = arith.mulf %17, %19 : vector<160x128xf32>
    %cst_14 = arith.constant 0.000000e+00 : f32
    %21 = vector.broadcast %cst_14 : f32 to vector<17x128xf32>
    %22 = tpu.concatenate %21, %20, %21 in 0 : vector<17x128xf32>, vector<160x128xf32>, vector<17x128xf32> -> vector<194x128xf32>
    %23 = arith.truncf %22 : vector<194x128xf32> to vector<194x128xbf16>
    %c0_15 = arith.constant 0 : index
    %c0_16 = arith.constant 0 : index
    %24 = vector.load %arg7[%c0_15, %c0_16] : memref<128x288xbf16, #tpu.memory_space<vmem>>, vector<128x288xbf16>
    %cst_17 = arith.constant dense<0.000000e+00> : vector<194x288xf32>
    %25 = tpu.matmul %23, %24, %cst_17 {dimension_numbers = #tpu.dot_dimension_numbers<[1], [0], [0], [1], [0, 0, 1, 1], [], []>} : vector<194x128xbf16>, vector<128x288xbf16>, vector<194x288xf32> -> vector<194x288xf32>
    %26 = vector.extract_strided_slice %25 {offsets = [0, 0], sizes = [160, 32], strides = [1, 1]} : vector<194x288xf32> to vector<160x32xf32>
    %27 = vector.extract_strided_slice %25 {offsets = [1, 32], sizes = [160, 32], strides = [1, 1]} : vector<194x288xf32> to vector<160x32xf32>
    %28 = arith.addf %26, %27 : vector<160x32xf32>
    %29 = vector.extract_strided_slice %25 {offsets = [2, 64], sizes = [160, 32], strides = [1, 1]} : vector<194x288xf32> to vector<160x32xf32>
    %30 = arith.addf %28, %29 : vector<160x32xf32>
    %31 = vector.extract_strided_slice %25 {offsets = [16, 96], sizes = [160, 32], strides = [1, 1]} : vector<194x288xf32> to vector<160x32xf32>
    %32 = arith.addf %30, %31 : vector<160x32xf32>
    %33 = vector.extract_strided_slice %25 {offsets = [17, 128], sizes = [160, 32], strides = [1, 1]} : vector<194x288xf32> to vector<160x32xf32>
    %34 = arith.addf %32, %33 : vector<160x32xf32>
    %35 = vector.extract_strided_slice %25 {offsets = [18, 160], sizes = [160, 32], strides = [1, 1]} : vector<194x288xf32> to vector<160x32xf32>
    %36 = arith.addf %34, %35 : vector<160x32xf32>
    %37 = vector.extract_strided_slice %25 {offsets = [32, 192], sizes = [160, 32], strides = [1, 1]} : vector<194x288xf32> to vector<160x32xf32>
    %38 = arith.addf %36, %37 : vector<160x32xf32>
    %39 = vector.extract_strided_slice %25 {offsets = [33, 224], sizes = [160, 32], strides = [1, 1]} : vector<194x288xf32> to vector<160x32xf32>
    %40 = arith.addf %38, %39 : vector<160x32xf32>
    %41 = vector.extract_strided_slice %25 {offsets = [34, 256], sizes = [160, 32], strides = [1, 1]} : vector<194x288xf32> to vector<160x32xf32>
    %42 = arith.addf %40, %41 : vector<160x32xf32>
    %c0_18 = arith.constant 0 : index
    %c0_19 = arith.constant 0 : index
    %43 = vector.load %arg8[%c0_18, %c0_19] : memref<1x32xf32, #tpu.memory_space<vmem>>, vector<1x32xf32>
    %44 = vector.broadcast %43 : vector<1x32xf32> to vector<160x32xf32>
    %45 = arith.addf %42, %44 : vector<160x32xf32>
    %c0_20 = arith.constant 0 : index
    %c0_21 = arith.constant 0 : index
    %46 = vector.load %arg2[%c0_20, %c0_21] : memref<160x1xf32, #tpu.memory_space<vmem>>, vector<160x1xf32>
    %47 = vector.broadcast %46 : vector<160x1xf32> to vector<160x32xf32>
    %48 = arith.mulf %45, %47 : vector<160x32xf32>
    %cst_22 = arith.constant 0.000000e+00 : f32
    %49 = vector.broadcast %cst_22 : f32 to vector<160x96xf32>
    %50 = tpu.concatenate %48, %49 in 1 : vector<160x32xf32>, vector<160x96xf32> -> vector<160x128xf32>
    %c0_23 = arith.constant 0 : index
    %c0_24 = arith.constant 0 : index
    %c0_25 = arith.constant 0 : index
    %51 = vector.load %arg9[%c0_23, %c0_24, %c0_25] : memref<1x160x128xf32, #tpu.memory_space<vmem>>, vector<1x160x128xf32>
    %52 = vector.shape_cast %51 : vector<1x160x128xf32> to vector<160x128xf32>
    %53 = vector.shape_cast %50 : vector<160x128xf32> to vector<1x160x128xf32>
    tpu.vector_store %arg9[%c0_23, %c0_24, %c0_25], %53 {strides = array<i32>} : memref<1x160x128xf32, #tpu.memory_space<vmem>>, vector<1x160x128xf32>,
    return
  }
  func.func @transform_0(%arg0: i32) -> (i32, i32, i32) {
    %c0_i32 = arith.constant 0 : i32
    %c0_i32_0 = arith.constant 0 : i32
    %c0_i32_1 = arith.constant 0 : i32
    return %arg0, %c0_i32, %c0_i32_0 : i32, i32, i32
  }
  func.func @transform_1(%arg0: i32) -> (i32, i32) {
    %c0_i32 = arith.constant 0 : i32
    %c0_i32_0 = arith.constant 0 : i32
    %c0_i32_1 = arith.constant 0 : i32
    return %c0_i32, %c0_i32_0 : i32, i32
  }
  func.func @transform_2(%arg0: i32) -> (i32, i32) {
    %c0_i32 = arith.constant 0 : i32
    %c0_i32_0 = arith.constant 0 : i32
    %c0_i32_1 = arith.constant 0 : i32
    return %c0_i32, %c0_i32_0 : i32, i32
  }
  func.func @transform_3(%arg0: i32) -> (i32, i32) {
    %c0_i32 = arith.constant 0 : i32
    %c0_i32_0 = arith.constant 0 : i32
    %c0_i32_1 = arith.constant 0 : i32
    return %c0_i32, %c0_i32_0 : i32, i32
  }
  func.func @transform_4(%arg0: i32) -> (i32, i32) {
    %c0_i32 = arith.constant 0 : i32
    %c0_i32_0 = arith.constant 0 : i32
    %c0_i32_1 = arith.constant 0 : i32
    return %c0_i32, %c0_i32_0 : i32, i32
  }
  func.func @transform_5(%arg0: i32) -> (i32, i32) {
    %c0_i32 = arith.constant 0 : i32
    %c0_i32_0 = arith.constant 0 : i32
    %c0_i32_1 = arith.constant 0 : i32
    return %c0_i32, %c0_i32_0 : i32, i32
  }
  func.func @transform_6(%arg0: i32) -> (i32, i32) {
    %c0_i32 = arith.constant 0 : i32
    %c0_i32_0 = arith.constant 0 : i32
    %c0_i32_1 = arith.constant 0 : i32
    return %c0_i32, %c0_i32_0 : i32, i32
  }
  func.func @transform_7(%arg0: i32) -> (i32, i32) {
    %c0_i32 = arith.constant 0 : i32
    %c0_i32_0 = arith.constant 0 : i32
    %c0_i32_1 = arith.constant 0 : i32
    return %c0_i32, %c0_i32_0 : i32, i32
  }
  func.func @transform_8(%arg0: i32) -> (i32, i32, i32) {
    %c0_i32 = arith.constant 0 : i32
    %c0_i32_0 = arith.constant 0 : i32
    %c0_i32_1 = arith.constant 0 : i32
    return %arg0, %c0_i32, %c0_i32_0 : i32, i32, i32
  }
}

</mosaic_0001>

<llo_original>
// kernel: dense_block_forward.3
$region0: #{dense_block_forward.3}
  #allocation0 [shape = 'u32[]', space=smem, size = 0x4, offset = 0x4, fixed_abs, tag = 'smem constant byte address 0x4 - core index']
  #allocation1 [shape = 'u32[144,128]{1,0:T(1,128)}', space=vmem, size = 0x12000, scoped, tag = 'internal scratch']
  %s0 = inlined_call_operand.vmem [shape: f32[2,160,32], index: 0, kind: input, shape index: {}]
  %s1 = inlined_call_operand.vmem [shape: f32[160,1], index: 1, kind: input, shape index: {}]
  %s2 = inlined_call_operand.vmem [shape: f32[1,32], index: 2, kind: input, shape index: {}]
  %s3 = inlined_call_operand.vmem [shape: f32[1,32], index: 3, kind: input, shape index: {}]
  %s4 = inlined_call_operand.vmem [shape: bf16[32,128], index: 4, kind: input, shape index: {}]
  %s5 = inlined_call_operand.vmem [shape: f32[1,128], index: 5, kind: input, shape index: {}]
  %s6 = inlined_call_operand.vmem [shape: bf16[128,288], index: 6, kind: input, shape index: {}]
  %s7 = inlined_call_operand.vmem [shape: f32[1,32], index: 7, kind: input, shape index: {}]
  %s8 = inlined_call_operand.vmem [shape: f32[2,160,128], index: 8, kind: output, shape index: {}]
  %s9 = sld [smem:[#allocation0]]
  $region65: #{dense_block_forward.3} parent=0
    _
  %s11 = ssub.s32 1, %s9
  %s12 = scalar_select 0, %s11, %s9
  loop: start=0, step=1, limit=4
  $region2: #{dense_block_forward.3} parent=0 // loop_pre_header
    _
  $region3: #{dense_block_forward.3} parent=0 // loop_header
    %s14 = sphi 0, %s18
    %p15 = scmp.ge.s32.totalorder %s14, 4
    %s24 = sphi 0, %s26
    %s27 = sphi 0, %s24
    %s28 = sphi 0, %s27
    %s44 = sphi 0, %s28
    %s48 = sphi 0, %s48
    %s50 = sphi 0, %s48
    %s51 = sphi 0, %s50
    %s65 = sphi 0, %s51
    %s69 = sphi 0, %s69
    %s71 = sphi 0, %s69
    %s72 = sphi 0, %s71
    %s86 = sphi 0, %s72
    %s90 = sphi 0, %s90
    %s92 = sphi 0, %s90
    %s93 = sphi 0, %s92
    %s107 = sphi 0, %s93
    %s111 = sphi 0, %s111
    %s113 = sphi 0, %s111
    %s114 = sphi 0, %s113
    %s128 = sphi 0, %s114
    %s132 = sphi 0, %s132
    %s134 = sphi 0, %s132
    %s135 = sphi 0, %s134
    %s149 = sphi 0, %s135
    %s153 = sphi 0, %s153
    %s155 = sphi 0, %s153
    %s156 = sphi 0, %s155
    %s170 = sphi 0, %s156
    %s174 = sphi 0, %s174
    %s176 = sphi 0, %s174
    %s177 = sphi 0, %s176
    %s191 = sphi 0, %s177
    %s197 = sphi 0, %s199
    %s200 = sphi 0, %s197
    %s201 = sphi 0, %s200
    %s217 = sphi 0, %s201
  $region4: #{dense_block_forward.3} parent=0 // loop_header_branch
    %17 = sbr.rel (%p15) target = $region8
  $region5: #{dense_block_forward.3} parent=0 // loop_body
    %s19 = ssub.s32 %s14, 1
    %s20 = ssub.s32 %s14, 2
    %s21 = sadd.s32 %s14, 1
    %s22 = ssub.s32 %s14, %s21
    %p23 = scmp.eq.s32.totalorder %s22, 0
    %s25 = sadd.s32 %s24, 1
    %s26 = scalar_select %p23, %s24, %s25
    %p29 = pneg %p23
    %p30 = scmp.eq.s32.totalorder %s14, 1
    %p31 = por %p29, %p30
    %p32 = scmp.ne.s32.totalorder %s24, %s27
    %p33 = scmp.eq.s32.totalorder %s14, 0
    %p34 = por %p32, %p33
    %p35 = scmp.ne.s32.totalorder %s24, %s27
    %p36 = scmp.eq.s32.totalorder %s19, 1
    %p37 = por %p35, %p36
    %p38 = scmp.ne.s32.totalorder %s27, %s28
    %p39 = scmp.eq.s32.totalorder %s19, 0
    %p40 = por %p38, %p39
    %p41 = scmp.ne.s32.totalorder %s27, %s28
    %p42 = scmp.eq.s32.totalorder %s20, 1
    %p43 = por %p41, %p42
    %p45 = scmp.ne.s32.totalorder %s28, %s44
    %p46 = scmp.eq.s32.totalorder %s20, 0
    %p47 = por %p45, %p46
    %s49 = sadd.s32 %s48, 1
    %p52 = scmp.eq.s32.totalorder %s14, 1
    %p53 = scmp.ne.s32.totalorder %s48, %s50
    %p54 = scmp.eq.s32.totalorder %s14, 0
    %p55 = por %p53, %p54
    %p56 = scmp.ne.s32.totalorder %s48, %s50
    %p57 = scmp.eq.s32.totalorder %s19, 1
    %p58 = por %p56, %p57
    %p59 = scmp.ne.s32.totalorder %s50, %s51
    %p60 = scmp.eq.s32.totalorder %s19, 0
    %p61 = por %p59, %p60
    %p62 = scmp.ne.s32.totalorder %s50, %s51
    %p63 = scmp.eq.s32.totalorder %s20, 1
    %p64 = por %p62, %p63
    %p66 = scmp.ne.s32.totalorder %s51, %s65
    %p67 = scmp.eq.s32.totalorder %s20, 0
    %p68 = por %p66, %p67
    %s70 = sadd.s32 %s69, 1
    %p73 = scmp.eq.s32.totalorder %s14, 1
    %p74 = scmp.ne.s32.totalorder %s69, %s71
    %p75 = scmp.eq.s32.totalorder %s14, 0
    %p76 = por %p74, %p75
    %p77 = scmp.ne.s32.totalorder %s69, %s71
    %p78 = scmp.eq.s32.totalorder %s19, 1
    %p79 = por %p77, %p78
    %p80 = scmp.ne.s32.totalorder %s71, %s72
    %p81 = scmp.eq.s32.totalorder %s19, 0
    %p82 = por %p80, %p81
    %p83 = scmp.ne.s32.totalorder %s71, %s72
    %p84 = scmp.eq.s32.totalorder %s20, 1
    %p85 = por %p83, %p84
    %p87 = scmp.ne.s32.totalorder %s72, %s86
    %p88 = scmp.eq.s32.totalorder %s20, 0
    %p89 = por %p87, %p88
    %s91 = sadd.s32 %s90, 1
    %p94 = scmp.eq.s32.totalorder %s14, 1
    %p95 = scmp.ne.s32.totalorder %s90, %s92
    %p96 = scmp.eq.s32.totalorder %s14, 0
    %p97 = por %p95, %p96
    %p98 = scmp.ne.s32.totalorder %s90, %s92
    %p99 = scmp.eq.s32.totalorder %s19, 1
    %p100 = por %p98, %p99
    %p101 = scmp.ne.s32.totalorder %s92, %s93
    %p102 = scmp.eq.s32.totalorder %s19, 0
    %p103 = por %p101, %p102
    %p104 = scmp.ne.s32.totalorder %s92, %s93
    %p105 = scmp.eq.s32.totalorder %s20, 1
    %p106 = por %p104, %p105
    %p108 = scmp.ne.s32.totalorder %s93, %s107
    %p109 = scmp.eq.s32.totalorder %s20, 0
    %p110 = por %p108, %p109
    %s112 = sadd.s32 %s111, 1
    %p115 = scmp.eq.s32.totalorder %s14, 1
    %p116 = scmp.ne.s32.totalorder %s111, %s113
    %p117 = scmp.eq.s32.totalorder %s14, 0
    %p118 = por %p116, %p117
    %p119 = scmp.ne.s32.totalorder %s111, %s113
    %p120 = scmp.eq.s32.totalorder %s19, 1
    %p121 = por %p119, %p120
    %p122 = scmp.ne.s32.totalorder %s113, %s114
    %p123 = scmp.eq.s32.totalorder %s19, 0
    %p124 = por %p122, %p123
    %p125 = scmp.ne.s32.totalorder %s113, %s114
    %p126 = scmp.eq.s32.totalorder %s20, 1
    %p127 = por %p125, %p126
    %p129 = scmp.ne.s32.totalorder %s114, %s128
    %p130 = scmp.eq.s32.totalorder %s20, 0
    %p131 = por %p129, %p130
    %s133 = sadd.s32 %s132, 1
    %p136 = scmp.eq.s32.totalorder %s14, 1
    %p137 = scmp.ne.s32.totalorder %s132, %s134
    %p138 = scmp.eq.s32.totalorder %s14, 0
    %p139 = por %p137, %p138
    %p140 = scmp.ne.s32.totalorder %s132, %s134
    %p141 = scmp.eq.s32.totalorder %s19, 1
    %p142 = por %p140, %p141
    %p143 = scmp.ne.s32.totalorder %s134, %s135
    %p144 = scmp.eq.s32.totalorder %s19, 0
    %p145 = por %p143, %p144
    %p146 = scmp.ne.s32.totalorder %s134, %s135
    %p147 = scmp.eq.s32.totalorder %s20, 1
    %p148 = por %p146, %p147
    %p150 = scmp.ne.s32.totalorder %s135, %s149
    %p151 = scmp.eq.s32.totalorder %s20, 0
    %p152 = por %p150, %p151
    %s154 = sadd.s32 %s153, 1
    %p157 = scmp.eq.s32.totalorder %s14, 1
    %p158 = scmp.ne.s32.totalorder %s153, %s155
    %p159 = scmp.eq.s32.totalorder %s14, 0
    %p160 = por %p158, %p159
    %p161 = scmp.ne.s32.totalorder %s153, %s155
    %p162 = scmp.eq.s32.totalorder %s19, 1
    %p163 = por %p161, %p162
    %p164 = scmp.ne.s32.totalorder %s155, %s156
    %p165 = scmp.eq.s32.totalorder %s19, 0
    %p166 = por %p164, %p165
    %p167 = scmp.ne.s32.totalorder %s155, %s156
    %p168 = scmp.eq.s32.totalorder %s20, 1
    %p169 = por %p167, %p168
    %p171 = scmp.ne.s32.totalorder %s156, %s170
    %p172 = scmp.eq.s32.totalorder %s20, 0
    %p173 = por %p171, %p172
    %s175 = sadd.s32 %s174, 1
    %p178 = scmp.eq.s32.totalorder %s14, 1
    %p179 = scmp.ne.s32.totalorder %s174, %s176
    %p180 = scmp.eq.s32.totalorder %s14, 0
    %p181 = por %p179, %p180
    %p182 = scmp.ne.s32.totalorder %s174, %s176
    %p183 = scmp.eq.s32.totalorder %s19, 1
    %p184 = por %p182, %p183
    %p185 = scmp.ne.s32.totalorder %s176, %s177
    %p186 = scmp.eq.s32.totalorder %s19, 0
    %p187 = por %p185, %p186
    %p188 = scmp.ne.s32.totalorder %s176, %s177
    %p189 = scmp.eq.s32.totalorder %s20, 1
    %p190 = por %p188, %p189
    %p192 = scmp.ne.s32.totalorder %s177, %s191
    %p193 = scmp.eq.s32.totalorder %s20, 0
    %p194 = por %p192, %p193
    %s195 = ssub.s32 %s14, %s21
    %p196 = scmp.eq.s32.totalorder %s195, 0
    %s198 = sadd.s32 %s197, 1
    %s199 = scalar_select %p196, %s197, %s198
    %p202 = pneg %p196
    %p203 = scmp.eq.s32.totalorder %s14, 1
    %p204 = por %p202, %p203
    %p205 = scmp.ne.s32.totalorder %s197, %s200
    %p206 = scmp.eq.s32.totalorder %s14, 0
    %p207 = por %p205, %p206
    %p208 = scmp.ne.s32.totalorder %s197, %s200
    %p209 = scmp.eq.s32.totalorder %s19, 1
    %p210 = por %p208, %p209
    %p211 = scmp.ne.s32.totalorder %s200, %s201
    %p212 = scmp.eq.s32.totalorder %s19, 0
    %p213 = por %p211, %p212
    %p214 = scmp.ne.s32.totalorder %s200, %s201
    %p215 = scmp.eq.s32.totalorder %s20, 1
    %p216 = por %p214, %p215
    %p218 = scmp.ne.s32.totalorder %s201, %s217
    %p219 = scmp.eq.s32.totalorder %s20, 0
    %p220 = por %p218, %p219
    %p221 = scmp.le.s32.totalorder 1, %s14
    %p222 = scmp.lt.s32.totalorder %s14, 3
    %p223 = pnand %p221, %p222
    %p224 = pneg %p223
    // Predicated region
    $region9: #{dense_block_forward.3} parent=5 // pred_check
      _
    $region10: #{dense_block_forward.3} parent=5 // pred_check_branch
      %226 = sbr.rel (%p223) target = $region12
    $region11: #{dense_block_forward.3} parent=5 // pred_region
      %s227 = ssub.s32 %s14, 1
      // Predicated region
      $region13: #{dense_block_forward.3} parent=11 // pred_check
        %p228 = pneg %p61
      $region14: #{dense_block_forward.3} parent=11 // pred_check_branch
        %230 = sbr.rel (%p228) target = $region16
      $region15: #{dense_block_forward.3} parent=11 // pred_region
        _
      $region16: #{dense_block_forward.3} parent=11 // pred_fallthru
        _
      // Predicated region
      $region17: #{dense_block_forward.3} parent=11 // pred_check
        %p231 = pneg %p82
      $region18: #{dense_block_forward.3} parent=11 // pred_check_branch
        %233 = sbr.rel (%p231) target = $region20
      $region19: #{dense_block_forward.3} parent=11 // pred_region
        _
      $region20: #{dense_block_forward.3} parent=11 // pred_fallthru
        _
      // Predicated region
      $region21: #{dense_block_forward.3} parent=11 // pred_check
        %p234 = pneg %p103
      $region22: #{dense_block_forward.3} parent=11 // pred_check_branch
        %236 = sbr.rel (%p234) target = $region24
      $region23: #{dense_block_forward.3} parent=11 // pred_region
        _
      $region24: #{dense_block_forward.3} parent=11 // pred_fallthru
        _
      // Predicated region
      $region25: #{dense_block_forward.3} parent=11 // pred_check
        %p237 = pneg %p124
      $region26: #{dense_block_forward.3} parent=11 // pred_check_branch
        %239 = sbr.rel (%p237) target = $region28
      $region27: #{dense_block_forward.3} parent=11 // pred_region
        _
      $region28: #{dense_block_forward.3} parent=11 // pred_fallthru
        _
      // Predicated region
      $region29: #{dense_block_forward.3} parent=11 // pred_check
        %p240 = pneg %p145
      $region30: #{dense_block_forward.3} parent=11 // pred_check_branch
        %242 = sbr.rel (%p240) target = $region32
      $region31: #{dense_block_forward.3} parent=11 // pred_region
        _
      $region32: #{dense_block_forward.3} parent=11 // pred_fallthru
        _
      // Predicated region
      $region33: #{dense_block_forward.3} parent=11 // pred_check
        %p243 = pneg %p166
      $region34: #{dense_block_forward.3} parent=11 // pred_check_branch
        %245 = sbr.rel (%p243) target = $region36
      $region35: #{dense_block_forward.3} parent=11 // pred_region
        _
      $region36: #{dense_block_forward.3} parent=11 // pred_fallthru
        _
      // Predicated region
      $region37: #{dense_block_forward.3} parent=11 // pred_check
        %p246 = pneg %p187
      $region38: #{dense_block_forward.3} parent=11 // pred_check_branch
        %248 = sbr.rel (%p246) target = $region40
      $region39: #{dense_block_forward.3} parent=11 // pred_region
        _
      $region40: #{dense_block_forward.3} parent=11 // pred_fallthru
        _
    $region12: #{dense_block_forward.3} parent=5 // pred_fallthru
      _
    %p249 = scmp.lt.s32.totalorder %s14, 2
    // Predicated region
    $region41: #{dense_block_forward.3} parent=5 // pred_check
      %p250 = pneg %p249
    $region42: #{dense_block_forward.3} parent=5 // pred_check_branch
      %252 = sbr.rel (%p250) target = $region44
    $region43: #{dense_block_forward.3} parent=5 // pred_region
      // Predicated region
      $region45: #{dense_block_forward.3} parent=43 // pred_check
        %p253 = pneg %p34
      $region46: #{dense_block_forward.3} parent=43 // pred_check_branch
        %255 = sbr.rel (%p253) target = $region48
      $region47: #{dense_block_forward.3} parent=43 // pred_region
        %p256 = scmp.lt.s32.totalorder %s14, 1
        %s257 = scalar_select %p256, %s14, 1
        %s258 = smul.addr %s257, 20
        %s259 = smul.addr %s258, 8
        %s260 = scalar_lea.vmem %s0, %s259
      $region48: #{dense_block_forward.3} parent=43 // pred_fallthru
        _
    $region44: #{dense_block_forward.3} parent=5 // pred_fallthru
      _
    %p261 = scmp.le.s32.totalorder 1, %s14
    %p262 = scmp.lt.s32.totalorder %s14, 3
    %p263 = pnand %p261, %p262
    %p264 = pneg %p263
    // Predicated region
    $region49: #{dense_block_forward.3} parent=5 // pred_check
      _
    $region50: #{dense_block_forward.3} parent=5 // pred_check_branch
      %266 = sbr.rel (%p263) target = $region52
    $region51: #{dense_block_forward.3} parent=5 // pred_region
      %s267 = ssub.s32 %s14, 1
      %p268 = scmp.lt.s32.totalorder %s19, 1
      %s269 = scalar_select %p268, %s19, 1
      %s270 = smul.addr %s269, 20
      %s271 = smul.addr %s270, 8
      %s272 = scalar_lea.vmem %s0, %s271
      %p273 = pneg %p40
      %p274 = pneg %p37
      %p275 = pneg %p61
      %p276 = pneg %p58
      %p277 = pneg %p82
      %p278 = pneg %p79
      %p279 = pneg %p103
      %p280 = pneg %p100
      %p281 = pneg %p124
      %p282 = pneg %p121
      %p283 = pneg %p145
      %p284 = pneg %p142
      %p285 = pneg %p166
      %p286 = pneg %p163
      %p287 = pneg %p187
      %p288 = pneg %p184
      %p289 = pneg %p213
      %p290 = pneg %p210
      %p291 = scmp.lt.s32.totalorder %s19, 1
      %s292 = scalar_select %p291, %s19, 1
      %s293 = smul.addr %s292, 20
      %s294 = smul.addr %s293, 8
      %s295 = scalar_lea.vmem %s8, %s294
      %p296 = scmp.lt.s32.totalorder %s19, 1
      %s297 = scalar_select %p296, %s19, 1
      %s298 = smul.addr %s297, 20
      %s299 = smul.addr %s298, 8
      %s300 = scalar_lea.vmem %s0, %s299
      %p301 = scmp.lt.s32.totalorder %s19, 1
      %s302 = scalar_select %p301, %s19, 1
      %s303 = smul.addr %s302, 20
      %s304 = smul.addr %s303, 8
      %s305 = scalar_lea.vmem %s8, %s304
      %v307 = vld [vmem:[%s300] sm:$0xff]
      %v308 = vld [vmem:[%s300 + $0x8] sm:$0xff]
      %v309 = vld [vmem:[%s300 + $0x10] sm:$0xff]
      %v310 = vld [vmem:[%s300 + $0x18] sm:$0xff]
      %v311 = vld [vmem:[%s300 + $0x20] sm:$0xff]
      %v312 = vld [vmem:[%s300 + $0x28] sm:$0xff]
      %v313 = vld [vmem:[%s300 + $0x30] sm:$0xff]
      %v314 = vld [vmem:[%s300 + $0x38] sm:$0xff]
      %v315 = vld [vmem:[%s300 + $0x40] sm:$0xff]
      %v316 = vld [vmem:[%s300 + $0x48] sm:$0xff]
      %v317 = vld [vmem:[%s300 + $0x50] sm:$0xff]
      %v318 = vld [vmem:[%s300 + $0x58] sm:$0xff]
      %v319 = vld [vmem:[%s300 + $0x60] sm:$0xff]
      %v320 = vld [vmem:[%s300 + $0x68] sm:$0xff]
      %v321 = vld [vmem:[%s300 + $0x70] sm:$0xff]
      %v322 = vld [vmem:[%s300 + $0x78] sm:$0xff]
      %v323 = vld [vmem:[%s300 + $0x80] sm:$0xff]
      %v324 = vld [vmem:[%s300 + $0x88] sm:$0xff]
      %v325 = vld [vmem:[%s300 + $0x90] sm:$0xff]
      %v326 = vld [vmem:[%s300 + $0x98] sm:$0xff]
      %v327 = vld [vmem:[%s2] sm:$0x1]
      %v329 = vlaneseq
      %v330 = vshrl.u32 %v329, 7
      %v331 = vsub.s32 0, %v330
      %v332 = vrot.slane %v327, %v331
      %v334 = vmul.f32 %v307, %v332
      %v335 = vmul.f32 %v308, %v332
      %v336 = vmul.f32 %v309, %v332
      %v337 = vmul.f32 %v310, %v332
      %v338 = vmul.f32 %v311, %v332
      %v339 = vmul.f32 %v312, %v332
      %v340 = vmul.f32 %v313, %v332
      %v341 = vmul.f32 %v314, %v332
      %v342 = vmul.f32 %v315, %v332
      %v343 = vmul.f32 %v316, %v332
      %v344 = vmul.f32 %v317, %v332
      %v345 = vmul.f32 %v318, %v332
      %v346 = vmul.f32 %v319, %v332
      %v347 = vmul.f32 %v320, %v332
      %v348 = vmul.f32 %v321, %v332
      %v349 = vmul.f32 %v322, %v332
      %v350 = vmul.f32 %v323, %v332
      %v351 = vmul.f32 %v324, %v332
      %v352 = vmul.f32 %v325, %v332
      %v353 = vmul.f32 %v326, %v332
      %v354 = vld [vmem:[%s3] sm:$0x1]
      %v356 = vlaneseq
      %v357 = vshrl.u32 %v356, 7
      %v358 = vsub.s32 0, %v357
      %v359 = vrot.slane %v354, %v358
      %v361 = vadd.f32 %v334, %v359
      %v362 = vadd.f32 %v335, %v359
      %v363 = vadd.f32 %v336, %v359
      %v364 = vadd.f32 %v337, %v359
      %v365 = vadd.f32 %v338, %v359
      %v366 = vadd.f32 %v339, %v359
      %v367 = vadd.f32 %v340, %v359
      %v368 = vadd.f32 %v341, %v359
      %v369 = vadd.f32 %v342, %v359
      %v370 = vadd.f32 %v343, %v359
      %v371 = vadd.f32 %v344, %v359
      %v372 = vadd.f32 %v345, %v359
      %v373 = vadd.f32 %v346, %v359
      %v374 = vadd.f32 %v347, %v359
      %v375 = vadd.f32 %v348, %v359
      %v376 = vadd.f32 %v349, %v359
      %v377 = vadd.f32 %v350, %v359
      %v378 = vadd.f32 %v351, %v359
      %v379 = vadd.f32 %v352, %v359
      %v380 = vadd.f32 %v353, %v359
      %v381 = vmax.f32 %v361, 0.0
      %v382 = vmax.f32 %v362, 0.0
      %v383 = vmax.f32 %v363, 0.0
      %v384 = vmax.f32 %v364, 0.0
      %v385 = vmax.f32 %v365, 0.0
      %v386 = vmax.f32 %v366, 0.0
      %v387 = vmax.f32 %v367, 0.0
      %v388 = vmax.f32 %v368, 0.0
      %v389 = vmax.f32 %v369, 0.0
      %v390 = vmax.f32 %v370, 0.0
      %v391 = vmax.f32 %v371, 0.0
      %v392 = vmax.f32 %v372, 0.0
      %v393 = vmax.f32 %v373, 0.0
      %v394 = vmax.f32 %v374, 0.0
      %v395 = vmax.f32 %v375, 0.0
      %v396 = vmax.f32 %v376, 0.0
      %v397 = vmax.f32 %v377, 0.0
      %v398 = vmax.f32 %v378, 0.0
      %v399 = vmax.f32 %v379, 0.0
      %v400 = vmax.f32 %v380, 0.0
      %v401 = vpack.c.bf16 %v382, %v381
      %v402 = vpack.c.bf16 %v384, %v383
      %v403 = vpack.c.bf16 %v386, %v385
      %v404 = vpack.c.bf16 %v388, %v387
      %v405 = vpack.c.bf16 %v390, %v389
      %v406 = vpack.c.bf16 %v392, %v391
      %v407 = vpack.c.bf16 %v394, %v393
      %v408 = vpack.c.bf16 %v396, %v395
      %v409 = vpack.c.bf16 %v398, %v397
      %v410 = vpack.c.bf16 %v400, %v399
      %v411 = vld [vmem:[%s4] sm:$0xf]
      %v412 = vld [vmem:[%s4 + $0x4] sm:$0xf]
      %v413 = vld [vmem:[%s4 + $0x8] sm:$0xf]
      %v414 = vld [vmem:[%s4 + $0xc] sm:$0xf]
      %v415 = vld [vmem:[%s5] sm:$0x1]
      %v417 = vlaneseq
      %v418 = vshrl.u32 %v417, 7
      %v419 = vsub.s32 0, %v418
      %v420 = vrot.slane %v415, %v419
      %v426 = vunpack.c.l.b16 %v411
      %v427 = vunpack.c.l.b16 %v412
      %v428 = vunpack.c.l.b16 %v413
      %v429 = vunpack.c.l.b16 %v414
      %v430 = vpack.c.b16 %v427, %v426
      %v431 = vpack.c.b16 %v429, %v428
      %vm434 = vcmask 261120
      %v436 = vsel %vm434, %v401, 0
      %v439 = vsel %vm434, %v402, 0
      %v442 = vsel %vm434, %v403, 0
      %v445 = vsel %vm434, %v404, 0
      %v448 = vsel %vm434, %v405, 0
      %v451 = vsel %vm434, %v406, 0
      %v454 = vsel %vm434, %v407, 0
      %v457 = vsel %vm434, %v408, 0
      %v460 = vsel %vm434, %v409, 0
      %v463 = vsel %vm434, %v410, 0
      %465 = vmatprep.subr.bf16.mxu0 0
      %466 = vmatpush1.bf16.msra.mxu0 0
      %467 = vmatprep.subr.bf16.mxu0 0
      %468 = vmatpush1.bf16.msra.mxu0 0
      %469 = vmatprep.subr.bf16.mxu0 0
      %470 = vmatpush1.bf16.msra.mxu0 0
      %471 = vmatprep.subr.bf16.mxu0 0
      %472 = vmatpush1.bf16.msra.mxu0 0
      %473 = vmatprep.subr.bf16.mxu0 0
      %474 = vmatpush1.bf16.msra.mxu0 0
      %475 = vmatprep.subr.bf16.mxu0 0
      %476 = vmatpush1.bf16.msra.mxu0 0
      %477 = vmatprep.subr.bf16.mxu0 0
      %478 = vmatpush1.bf16.msra.mxu0 %v431
      %479 = vmatprep.subr.bf16.mxu0 0
      %480 = vmatpush1.bf16.msra.mxu0 %v430
      %481 = vmatprep.subr.bf16.mxu0 0
      %482 = vmatpush2.bf16.msra.mxu0 0
      %483 = vmatprep.subr.bf16.mxu0 0
      %484 = vmatpush2.bf16.msra.mxu0 0
      %485 = vmatprep.subr.bf16.mxu0 0
      %486 = vmatpush2.bf16.msra.mxu0 0
      %487 = vmatprep.subr.bf16.mxu0 0
      %488 = vmatpush2.bf16.msra.mxu0 0
      %489 = vmatprep.subr.bf16.mxu0 0
      %490 = vmatpush2.bf16.msra.mxu0 0
      %491 = vmatprep.subr.bf16.mxu0 0
      %492 = vmatpush2.bf16.msra.mxu0 0
      %493 = vmatprep.subr.bf16.mxu0 0
      %494 = vmatpush2.bf16.msra.mxu0 0
      %495 = vmatprep.subr.bf16.mxu0 0
      %496 = vmatpush2.bf16.msra.mxu0 0
      %497 = vmatprep.mubr.bf16.mxu0 0
      %498 = vmatmul.mubr.bf16.gmra.mxu0 %v436
      %v499 = vpop.f32.mrf.mxu0
      %v500 = vadd.f32 %v420, %v499
      %v501 = vpop.f32.mrf.mxu0
      %v502 = vpop.f32.mrf.mxu0
      %v503 = vadd.f32 %v420, %v502
      %v504 = vpop.f32.mrf.mxu0
      %505 = vmatprep.mubr.bf16.mxu0 0
      %506 = vmatmul.mubr.bf16.gmra.mxu0 %v439
      %v507 = vpop.f32.mrf.mxu0
      %v508 = vadd.f32 %v420, %v507
      %v509 = vpop.f32.mrf.mxu0
      %v510 = vpop.f32.mrf.mxu0
      %v511 = vadd.f32 %v420, %v510
      %v512 = vpop.f32.mrf.mxu0
      %513 = vmatprep.mubr.bf16.mxu0 0
      %514 = vmatmul.mubr.bf16.gmra.mxu0 %v442
      %v515 = vpop.f32.mrf.mxu0
      %v516 = vadd.f32 %v420, %v515
      %v517 = vpop.f32.mrf.mxu0
      %v518 = vpop.f32.mrf.mxu0
      %v519 = vadd.f32 %v420, %v518
      %v520 = vpop.f32.mrf.mxu0
      %521 = vmatprep.mubr.bf16.mxu0 0
      %522 = vmatmul.mubr.bf16.gmra.mxu0 %v445
      %v523 = vpop.f32.mrf.mxu0
      %v524 = vadd.f32 %v420, %v523
      %v525 = vpop.f32.mrf.mxu0
      %v526 = vpop.f32.mrf.mxu0
      %v527 = vadd.f32 %v420, %v526
      %v528 = vpop.f32.mrf.mxu0
      %529 = vmatprep.mubr.bf16.mxu0 0
      %530 = vmatmul.mubr.bf16.gmra.mxu0 %v448
      %v531 = vpop.f32.mrf.mxu0
      %v532 = vadd.f32 %v420, %v531
      %v533 = vpop.f32.mrf.mxu0
      %v534 = vpop.f32.mrf.mxu0
      %v535 = vadd.f32 %v420, %v534
      %v536 = vpop.f32.mrf.mxu0
      %537 = vmatprep.mubr.bf16.mxu0 0
      %538 = vmatmul.mubr.bf16.gmra.mxu0 %v451
      %v539 = vpop.f32.mrf.mxu0
      %v540 = vadd.f32 %v420, %v539
      %v541 = vpop.f32.mrf.mxu0
      %v542 = vpop.f32.mrf.mxu0
      %v543 = vadd.f32 %v420, %v542
      %v544 = vpop.f32.mrf.mxu0
      %545 = vmatprep.mubr.bf16.mxu0 0
      %546 = vmatmul.mubr.bf16.gmra.mxu0 %v454
      %v547 = vpop.f32.mrf.mxu0
      %v548 = vadd.f32 %v420, %v547
      %v549 = vpop.f32.mrf.mxu0
      %v550 = vpop.f32.mrf.mxu0
      %v551 = vadd.f32 %v420, %v550
      %v552 = vpop.f32.mrf.mxu0
      %553 = vmatprep.mubr.bf16.mxu0 0
      %554 = vmatmul.mubr.bf16.gmra.mxu0 %v457
      %v555 = vpop.f32.mrf.mxu0
      %v556 = vadd.f32 %v420, %v555
      %v557 = vpop.f32.mrf.mxu0
      %v558 = vpop.f32.mrf.mxu0
      %v559 = vadd.f32 %v420, %v558
      %v560 = vpop.f32.mrf.mxu0
      %561 = vmatprep.mubr.bf16.mxu0 0
      %562 = vmatmul.mubr.bf16.gmra.mxu0 %v460
      %v563 = vpop.f32.mrf.mxu0
      %v564 = vadd.f32 %v420, %v563
      %v565 = vpop.f32.mrf.mxu0
      %v566 = vpop.f32.mrf.mxu0
      %v567 = vadd.f32 %v420, %v566
      %v568 = vpop.f32.mrf.mxu0
      %569 = vmatprep.mubr.bf16.mxu0 0
      %570 = vmatmul.mubr.bf16.gmra.mxu0 %v463
      %v571 = vpop.f32.mrf.mxu0
      %v572 = vadd.f32 %v420, %v571
      %v573 = vpop.f32.mrf.mxu0
      %v574 = vpop.f32.mrf.mxu0
      %v575 = vadd.f32 %v420, %v574
      %v576 = vpop.f32.mrf.mxu0
      %577 = vdwg.mxu0
      %v578 = vmax.f32 %v500, 0.0
      %v579 = vmax.f32 %v503, 0.0
      %v580 = vmax.f32 %v508, 0.0
      %v581 = vmax.f32 %v511, 0.0
      %v582 = vmax.f32 %v516, 0.0
      %v583 = vmax.f32 %v519, 0.0
      %v584 = vmax.f32 %v524, 0.0
      %v585 = vmax.f32 %v527, 0.0
      %v586 = vmax.f32 %v532, 0.0
      %v587 = vmax.f32 %v535, 0.0
      %v588 = vmax.f32 %v540, 0.0
      %v589 = vmax.f32 %v543, 0.0
      %v590 = vmax.f32 %v548, 0.0
      %v591 = vmax.f32 %v551, 0.0
      %v592 = vmax.f32 %v556, 0.0
      %v593 = vmax.f32 %v559, 0.0
      %v594 = vmax.f32 %v564, 0.0
      %v595 = vmax.f32 %v567, 0.0
      %v596 = vmax.f32 %v572, 0.0
      %v597 = vmax.f32 %v575, 0.0
      %v598 = vld [vmem:[%s1] sm:$0xff]
      %v599 = vld [vmem:[%s1 + $0x8] sm:$0xff]
      %v600 = vld [vmem:[%s1 + $0x10] sm:$0xff]
      %v601 = vld [vmem:[%s1 + $0x18] sm:$0xff]
      %v602 = vld [vmem:[%s1 + $0x20] sm:$0xff]
      %v603 = vld [vmem:[%s1 + $0x28] sm:$0xff]
      %v604 = vld [vmem:[%s1 + $0x30] sm:$0xff]
      %v605 = vld [vmem:[%s1 + $0x38] sm:$0xff]
      %v606 = vld [vmem:[%s1 + $0x40] sm:$0xff]
      %v607 = vld [vmem:[%s1 + $0x48] sm:$0xff]
      %v608 = vld [vmem:[%s1 + $0x50] sm:$0xff]
      %v609 = vld [vmem:[%s1 + $0x58] sm:$0xff]
      %v610 = vld [vmem:[%s1 + $0x60] sm:$0xff]
      %v611 = vld [vmem:[%s1 + $0x68] sm:$0xff]
      %v612 = vld [vmem:[%s1 + $0x70] sm:$0xff]
      %v613 = vld [vmem:[%s1 + $0x78] sm:$0xff]
      %v614 = vld [vmem:[%s1 + $0x80] sm:$0xff]
      %v615 = vld [vmem:[%s1 + $0x88] sm:$0xff]
      %v616 = vld [vmem:[%s1 + $0x90] sm:$0xff]
      %v617 = vld [vmem:[%s1 + $0x98] sm:$0xff]
      %619 = vset.pattern.permute.xlu0 0
      %620 = vperm.xlu0 %619, %v598
      %v621 = vpop.permute.xlu0 %620
      %624 = vset.pattern.permute.xlu0 0
      %625 = vperm.xlu0 %624, %v599
      %v626 = vpop.permute.xlu0 %625
      %629 = vset.pattern.permute.xlu0 0
      %630 = vperm.xlu0 %629, %v600
      %v631 = vpop.permute.xlu0 %630
      %634 = vset.pattern.permute.xlu0 0
      %635 = vperm.xlu0 %634, %v601
      %v636 = vpop.permute.xlu0 %635
      %639 = vset.pattern.permute.xlu0 0
      %640 = vperm.xlu0 %639, %v602
      %v641 = vpop.permute.xlu0 %640
      %644 = vset.pattern.permute.xlu0 0
      %645 = vperm.xlu0 %644, %v603
      %v646 = vpop.permute.xlu0 %645
      %649 = vset.pattern.permute.xlu0 0
      %650 = vperm.xlu0 %649, %v604
      %v651 = vpop.permute.xlu0 %650
      %654 = vset.pattern.permute.xlu0 0
      %655 = vperm.xlu0 %654, %v605
      %v656 = vpop.permute.xlu0 %655
      %659 = vset.pattern.permute.xlu0 0
      %660 = vperm.xlu0 %659, %v606
      %v661 = vpop.permute.xlu0 %660
      %664 = vset.pattern.permute.xlu0 0
      %665 = vperm.xlu0 %664, %v607
      %v666 = vpop.permute.xlu0 %665
      %669 = vset.pattern.permute.xlu0 0
      %670 = vperm.xlu0 %669, %v608
      %v671 = vpop.permute.xlu0 %670
      %674 = vset.pattern.permute.xlu0 0
      %675 = vperm.xlu0 %674, %v609
      %v676 = vpop.permute.xlu0 %675
      %679 = vset.pattern.permute.xlu0 0
      %680 = vperm.xlu0 %679, %v610
      %v681 = vpop.permute.xlu0 %680
      %684 = vset.pattern.permute.xlu0 0
      %685 = vperm.xlu0 %684, %v611
      %v686 = vpop.permute.xlu0 %685
      %689 = vset.pattern.permute.xlu0 0
      %690 = vperm.xlu0 %689, %v612
      %v691 = vpop.permute.xlu0 %690
      %694 = vset.pattern.permute.xlu0 0
      %695 = vperm.xlu0 %694, %v613
      %v696 = vpop.permute.xlu0 %695
      %699 = vset.pattern.permute.xlu0 0
      %700 = vperm.xlu0 %699, %v614
      %v701 = vpop.permute.xlu0 %700
      %704 = vset.pattern.permute.xlu0 0
      %705 = vperm.xlu0 %704, %v615
      %v706 = vpop.permute.xlu0 %705
      %709 = vset.pattern.permute.xlu0 0
      %710 = vperm.xlu0 %709, %v616
      %v711 = vpop.permute.xlu0 %710
      %714 = vset.pattern.permute.xlu0 0
      %715 = vperm.xlu0 %714, %v617
      %v716 = vpop.permute.xlu0 %715
      %v718 = vmul.f32 %v578, %v621
      %v719 = vmul.f32 %v579, %v626
      %v720 = vmul.f32 %v580, %v631
      %v721 = vmul.f32 %v581, %v636
      %v722 = vmul.f32 %v582, %v641
      %v723 = vmul.f32 %v583, %v646
      %v724 = vmul.f32 %v584, %v651
      %v725 = vmul.f32 %v585, %v656
      %v726 = vmul.f32 %v586, %v661
      %v727 = vmul.f32 %v587, %v666
      %v728 = vmul.f32 %v588, %v671
      %v729 = vmul.f32 %v589, %v676
      %v730 = vmul.f32 %v590, %v681
      %v731 = vmul.f32 %v591, %v686
      %v732 = vmul.f32 %v592, %v691
      %v733 = vmul.f32 %v593, %v696
      %v734 = vmul.f32 %v594, %v701
      %v735 = vmul.f32 %v595, %v706
      %v736 = vmul.f32 %v596, %v711
      %v737 = vmul.f32 %v597, %v716
      %vm758 = vcmask 1040384
      %v759 = vrot.slane %v718, 7
      %v760 = vrot.slane %v719, 7
      %v761 = vsel %vm758, %v759, %v760
      %v762 = vrot.slane %v720, 7
      %v763 = vsel %vm758, %v760, %v762
      %v764 = vrot.slane %v721, 7
      %v765 = vsel %vm758, %v762, %v764
      %v766 = vrot.slane %v722, 7
      %v767 = vsel %vm758, %v764, %v766
      %v768 = vrot.slane %v723, 7
      %v769 = vsel %vm758, %v766, %v768
      %v770 = vrot.slane %v724, 7
      %v771 = vsel %vm758, %v768, %v770
      %v772 = vrot.slane %v725, 7
      %v773 = vsel %vm758, %v770, %v772
      %v774 = vrot.slane %v726, 7
      %v775 = vsel %vm758, %v772, %v774
      %v776 = vrot.slane %v727, 7
      %v777 = vsel %vm758, %v774, %v776
      %v778 = vrot.slane %v728, 7
      %v779 = vsel %vm758, %v776, %v778
      %v780 = vrot.slane %v729, 7
      %v781 = vsel %vm758, %v778, %v780
      %v782 = vrot.slane %v730, 7
      %v783 = vsel %vm758, %v780, %v782
      %v784 = vrot.slane %v731, 7
      %v785 = vsel %vm758, %v782, %v784
      %v786 = vrot.slane %v732, 7
      %v787 = vsel %vm758, %v784, %v786
      %v788 = vrot.slane %v733, 7
      %v789 = vsel %vm758, %v786, %v788
      %v790 = vrot.slane %v734, 7
      %v791 = vsel %vm758, %v788, %v790
      %v792 = vrot.slane %v735, 7
      %v793 = vsel %vm758, %v790, %v792
      %v794 = vrot.slane %v736, 7
      %v795 = vsel %vm758, %v792, %v794
      %v796 = vrot.slane %v737, 7
      %v797 = vsel %vm758, %v794, %v796
      %v819 = vsel %vm758, 0.0, %v759
      %v820 = vsel %vm758, %v796, 0.0
      %v821 = vpack.c.bf16 0.0, 0.0
      %v822 = vpack.c.bf16 %v761, %v819
      %v823 = vpack.c.bf16 %v765, %v763
      %v824 = vpack.c.bf16 %v769, %v767
      %v825 = vpack.c.bf16 %v773, %v771
      %v826 = vpack.c.bf16 %v777, %v775
      %v827 = vpack.c.bf16 %v781, %v779
      %v828 = vpack.c.bf16 %v785, %v783
      %v829 = vpack.c.bf16 %v789, %v787
      %v830 = vpack.c.bf16 %v793, %v791
      %v831 = vpack.c.bf16 %v797, %v795
      %v832 = vpack.c.bf16 0.0, %v820
      %v833 = vld [vmem:[%s6] sm:$0xff]
      %v834 = vld [vmem:[%s6 + $0x8] sm:$0xf]
      %v835 = vld [vmem:[%s6 + $0xc] sm:$0xff]
      %v836 = vld [vmem:[%s6 + $0x14] sm:$0xf]
      %v837 = vld [vmem:[%s6 + $0x18] sm:$0xff]
      %v838 = vld [vmem:[%s6 + $0x20] sm:$0xf]
      %v839 = vld [vmem:[%s6 + $0x24] sm:$0xff]
      %v840 = vld [vmem:[%s6 + $0x2c] sm:$0xf]
      %v841 = vld [vmem:[%s6 + $0x30] sm:$0xff]
      %v842 = vld [vmem:[%s6 + $0x38] sm:$0xf]
      %v843 = vld [vmem:[%s6 + $0x3c] sm:$0xff]
      %v844 = vld [vmem:[%s6 + $0x44] sm:$0xf]
      %v845 = vld [vmem:[%s6 + $0x48] sm:$0xff]
      %v846 = vld [vmem:[%s6 + $0x50] sm:$0xf]
      %v847 = vld [vmem:[%s6 + $0x54] sm:$0xff]
      %v848 = vld [vmem:[%s6 + $0x5c] sm:$0xf]
      %v849 = vld [vmem:[%s6 + $0x60] sm:$0xff]
      %v850 = vld [vmem:[%s6 + $0x68] sm:$0xf]
      %v851 = vld [vmem:[%s6 + $0x6c] sm:$0xff]
      %v852 = vld [vmem:[%s6 + $0x74] sm:$0xf]
      %v853 = vld [vmem:[%s6 + $0x78] sm:$0xff]
      %v854 = vld [vmem:[%s6 + $0x80] sm:$0xf]
      %v855 = vld [vmem:[%s6 + $0x84] sm:$0xff]
      %v856 = vld [vmem:[%s6 + $0x8c] sm:$0xf]
      %v857 = vld [vmem:[%s6 + $0x90] sm:$0xff]
      %v858 = vld [vmem:[%s6 + $0x98] sm:$0xf]
      %v859 = vld [vmem:[%s6 + $0x9c] sm:$0xff]
      %v860 = vld [vmem:[%s6 + $0xa4] sm:$0xf]
      %v861 = vld [vmem:[%s6 + $0xa8] sm:$0xff]
      %v862 = vld [vmem:[%s6 + $0xb0] sm:$0xf]
      %v863 = vld [vmem:[%s6 + $0xb4] sm:$0xff]
      %v864 = vld [vmem:[%s6 + $0xbc] sm:$0xf]
      %v897 = vunpack.c.l.b16 %v833
      %v898 = vunpack.c.h.b16 %v833
      %v899 = vunpack.c.l.b16 %v834
      %v900 = vunpack.c.l.b16 %v835
      %v901 = vunpack.c.h.b16 %v835
      %v902 = vunpack.c.l.b16 %v836
      %v903 = vunpack.c.l.b16 %v837
      %v904 = vunpack.c.h.b16 %v837
      %v905 = vunpack.c.l.b16 %v838
      %v906 = vunpack.c.l.b16 %v839
      %v907 = vunpack.c.h.b16 %v839
      %v908 = vunpack.c.l.b16 %v840
      %v909 = vunpack.c.l.b16 %v841
      %v910 = vunpack.c.h.b16 %v841
      %v911 = vunpack.c.l.b16 %v842
      %v912 = vunpack.c.l.b16 %v843
      %v913 = vunpack.c.h.b16 %v843
      %v914 = vunpack.c.l.b16 %v844
      %v915 = vunpack.c.l.b16 %v845
      %v916 = vunpack.c.h.b16 %v845
      %v917 = vunpack.c.l.b16 %v846
      %v918 = vunpack.c.l.b16 %v847
      %v919 = vunpack.c.h.b16 %v847
      %v920 = vunpack.c.l.b16 %v848
      %v921 = vunpack.c.l.b16 %v849
      %v922 = vunpack.c.h.b16 %v849
      %v923 = vunpack.c.l.b16 %v850
      %v924 = vunpack.c.l.b16 %v851
      %v925 = vunpack.c.h.b16 %v851
      %v926 = vunpack.c.l.b16 %v852
      %v927 = vunpack.c.l.b16 %v853
      %v928 = vunpack.c.h.b16 %v853
      %v929 = vunpack.c.l.b16 %v854
      %v930 = vunpack.c.l.b16 %v855
      %v931 = vunpack.c.h.b16 %v855
      %v932 = vunpack.c.l.b16 %v856
      %v933 = vunpack.c.l.b16 %v857
      %v934 = vunpack.c.h.b16 %v857
      %v935 = vunpack.c.l.b16 %v858
      %v936 = vunpack.c.l.b16 %v859
      %v937 = vunpack.c.h.b16 %v859
      %v938 = vunpack.c.l.b16 %v860
      %v939 = vunpack.c.l.b16 %v861
      %v940 = vunpack.c.h.b16 %v861
      %v941 = vunpack.c.l.b16 %v862
      %v942 = vunpack.c.l.b16 %v863
      %v943 = vunpack.c.h.b16 %v863
      %v944 = vunpack.c.l.b16 %v864
      %v945 = vpack.c.b16 %v900, %v897
      %v946 = vpack.c.b16 %v901, %v898
      %v947 = vpack.c.b16 %v902, %v899
      %v948 = vpack.c.b16 %v906, %v903
      %v949 = vpack.c.b16 %v907, %v904
      %v950 = vpack.c.b16 %v908, %v905
      %v951 = vpack.c.b16 %v912, %v909
      %v952 = vpack.c.b16 %v913, %v910
      %v953 = vpack.c.b16 %v914, %v911
      %v954 = vpack.c.b16 %v918, %v915
      %v955 = vpack.c.b16 %v919, %v916
      %v956 = vpack.c.b16 %v920, %v917
      %v957 = vpack.c.b16 %v924, %v921
      %v958 = vpack.c.b16 %v925, %v922
      %v959 = vpack.c.b16 %v926, %v923
      %v960 = vpack.c.b16 %v930, %v927
      %v961 = vpack.c.b16 %v931, %v928
      %v962 = vpack.c.b16 %v932, %v929
      %v963 = vpack.c.b16 %v936, %v933
      %v964 = vpack.c.b16 %v937, %v934
      %v965 = vpack.c.b16 %v938, %v935
      %v966 = vpack.c.b16 %v942, %v939
      %v967 = vpack.c.b16 %v943, %v940
      %v968 = vpack.c.b16 %v944, %v941
      %993 = vmatprep.subr.bf16.mxu0 %v967
      %994 = vmatpush1.bf16.msra.mxu0 %v966
      %995 = vmatprep.subr.bf16.mxu0 %v964
      %996 = vmatpush1.bf16.msra.mxu0 %v963
      %997 = vmatprep.subr.bf16.mxu0 %v961
      %998 = vmatpush1.bf16.msra.mxu0 %v960
      %999 = vmatprep.subr.bf16.mxu0 %v958
      %1000 = vmatpush1.bf16.msra.mxu0 %v957
      %1001 = vmatprep.subr.bf16.mxu0 %v955
      %1002 = vmatpush1.bf16.msra.mxu0 %v954
      %1003 = vmatprep.subr.bf16.mxu0 %v952
      %1004 = vmatpush1.bf16.msra.mxu0 %v951
      %1005 = vmatprep.subr.bf16.mxu0 %v949
      %1006 = vmatpush1.bf16.msra.mxu0 %v948
      %1007 = vmatprep.subr.bf16.mxu0 %v946
      %1008 = vmatpush1.bf16.msra.mxu0 %v945
      %1009 = vmatprep.subr.bf16.mxu0 0
      %1010 = vmatpush2.bf16.msra.mxu0 0
      %1011 = vmatprep.subr.bf16.mxu0 0
      %1012 = vmatpush2.bf16.msra.mxu0 0
      %1013 = vmatprep.subr.bf16.mxu0 0
      %1014 = vmatpush2.bf16.msra.mxu0 0
      %1015 = vmatprep.subr.bf16.mxu0 0
      %1016 = vmatpush2.bf16.msra.mxu0 0
      %1017 = vmatprep.subr.bf16.mxu0 0
      %1018 = vmatpush2.bf16.msra.mxu0 0
      %1019 = vmatprep.subr.bf16.mxu0 0
      %1020 = vmatpush2.bf16.msra.mxu0 0
      %1021 = vmatprep.subr.bf16.mxu0 0
      %1022 = vmatpush2.bf16.msra.mxu0 0
      %1023 = vmatprep.subr.bf16.mxu0 0
      %1024 = vmatpush2.bf16.msra.mxu0 0
      %1025 = vmatprep.mubr.bf16.mxu0 0
      %1026 = vmatmul.mubr.bf16.gmra.mxu0 %v821
      %v1027 = vpop.f32.mrf.mxu0
      %v1028 = vadd.f32 0.0, %v1027
      %v1029 = vpop.f32.mrf.mxu0
      %v1030 = vpop.f32.mrf.mxu0
      %v1031 = vadd.f32 0.0, %v1030
      %v1032 = vpop.f32.mrf.mxu0
      %1033 = vmatprep.mubr.bf16.mxu0 0
      %1034 = vmatmul.mubr.bf16.gmra.mxu0 %v822
      %v1035 = vpop.f32.mrf.mxu0
      %v1036 = vadd.f32 0.0, %v1035
      %v1037 = vpop.f32.mrf.mxu0
      %v1038 = vadd.f32 0.0, %v1037
      %v1039 = vpop.f32.mrf.mxu0
      %v1040 = vadd.f32 0.0, %v1039
      %v1041 = vpop.f32.mrf.mxu0
      %v1042 = vadd.f32 0.0, %v1041
      %1043 = vmatprep.mubr.bf16.mxu0 0
      %1044 = vmatmul.mubr.bf16.gmra.mxu0 %v823
      %v1045 = vpop.f32.mrf.mxu0
      %v1046 = vadd.f32 0.0, %v1045
      %v1047 = vpop.f32.mrf.mxu0
      %v1048 = vadd.f32 0.0, %v1047
      %v1049 = vpop.f32.mrf.mxu0
      %v1050 = vadd.f32 0.0, %v1049
      %v1051 = vpop.f32.mrf.mxu0
      %v1052 = vadd.f32 0.0, %v1051
      %1053 = vmatprep.mubr.bf16.mxu0 0
      %1054 = vmatmul.mubr.bf16.gmra.mxu0 %v824
      %v1055 = vpop.f32.mrf.mxu0
      %v1056 = vadd.f32 0.0, %v1055
      %v1057 = vpop.f32.mrf.mxu0
      %v1058 = vadd.f32 0.0, %v1057
      %v1059 = vpop.f32.mrf.mxu0
      %v1060 = vadd.f32 0.0, %v1059
      %v1061 = vpop.f32.mrf.mxu0
      %v1062 = vadd.f32 0.0, %v1061
      %1063 = vmatprep.mubr.bf16.mxu0 0
      %1064 = vmatmul.mubr.bf16.gmra.mxu0 %v825
      %v1065 = vpop.f32.mrf.mxu0
      %v1066 = vadd.f32 0.0, %v1065
      %v1067 = vpop.f32.mrf.mxu0
      %v1068 = vadd.f32 0.0, %v1067
      %v1069 = vpop.f32.mrf.mxu0
      %v1070 = vadd.f32 0.0, %v1069
      %v1071 = vpop.f32.mrf.mxu0
      %v1072 = vadd.f32 0.0, %v1071
      %1073 = vmatprep.mubr.bf16.mxu0 0
      %1074 = vmatmul.mubr.bf16.gmra.mxu0 %v826
      %v1075 = vpop.f32.mrf.mxu0
      %v1076 = vadd.f32 0.0, %v1075
      %v1077 = vpop.f32.mrf.mxu0
      %v1078 = vadd.f32 0.0, %v1077
      %v1079 = vpop.f32.mrf.mxu0
      %v1080 = vadd.f32 0.0, %v1079
      %v1081 = vpop.f32.mrf.mxu0
      %v1082 = vadd.f32 0.0, %v1081
      %1083 = vmatprep.mubr.bf16.mxu0 0
      %1084 = vmatmul.mubr.bf16.gmra.mxu0 %v827
      %v1085 = vpop.f32.mrf.mxu0
      %v1086 = vadd.f32 0.0, %v1085
      %v1087 = vpop.f32.mrf.mxu0
      %v1088 = vadd.f32 0.0, %v1087
      %v1089 = vpop.f32.mrf.mxu0
      %v1090 = vadd.f32 0.0, %v1089
      %v1091 = vpop.f32.mrf.mxu0
      %v1092 = vadd.f32 0.0, %v1091
      %1093 = vmatprep.mubr.bf16.mxu0 0
      %1094 = vmatmul.mubr.bf16.gmra.mxu0 %v828
      %v1095 = vpop.f32.mrf.mxu0
      %v1096 = vadd.f32 0.0, %v1095
      %v1097 = vpop.f32.mrf.mxu0
      %v1098 = vadd.f32 0.0, %v1097
      %v1099 = vpop.f32.mrf.mxu0
      %v1100 = vadd.f32 0.0, %v1099
      %v1101 = vpop.f32.mrf.mxu0
      %v1102 = vadd.f32 0.0, %v1101
      %1103 = vmatprep.mubr.bf16.mxu0 0
      %1104 = vmatmul.mubr.bf16.gmra.mxu0 %v829
      %v1105 = vpop.f32.mrf.mxu0
      %v1106 = vadd.f32 0.0, %v1105
      %v1107 = vpop.f32.mrf.mxu0
      %v1108 = vadd.f32 0.0, %v1107
      %v1109 = vpop.f32.mrf.mxu0
      %v1110 = vadd.f32 0.0, %v1109
      %v1111 = vpop.f32.mrf.mxu0
      %v1112 = vadd.f32 0.0, %v1111
      %1113 = vmatprep.mubr.bf16.mxu0 0
      %1114 = vmatmul.mubr.bf16.gmra.mxu0 %v830
      %v1115 = vpop.f32.mrf.mxu0
      %v1116 = vadd.f32 0.0, %v1115
      %v1117 = vpop.f32.mrf.mxu0
      %v1118 = vadd.f32 0.0, %v1117
      %v1119 = vpop.f32.mrf.mxu0
      %v1120 = vadd.f32 0.0, %v1119
      %v1121 = vpop.f32.mrf.mxu0
      %v1122 = vadd.f32 0.0, %v1121
      %1123 = vmatprep.mubr.bf16.mxu0 0
      %1124 = vmatmul.mubr.bf16.gmra.mxu0 %v831
      %v1125 = vpop.f32.mrf.mxu0
      %v1126 = vadd.f32 0.0, %v1125
      %v1127 = vpop.f32.mrf.mxu0
      %v1128 = vadd.f32 0.0, %v1127
      %v1129 = vpop.f32.mrf.mxu0
      %v1130 = vadd.f32 0.0, %v1129
      %v1131 = vpop.f32.mrf.mxu0
      %v1132 = vadd.f32 0.0, %v1131
      %1133 = vmatprep.mubr.bf16.mxu0 0
      %1134 = vmatmul.mubr.bf16.gmra.mxu0 %v832
      %v1135 = vpop.f32.mrf.mxu0
      %v1136 = vpop.f32.mrf.mxu0
      %v1137 = vadd.f32 0.0, %v1136
      %v1138 = vpop.f32.mrf.mxu0
      %v1139 = vpop.f32.mrf.mxu0
      %v1140 = vadd.f32 0.0, %v1139
      %1141 = vmatprep.mubr.bf16.mxu0 0
      %1142 = vmatmul.mubr.bf16.gmra.mxu0 %v821
      %v1143 = vpop.f32.mrf.mxu0
      %v1144 = vpop.f32.mrf.mxu0
      %v1145 = vadd.f32 0.0, %v1144
      %v1146 = vpop.f32.mrf.mxu0
      %v1147 = vpop.f32.mrf.mxu0
      %1148 = vdwg.mxu0
      %1149 = vmatprep.subr.bf16.mxu0 0
      %1150 = vmatpush1.bf16.msra.mxu0 %v968
      %1151 = vmatprep.subr.bf16.mxu0 0
      %1152 = vmatpush1.bf16.msra.mxu0 %v965
      %1153 = vmatprep.subr.bf16.mxu0 0
      %1154 = vmatpush1.bf16.msra.mxu0 %v962
      %1155 = vmatprep.subr.bf16.mxu0 0
      %1156 = vmatpush1.bf16.msra.mxu0 %v959
      %1157 = vmatprep.subr.bf16.mxu0 0
      %1158 = vmatpush1.bf16.msra.mxu0 %v956
      %1159 = vmatprep.subr.bf16.mxu0 0
      %1160 = vmatpush1.bf16.msra.mxu0 %v953
      %1161 = vmatprep.subr.bf16.mxu0 0
      %1162 = vmatpush1.bf16.msra.mxu0 %v950
      %1163 = vmatprep.subr.bf16.mxu0 0
      %1164 = vmatpush1.bf16.msra.mxu0 %v947
      %1165 = vmatprep.subr.bf16.mxu0 0
      %1166 = vmatpush2.bf16.msra.mxu0 0
      %1167 = vmatprep.subr.bf16.mxu0 0
      %1168 = vmatpush2.bf16.msra.mxu0 0
      %1169 = vmatprep.subr.bf16.mxu0 0
      %1170 = vmatpush2.bf16.msra.mxu0 0
      %1171 = vmatprep.subr.bf16.mxu0 0
      %1172 = vmatpush2.bf16.msra.mxu0 0
      %1173 = vmatprep.subr.bf16.mxu0 0
      %1174 = vmatpush2.bf16.msra.mxu0 0
      %1175 = vmatprep.subr.bf16.mxu0 0
      %1176 = vmatpush2.bf16.msra.mxu0 0
      %1177 = vmatprep.subr.bf16.mxu0 0
      %1178 = vmatpush2.bf16.msra.mxu0 0
      %1179 = vmatprep.subr.bf16.mxu0 0
      %1180 = vmatpush2.bf16.msra.mxu0 0
      %1181 = vmatprep.mubr.bf16.mxu0 0
      %1182 = vmatmul.mubr.bf16.gmra.mxu0 %v821
      %v1183 = vpop.f32.mrf.mxu0
      %v1184 = vpop.f32.mrf.mxu0
      %v1185 = vpop.f32.mrf.mxu0
      %v1186 = vpop.f32.mrf.mxu0
      %1187 = vmatprep.mubr.bf16.mxu0 0
      %1188 = vmatmul.mubr.bf16.gmra.mxu0 %v822
      %v1189 = vpop.f32.mrf.mxu0
      %v1190 = vpop.f32.mrf.mxu0
      %v1191 = vpop.f32.mrf.mxu0
      %v1192 = vpop.f32.mrf.mxu0
      %1193 = vmatprep.mubr.bf16.mxu0 0
      %1194 = vmatmul.mubr.bf16.gmra.mxu0 %v823
      %v1195 = vpop.f32.mrf.mxu0
      %v1196 = vadd.f32 0.0, %v1195
      %v1197 = vpop.f32.mrf.mxu0
      %v1198 = vpop.f32.mrf.mxu0
      %v1199 = vadd.f32 0.0, %v1198
      %v1200 = vpop.f32.mrf.mxu0
      %1201 = vmatprep.mubr.bf16.mxu0 0
      %1202 = vmatmul.mubr.bf16.gmra.mxu0 %v824
      %v1203 = vpop.f32.mrf.mxu0
      %v1204 = vadd.f32 0.0, %v1203
      %v1205 = vpop.f32.mrf.mxu0
      %v1206 = vpop.f32.mrf.mxu0
      %v1207 = vadd.f32 0.0, %v1206
      %v1208 = vpop.f32.mrf.mxu0
      %1209 = vmatprep.mubr.bf16.mxu0 0
      %1210 = vmatmul.mubr.bf16.gmra.mxu0 %v825
      %v1211 = vpop.f32.mrf.mxu0
      %v1212 = vadd.f32 0.0, %v1211
      %v1213 = vpop.f32.mrf.mxu0
      %v1214 = vpop.f32.mrf.mxu0
      %v1215 = vadd.f32 0.0, %v1214
      %v1216 = vpop.f32.mrf.mxu0
      %1217 = vmatprep.mubr.bf16.mxu0 0
      %1218 = vmatmul.mubr.bf16.gmra.mxu0 %v826
      %v1219 = vpop.f32.mrf.mxu0
      %v1220 = vadd.f32 0.0, %v1219
      %v1221 = vpop.f32.mrf.mxu0
      %v1222 = vpop.f32.mrf.mxu0
      %v1223 = vadd.f32 0.0, %v1222
      %v1224 = vpop.f32.mrf.mxu0
      %1225 = vmatprep.mubr.bf16.mxu0 0
      %1226 = vmatmul.mubr.bf16.gmra.mxu0 %v827
      %v1227 = vpop.f32.mrf.mxu0
      %v1228 = vadd.f32 0.0, %v1227
      %v1229 = vpop.f32.mrf.mxu0
      %v1230 = vpop.f32.mrf.mxu0
      %v1231 = vadd.f32 0.0, %v1230
      %v1232 = vpop.f32.mrf.mxu0
      %1233 = vmatprep.mubr.bf16.mxu0 0
      %1234 = vmatmul.mubr.bf16.gmra.mxu0 %v828
      %v1235 = vpop.f32.mrf.mxu0
      %v1236 = vadd.f32 0.0, %v1235
      %v1237 = vpop.f32.mrf.mxu0
      %v1238 = vpop.f32.mrf.mxu0
      %v1239 = vadd.f32 0.0, %v1238
      %v1240 = vpop.f32.mrf.mxu0
      %1241 = vmatprep.mubr.bf16.mxu0 0
      %1242 = vmatmul.mubr.bf16.gmra.mxu0 %v829
      %v1243 = vpop.f32.mrf.mxu0
      %v1244 = vadd.f32 0.0, %v1243
      %v1245 = vpop.f32.mrf.mxu0
      %v1246 = vpop.f32.mrf.mxu0
      %v1247 = vadd.f32 0.0, %v1246
      %v1248 = vpop.f32.mrf.mxu0
      %1249 = vmatprep.mubr.bf16.mxu0 0
      %1250 = vmatmul.mubr.bf16.gmra.mxu0 %v830
      %v1251 = vpop.f32.mrf.mxu0
      %v1252 = vadd.f32 0.0, %v1251
      %v1253 = vpop.f32.mrf.mxu0
      %v1254 = vpop.f32.mrf.mxu0
      %v1255 = vadd.f32 0.0, %v1254
      %v1256 = vpop.f32.mrf.mxu0
      %1257 = vmatprep.mubr.bf16.mxu0 0
      %1258 = vmatmul.mubr.bf16.gmra.mxu0 %v831
      %v1259 = vpop.f32.mrf.mxu0
      %v1260 = vadd.f32 0.0, %v1259
      %v1261 = vpop.f32.mrf.mxu0
      %v1262 = vpop.f32.mrf.mxu0
      %v1263 = vadd.f32 0.0, %v1262
      %v1264 = vpop.f32.mrf.mxu0
      %1265 = vmatprep.mubr.bf16.mxu0 0
      %1266 = vmatmul.mubr.bf16.gmra.mxu0 %v832
      %v1267 = vpop.f32.mrf.mxu0
      %v1268 = vadd.f32 0.0, %v1267
      %v1269 = vpop.f32.mrf.mxu0
      %v1270 = vpop.f32.mrf.mxu0
      %v1271 = vadd.f32 0.0, %v1270
      %v1272 = vpop.f32.mrf.mxu0
      %1273 = vmatprep.mubr.bf16.mxu0 0
      %1274 = vmatmul.mubr.bf16.gmra.mxu0 %v821
      %v1275 = vpop.f32.mrf.mxu0
      %v1276 = vadd.f32 0.0, %v1275
      %v1277 = vpop.f32.mrf.mxu0
      %v1278 = vpop.f32.mrf.mxu0
      %v1279 = vpop.f32.mrf.mxu0
      %1280 = vdwg.mxu0
      %vm1302 = vcmask 1046528
      %v1303 = vrot.slane %v1028, 1
      %v1304 = vrot.slane %v1031, 1
      %v1305 = vsel %vm1302, %v1303, %v1304
      %v1306 = vrot.slane %v1036, 1
      %v1307 = vsel %vm1302, %v1304, %v1306
      %v1308 = vrot.slane %v1040, 1
      %v1309 = vsel %vm1302, %v1306, %v1308
      %v1310 = vrot.slane %v1046, 1
      %v1311 = vsel %vm1302, %v1308, %v1310
      %v1312 = vrot.slane %v1050, 1
      %v1313 = vsel %vm1302, %v1310, %v1312
      %v1314 = vrot.slane %v1056, 1
      %v1315 = vsel %vm1302, %v1312, %v1314
      %v1316 = vrot.slane %v1060, 1
      %v1317 = vsel %vm1302, %v1314, %v1316
      %v1318 = vrot.slane %v1066, 1
      %v1319 = vsel %vm1302, %v1316, %v1318
      %v1320 = vrot.slane %v1070, 1
      %v1321 = vsel %vm1302, %v1318, %v1320
      %v1322 = vrot.slane %v1076, 1
      %v1323 = vsel %vm1302, %v1320, %v1322
      %v1324 = vrot.slane %v1080, 1
      %v1325 = vsel %vm1302, %v1322, %v1324
      %v1326 = vrot.slane %v1086, 1
      %v1327 = vsel %vm1302, %v1324, %v1326
      %v1328 = vrot.slane %v1090, 1
      %v1329 = vsel %vm1302, %v1326, %v1328
      %v1330 = vrot.slane %v1096, 1
      %v1331 = vsel %vm1302, %v1328, %v1330
      %v1332 = vrot.slane %v1100, 1
      %v1333 = vsel %vm1302, %v1330, %v1332
      %v1334 = vrot.slane %v1106, 1
      %v1335 = vsel %vm1302, %v1332, %v1334
      %v1336 = vrot.slane %v1110, 1
      %v1337 = vsel %vm1302, %v1334, %v1336
      %v1338 = vrot.slane %v1116, 1
      %v1339 = vsel %vm1302, %v1336, %v1338
      %v1340 = vrot.slane %v1120, 1
      %v1341 = vsel %vm1302, %v1338, %v1340
      %v1342 = vrot.slane %v1126, 1
      %v1343 = vsel %vm1302, %v1340, %v1342
      %1344 = vrot.lane.b32.xlu0 %v1305, 96
      %v1345 = vpop.permute.xlu0 %1344
      %1346 = vrot.lane.b32.xlu0 %v1307, 96
      %v1347 = vpop.permute.xlu0 %1346
      %1348 = vrot.lane.b32.xlu0 %v1309, 96
      %v1349 = vpop.permute.xlu0 %1348
      %1350 = vrot.lane.b32.xlu0 %v1311, 96
      %v1351 = vpop.permute.xlu0 %1350
      %1352 = vrot.lane.b32.xlu0 %v1313, 96
      %v1353 = vpop.permute.xlu0 %1352
      %1354 = vrot.lane.b32.xlu0 %v1315, 96
      %v1355 = vpop.permute.xlu0 %1354
      %1356 = vrot.lane.b32.xlu0 %v1317, 96
      %v1357 = vpop.permute.xlu0 %1356
      %1358 = vrot.lane.b32.xlu0 %v1319, 96
      %v1359 = vpop.permute.xlu0 %1358
      %1360 = vrot.lane.b32.xlu0 %v1321, 96
      %v1361 = vpop.permute.xlu0 %1360
      %1362 = vrot.lane.b32.xlu0 %v1323, 96
      %v1363 = vpop.permute.xlu0 %1362
      %1364 = vrot.lane.b32.xlu0 %v1325, 96
      %v1365 = vpop.permute.xlu0 %1364
      %1366 = vrot.lane.b32.xlu0 %v1327, 96
      %v1367 = vpop.permute.xlu0 %1366
      %1368 = vrot.lane.b32.xlu0 %v1329, 96
      %v1369 = vpop.permute.xlu0 %1368
      %1370 = vrot.lane.b32.xlu0 %v1331, 96
      %v1371 = vpop.permute.xlu0 %1370
      %1372 = vrot.lane.b32.xlu0 %v1333, 96
      %v1373 = vpop.permute.xlu0 %1372
      %1374 = vrot.lane.b32.xlu0 %v1335, 96
      %v1375 = vpop.permute.xlu0 %1374
      %1376 = vrot.lane.b32.xlu0 %v1337, 96
      %v1377 = vpop.permute.xlu0 %1376
      %1378 = vrot.lane.b32.xlu0 %v1339, 96
      %v1379 = vpop.permute.xlu0 %1378
      %1380 = vrot.lane.b32.xlu0 %v1341, 96
      %v1381 = vpop.permute.xlu0 %1380
      %1382 = vrot.lane.b32.xlu0 %v1343, 96
      %v1383 = vpop.permute.xlu0 %1382
      %v1404 = vadd.f32 %v1028, %v1345
      %v1405 = vadd.f32 %v1031, %v1347
      %v1406 = vadd.f32 %v1036, %v1349
      %v1407 = vadd.f32 %v1040, %v1351
      %v1408 = vadd.f32 %v1046, %v1353
      %v1409 = vadd.f32 %v1050, %v1355
      %v1410 = vadd.f32 %v1056, %v1357
      %v1411 = vadd.f32 %v1060, %v1359
      %v1412 = vadd.f32 %v1066, %v1361
      %v1413 = vadd.f32 %v1070, %v1363
      %v1414 = vadd.f32 %v1076, %v1365
      %v1415 = vadd.f32 %v1080, %v1367
      %v1416 = vadd.f32 %v1086, %v1369
      %v1417 = vadd.f32 %v1090, %v1371
      %v1418 = vadd.f32 %v1096, %v1373
      %v1419 = vadd.f32 %v1100, %v1375
      %v1420 = vadd.f32 %v1106, %v1377
      %v1421 = vadd.f32 %v1110, %v1379
      %v1422 = vadd.f32 %v1116, %v1381
      %v1423 = vadd.f32 %v1120, %v1383
      %vm1424 = vcmask 1045504
      %v1425 = vrot.slane %v1028, 2
      %v1426 = vrot.slane %v1031, 2
      %v1427 = vsel %vm1424, %v1425, %v1426
      %v1428 = vrot.slane %v1036, 2
      %v1429 = vsel %vm1424, %v1426, %v1428
      %v1430 = vrot.slane %v1040, 2
      %v1431 = vsel %vm1424, %v1428, %v1430
      %v1432 = vrot.slane %v1046, 2
      %v1433 = vsel %vm1424, %v1430, %v1432
      %v1434 = vrot.slane %v1050, 2
      %v1435 = vsel %vm1424, %v1432, %v1434
      %v1436 = vrot.slane %v1056, 2
      %v1437 = vsel %vm1424, %v1434, %v1436
      %v1438 = vrot.slane %v1060, 2
      %v1439 = vsel %vm1424, %v1436, %v1438
      %v1440 = vrot.slane %v1066, 2
      %v1441 = vsel %vm1424, %v1438, %v1440
      %v1442 = vrot.slane %v1070, 2
      %v1443 = vsel %vm1424, %v1440, %v1442
      %v1444 = vrot.slane %v1076, 2
      %v1445 = vsel %vm1424, %v1442, %v1444
      %v1446 = vrot.slane %v1080, 2
      %v1447 = vsel %vm1424, %v1444, %v1446
      %v1448 = vrot.slane %v1086, 2
      %v1449 = vsel %vm1424, %v1446, %v1448
      %v1450 = vrot.slane %v1090, 2
      %v1451 = vsel %vm1424, %v1448, %v1450
      %v1452 = vrot.slane %v1096, 2
      %v1453 = vsel %vm1424, %v1450, %v1452
      %v1454 = vrot.slane %v1100, 2
      %v1455 = vsel %vm1424, %v1452, %v1454
      %v1456 = vrot.slane %v1106, 2
      %v1457 = vsel %vm1424, %v1454, %v1456
      %v1458 = vrot.slane %v1110, 2
      %v1459 = vsel %vm1424, %v1456, %v1458
      %v1460 = vrot.slane %v1116, 2
      %v1461 = vsel %vm1424, %v1458, %v1460
      %v1462 = vrot.slane %v1120, 2
      %v1463 = vsel %vm1424, %v1460, %v1462
      %v1464 = vrot.slane %v1126, 2
      %v1465 = vsel %vm1424, %v1462, %v1464
      %1466 = vrot.lane.b32.xlu0 %v1427, 64
      %v1467 = vpop.permute.xlu0 %1466
      %1468 = vrot.lane.b32.xlu0 %v1429, 64
      %v1469 = vpop.permute.xlu0 %1468
      %1470 = vrot.lane.b32.xlu0 %v1431, 64
      %v1471 = vpop.permute.xlu0 %1470
      %1472 = vrot.lane.b32.xlu0 %v1433, 64
      %v1473 = vpop.permute.xlu0 %1472
      %1474 = vrot.lane.b32.xlu0 %v1435, 64
      %v1475 = vpop.permute.xlu0 %1474
      %1476 = vrot.lane.b32.xlu0 %v1437, 64
      %v1477 = vpop.permute.xlu0 %1476
      %1478 = vrot.lane.b32.xlu0 %v1439, 64
      %v1479 = vpop.permute.xlu0 %1478
      %1480 = vrot.lane.b32.xlu0 %v1441, 64
      %v1481 = vpop.permute.xlu0 %1480
      %1482 = vrot.lane.b32.xlu0 %v1443, 64
      %v1483 = vpop.permute.xlu0 %1482
      %1484 = vrot.lane.b32.xlu0 %v1445, 64
      %v1485 = vpop.permute.xlu0 %1484
      %1486 = vrot.lane.b32.xlu0 %v1447, 64
      %v1487 = vpop.permute.xlu0 %1486
      %1488 = vrot.lane.b32.xlu0 %v1449, 64
      %v1489 = vpop.permute.xlu0 %1488
      %1490 = vrot.lane.b32.xlu0 %v1451, 64
      %v1491 = vpop.permute.xlu0 %1490
      %1492 = vrot.lane.b32.xlu0 %v1453, 64
      %v1493 = vpop.permute.xlu0 %1492
      %1494 = vrot.lane.b32.xlu0 %v1455, 64
      %v1495 = vpop.permute.xlu0 %1494
      %1496 = vrot.lane.b32.xlu0 %v1457, 64
      %v1497 = vpop.permute.xlu0 %1496
      %1498 = vrot.lane.b32.xlu0 %v1459, 64
      %v1499 = vpop.permute.xlu0 %1498
      %1500 = vrot.lane.b32.xlu0 %v1461, 64
      %v1501 = vpop.permute.xlu0 %1500
      %1502 = vrot.lane.b32.xlu0 %v1463, 64
      %v1503 = vpop.permute.xlu0 %1502
      %1504 = vrot.lane.b32.xlu0 %v1465, 64
      %v1505 = vpop.permute.xlu0 %1504
      %v1526 = vadd.f32 %v1404, %v1467
      %v1527 = vadd.f32 %v1405, %v1469
      %v1528 = vadd.f32 %v1406, %v1471
      %v1529 = vadd.f32 %v1407, %v1473
      %v1530 = vadd.f32 %v1408, %v1475
      %v1531 = vadd.f32 %v1409, %v1477
      %v1532 = vadd.f32 %v1410, %v1479
      %v1533 = vadd.f32 %v1411, %v1481
      %v1534 = vadd.f32 %v1412, %v1483
      %v1535 = vadd.f32 %v1413, %v1485
      %v1536 = vadd.f32 %v1414, %v1487
      %v1537 = vadd.f32 %v1415, %v1489
      %v1538 = vadd.f32 %v1416, %v1491
      %v1539 = vadd.f32 %v1417, %v1493
      %v1540 = vadd.f32 %v1418, %v1495
      %v1541 = vadd.f32 %v1419, %v1497
      %v1542 = vadd.f32 %v1420, %v1499
      %v1543 = vadd.f32 %v1421, %v1501
      %v1544 = vadd.f32 %v1422, %v1503
      %v1545 = vadd.f32 %v1423, %v1505
      %1547 = vrot.lane.b32.xlu0 %v1036, 32
      %v1548 = vpop.permute.xlu0 %1547
      %1549 = vrot.lane.b32.xlu0 %v1040, 32
      %v1550 = vpop.permute.xlu0 %1549
      %1551 = vrot.lane.b32.xlu0 %v1046, 32
      %v1552 = vpop.permute.xlu0 %1551
      %1553 = vrot.lane.b32.xlu0 %v1050, 32
      %v1554 = vpop.permute.xlu0 %1553
      %1555 = vrot.lane.b32.xlu0 %v1056, 32
      %v1556 = vpop.permute.xlu0 %1555
      %1557 = vrot.lane.b32.xlu0 %v1060, 32
      %v1558 = vpop.permute.xlu0 %1557
      %1559 = vrot.lane.b32.xlu0 %v1066, 32
      %v1560 = vpop.permute.xlu0 %1559
      %1561 = vrot.lane.b32.xlu0 %v1070, 32
      %v1562 = vpop.permute.xlu0 %1561
      %1563 = vrot.lane.b32.xlu0 %v1076, 32
      %v1564 = vpop.permute.xlu0 %1563
      %1565 = vrot.lane.b32.xlu0 %v1080, 32
      %v1566 = vpop.permute.xlu0 %1565
      %1567 = vrot.lane.b32.xlu0 %v1086, 32
      %v1568 = vpop.permute.xlu0 %1567
      %1569 = vrot.lane.b32.xlu0 %v1090, 32
      %v1570 = vpop.permute.xlu0 %1569
      %1571 = vrot.lane.b32.xlu0 %v1096, 32
      %v1572 = vpop.permute.xlu0 %1571
      %1573 = vrot.lane.b32.xlu0 %v1100, 32
      %v1574 = vpop.permute.xlu0 %1573
      %1575 = vrot.lane.b32.xlu0 %v1106, 32
      %v1576 = vpop.permute.xlu0 %1575
      %1577 = vrot.lane.b32.xlu0 %v1110, 32
      %v1578 = vpop.permute.xlu0 %1577
      %1579 = vrot.lane.b32.xlu0 %v1116, 32
      %v1580 = vpop.permute.xlu0 %1579
      %1581 = vrot.lane.b32.xlu0 %v1120, 32
      %v1582 = vpop.permute.xlu0 %1581
      %1583 = vrot.lane.b32.xlu0 %v1126, 32
      %v1584 = vpop.permute.xlu0 %1583
      %1585 = vrot.lane.b32.xlu0 %v1130, 32
      %v1586 = vpop.permute.xlu0 %1585
      %v1607 = vadd.f32 %v1526, %v1548
      %v1608 = vadd.f32 %v1527, %v1550
      %v1609 = vadd.f32 %v1528, %v1552
      %v1610 = vadd.f32 %v1529, %v1554
      %v1611 = vadd.f32 %v1530, %v1556
      %v1612 = vadd.f32 %v1531, %v1558
      %v1613 = vadd.f32 %v1532, %v1560
      %v1614 = vadd.f32 %v1533, %v1562
      %v1615 = vadd.f32 %v1534, %v1564
      %v1616 = vadd.f32 %v1535, %v1566
      %v1617 = vadd.f32 %v1536, %v1568
      %v1618 = vadd.f32 %v1537, %v1570
      %v1619 = vadd.f32 %v1538, %v1572
      %v1620 = vadd.f32 %v1539, %v1574
      %v1621 = vadd.f32 %v1540, %v1576
      %v1622 = vadd.f32 %v1541, %v1578
      %v1623 = vadd.f32 %v1542, %v1580
      %v1624 = vadd.f32 %v1543, %v1582
      %v1625 = vadd.f32 %v1544, %v1584
      %v1626 = vadd.f32 %v1545, %v1586
      %v1648 = vrot.slane %v1038, 1
      %v1649 = vrot.slane %v1042, 1
      %v1650 = vsel %vm1302, %v1648, %v1649
      %v1651 = vrot.slane %v1048, 1
      %v1652 = vsel %vm1302, %v1649, %v1651
      %v1653 = vrot.slane %v1052, 1
      %v1654 = vsel %vm1302, %v1651, %v1653
      %v1655 = vrot.slane %v1058, 1
      %v1656 = vsel %vm1302, %v1653, %v1655
      %v1657 = vrot.slane %v1062, 1
      %v1658 = vsel %vm1302, %v1655, %v1657
      %v1659 = vrot.slane %v1068, 1
      %v1660 = vsel %vm1302, %v1657, %v1659
      %v1661 = vrot.slane %v1072, 1
      %v1662 = vsel %vm1302, %v1659, %v1661
      %v1663 = vrot.slane %v1078, 1
      %v1664 = vsel %vm1302, %v1661, %v1663
      %v1665 = vrot.slane %v1082, 1
      %v1666 = vsel %vm1302, %v1663, %v1665
      %v1667 = vrot.slane %v1088, 1
      %v1668 = vsel %vm1302, %v1665, %v1667
      %v1669 = vrot.slane %v1092, 1
      %v1670 = vsel %vm1302, %v1667, %v1669
      %v1671 = vrot.slane %v1098, 1
      %v1672 = vsel %vm1302, %v1669, %v1671
      %v1673 = vrot.slane %v1102, 1
      %v1674 = vsel %vm1302, %v1671, %v1673
      %v1675 = vrot.slane %v1108, 1
      %v1676 = vsel %vm1302, %v1673, %v1675
      %v1677 = vrot.slane %v1112, 1
      %v1678 = vsel %vm1302, %v1675, %v1677
      %v1679 = vrot.slane %v1118, 1
      %v1680 = vsel %vm1302, %v1677, %v1679
      %v1681 = vrot.slane %v1122, 1
      %v1682 = vsel %vm1302, %v1679, %v1681
      %v1683 = vrot.slane %v1128, 1
      %v1684 = vsel %vm1302, %v1681, %v1683
      %v1685 = vrot.slane %v1132, 1
      %v1686 = vsel %vm1302, %v1683, %v1685
      %v1687 = vrot.slane %v1137, 1
      %v1688 = vsel %vm1302, %v1685, %v1687
      %v1709 = vadd.f32 %v1607, %v1650
      %v1710 = vadd.f32 %v1608, %v1652
      %v1711 = vadd.f32 %v1609, %v1654
      %v1712 = vadd.f32 %v1610, %v1656
      %v1713 = vadd.f32 %v1611, %v1658
      %v1714 = vadd.f32 %v1612, %v1660
      %v1715 = vadd.f32 %v1613, %v1662
      %v1716 = vadd.f32 %v1614, %v1664
      %v1717 = vadd.f32 %v1615, %v1666
      %v1718 = vadd.f32 %v1616, %v1668
      %v1719 = vadd.f32 %v1617, %v1670
      %v1720 = vadd.f32 %v1618, %v1672
      %v1721 = vadd.f32 %v1619, %v1674
      %v1722 = vadd.f32 %v1620, %v1676
      %v1723 = vadd.f32 %v1621, %v1678
      %v1724 = vadd.f32 %v1622, %v1680
      %v1725 = vadd.f32 %v1623, %v1682
      %v1726 = vadd.f32 %v1624, %v1684
      %v1727 = vadd.f32 %v1625, %v1686
      %v1728 = vadd.f32 %v1626, %v1688
      %v1729 = vrot.slane %v1038, 2
      %v1730 = vrot.slane %v1042, 2
      %v1731 = vsel %vm1424, %v1729, %v1730
      %v1732 = vrot.slane %v1048, 2
      %v1733 = vsel %vm1424, %v1730, %v1732
      %v1734 = vrot.slane %v1052, 2
      %v1735 = vsel %vm1424, %v1732, %v1734
      %v1736 = vrot.slane %v1058, 2
      %v1737 = vsel %vm1424, %v1734, %v1736
      %v1738 = vrot.slane %v1062, 2
      %v1739 = vsel %vm1424, %v1736, %v1738
      %v1740 = vrot.slane %v1068, 2
      %v1741 = vsel %vm1424, %v1738, %v1740
      %v1742 = vrot.slane %v1072, 2
      %v1743 = vsel %vm1424, %v1740, %v1742
      %v1744 = vrot.slane %v1078, 2
      %v1745 = vsel %vm1424, %v1742, %v1744
      %v1746 = vrot.slane %v1082, 2
      %v1747 = vsel %vm1424, %v1744, %v1746
      %v1748 = vrot.slane %v1088, 2
      %v1749 = vsel %vm1424, %v1746, %v1748
      %v1750 = vrot.slane %v1092, 2
      %v1751 = vsel %vm1424, %v1748, %v1750
      %v1752 = vrot.slane %v1098, 2
      %v1753 = vsel %vm1424, %v1750, %v1752
      %v1754 = vrot.slane %v1102, 2
      %v1755 = vsel %vm1424, %v1752, %v1754
      %v1756 = vrot.slane %v1108, 2
      %v1757 = vsel %vm1424, %v1754, %v1756
      %v1758 = vrot.slane %v1112, 2
      %v1759 = vsel %vm1424, %v1756, %v1758
      %v1760 = vrot.slane %v1118, 2
      %v1761 = vsel %vm1424, %v1758, %v1760
      %v1762 = vrot.slane %v1122, 2
      %v1763 = vsel %vm1424, %v1760, %v1762
      %v1764 = vrot.slane %v1128, 2
      %v1765 = vsel %vm1424, %v1762, %v1764
      %v1766 = vrot.slane %v1132, 2
      %v1767 = vsel %vm1424, %v1764, %v1766
      %v1768 = vrot.slane %v1137, 2
      %v1769 = vsel %vm1424, %v1766, %v1768
      %1770 = vrot.lane.b32.xlu0 %v1731, 96
      %v1771 = vpop.permute.xlu0 %1770
      %1772 = vrot.lane.b32.xlu0 %v1733, 96
      %v1773 = vpop.permute.xlu0 %1772
      %1774 = vrot.lane.b32.xlu0 %v1735, 96
      %v1775 = vpop.permute.xlu0 %1774
      %1776 = vrot.lane.b32.xlu0 %v1737, 96
      %v1777 = vpop.permute.xlu0 %1776
      %1778 = vrot.lane.b32.xlu0 %v1739, 96
      %v1779 = vpop.permute.xlu0 %1778
      %1780 = vrot.lane.b32.xlu0 %v1741, 96
      %v1781 = vpop.permute.xlu0 %1780
      %1782 = vrot.lane.b32.xlu0 %v1743, 96
      %v1783 = vpop.permute.xlu0 %1782
      %1784 = vrot.lane.b32.xlu0 %v1745, 96
      %v1785 = vpop.permute.xlu0 %1784
      %1786 = vrot.lane.b32.xlu0 %v1747, 96
      %v1787 = vpop.permute.xlu0 %1786
      %1788 = vrot.lane.b32.xlu0 %v1749, 96
      %v1789 = vpop.permute.xlu0 %1788
      %1790 = vrot.lane.b32.xlu0 %v1751, 96
      %v1791 = vpop.permute.xlu0 %1790
      %1792 = vrot.lane.b32.xlu0 %v1753, 96
      %v1793 = vpop.permute.xlu0 %1792
      %1794 = vrot.lane.b32.xlu0 %v1755, 96
      %v1795 = vpop.permute.xlu0 %1794
      %1796 = vrot.lane.b32.xlu0 %v1757, 96
      %v1797 = vpop.permute.xlu0 %1796
      %1798 = vrot.lane.b32.xlu0 %v1759, 96
      %v1799 = vpop.permute.xlu0 %1798
      %1800 = vrot.lane.b32.xlu0 %v1761, 96
      %v1801 = vpop.permute.xlu0 %1800
      %1802 = vrot.lane.b32.xlu0 %v1763, 96
      %v1803 = vpop.permute.xlu0 %1802
      %1804 = vrot.lane.b32.xlu0 %v1765, 96
      %v1805 = vpop.permute.xlu0 %1804
      %1806 = vrot.lane.b32.xlu0 %v1767, 96
      %v1807 = vpop.permute.xlu0 %1806
      %1808 = vrot.lane.b32.xlu0 %v1769, 96
      %v1809 = vpop.permute.xlu0 %1808
      %v1830 = vadd.f32 %v1709, %v1771
      %v1831 = vadd.f32 %v1710, %v1773
      %v1832 = vadd.f32 %v1711, %v1775
      %v1833 = vadd.f32 %v1712, %v1777
      %v1834 = vadd.f32 %v1713, %v1779
      %v1835 = vadd.f32 %v1714, %v1781
      %v1836 = vadd.f32 %v1715, %v1783
      %v1837 = vadd.f32 %v1716, %v1785
      %v1838 = vadd.f32 %v1717, %v1787
      %v1839 = vadd.f32 %v1718, %v1789
      %v1840 = vadd.f32 %v1719, %v1791
      %v1841 = vadd.f32 %v1720, %v1793
      %v1842 = vadd.f32 %v1721, %v1795
      %v1843 = vadd.f32 %v1722, %v1797
      %v1844 = vadd.f32 %v1723, %v1799
      %v1845 = vadd.f32 %v1724, %v1801
      %v1846 = vadd.f32 %v1725, %v1803
      %v1847 = vadd.f32 %v1726, %v1805
      %v1848 = vadd.f32 %v1727, %v1807
      %v1849 = vadd.f32 %v1728, %v1809
      %1851 = vrot.lane.b32.xlu0 %v1048, 64
      %v1852 = vpop.permute.xlu0 %1851
      %1853 = vrot.lane.b32.xlu0 %v1052, 64
      %v1854 = vpop.permute.xlu0 %1853
      %1855 = vrot.lane.b32.xlu0 %v1058, 64
      %v1856 = vpop.permute.xlu0 %1855
      %1857 = vrot.lane.b32.xlu0 %v1062, 64
      %v1858 = vpop.permute.xlu0 %1857
      %1859 = vrot.lane.b32.xlu0 %v1068, 64
      %v1860 = vpop.permute.xlu0 %1859
      %1861 = vrot.lane.b32.xlu0 %v1072, 64
      %v1862 = vpop.permute.xlu0 %1861
      %1863 = vrot.lane.b32.xlu0 %v1078, 64
      %v1864 = vpop.permute.xlu0 %1863
      %1865 = vrot.lane.b32.xlu0 %v1082, 64
      %v1866 = vpop.permute.xlu0 %1865
      %1867 = vrot.lane.b32.xlu0 %v1088, 64
      %v1868 = vpop.permute.xlu0 %1867
      %1869 = vrot.lane.b32.xlu0 %v1092, 64
      %v1870 = vpop.permute.xlu0 %1869
      %1871 = vrot.lane.b32.xlu0 %v1098, 64
      %v1872 = vpop.permute.xlu0 %1871
      %1873 = vrot.lane.b32.xlu0 %v1102, 64
      %v1874 = vpop.permute.xlu0 %1873
      %1875 = vrot.lane.b32.xlu0 %v1108, 64
      %v1876 = vpop.permute.xlu0 %1875
      %1877 = vrot.lane.b32.xlu0 %v1112, 64
      %v1878 = vpop.permute.xlu0 %1877
      %1879 = vrot.lane.b32.xlu0 %v1118, 64
      %v1880 = vpop.permute.xlu0 %1879
      %1881 = vrot.lane.b32.xlu0 %v1122, 64
      %v1882 = vpop.permute.xlu0 %1881
      %1883 = vrot.lane.b32.xlu0 %v1128, 64
      %v1884 = vpop.permute.xlu0 %1883
      %1885 = vrot.lane.b32.xlu0 %v1132, 64
      %v1886 = vpop.permute.xlu0 %1885
      %1887 = vrot.lane.b32.xlu0 %v1137, 64
      %v1888 = vpop.permute.xlu0 %1887
      %1889 = vrot.lane.b32.xlu0 %v1140, 64
      %v1890 = vpop.permute.xlu0 %1889
      %v1911 = vadd.f32 %v1830, %v1852
      %v1912 = vadd.f32 %v1831, %v1854
      %v1913 = vadd.f32 %v1832, %v1856
      %v1914 = vadd.f32 %v1833, %v1858
      %v1915 = vadd.f32 %v1834, %v1860
      %v1916 = vadd.f32 %v1835, %v1862
      %v1917 = vadd.f32 %v1836, %v1864
      %v1918 = vadd.f32 %v1837, %v1866
      %v1919 = vadd.f32 %v1838, %v1868
      %v1920 = vadd.f32 %v1839, %v1870
      %v1921 = vadd.f32 %v1840, %v1872
      %v1922 = vadd.f32 %v1841, %v1874
      %v1923 = vadd.f32 %v1842, %v1876
      %v1924 = vadd.f32 %v1843, %v1878
      %v1925 = vadd.f32 %v1844, %v1880
      %v1926 = vadd.f32 %v1845, %v1882
      %v1927 = vadd.f32 %v1846, %v1884
      %v1928 = vadd.f32 %v1847, %v1886
      %v1929 = vadd.f32 %v1848, %v1888
      %v1930 = vadd.f32 %v1849, %v1890
      %v1932 = vrot.slane %v1140, 1
      %v1933 = vsel %vm1302, %v1687, %v1932
      %v1934 = vrot.slane %v1145, 1
      %v1935 = vsel %vm1302, %v1932, %v1934
      %1936 = vrot.lane.b32.xlu0 %v1654, 32
      %v1937 = vpop.permute.xlu0 %1936
      %1938 = vrot.lane.b32.xlu0 %v1656, 32
      %v1939 = vpop.permute.xlu0 %1938
      %1940 = vrot.lane.b32.xlu0 %v1658, 32
      %v1941 = vpop.permute.xlu0 %1940
      %1942 = vrot.lane.b32.xlu0 %v1660, 32
      %v1943 = vpop.permute.xlu0 %1942
      %1944 = vrot.lane.b32.xlu0 %v1662, 32
      %v1945 = vpop.permute.xlu0 %1944
      %1946 = vrot.lane.b32.xlu0 %v1664, 32
      %v1947 = vpop.permute.xlu0 %1946
      %1948 = vrot.lane.b32.xlu0 %v1666, 32
      %v1949 = vpop.permute.xlu0 %1948
      %1950 = vrot.lane.b32.xlu0 %v1668, 32
      %v1951 = vpop.permute.xlu0 %1950
      %1952 = vrot.lane.b32.xlu0 %v1670, 32
      %v1953 = vpop.permute.xlu0 %1952
      %1954 = vrot.lane.b32.xlu0 %v1672, 32
      %v1955 = vpop.permute.xlu0 %1954
      %1956 = vrot.lane.b32.xlu0 %v1674, 32
      %v1957 = vpop.permute.xlu0 %1956
      %1958 = vrot.lane.b32.xlu0 %v1676, 32
      %v1959 = vpop.permute.xlu0 %1958
      %1960 = vrot.lane.b32.xlu0 %v1678, 32
      %v1961 = vpop.permute.xlu0 %1960
      %1962 = vrot.lane.b32.xlu0 %v1680, 32
      %v1963 = vpop.permute.xlu0 %1962
      %1964 = vrot.lane.b32.xlu0 %v1682, 32
      %v1965 = vpop.permute.xlu0 %1964
      %1966 = vrot.lane.b32.xlu0 %v1684, 32
      %v1967 = vpop.permute.xlu0 %1966
      %1968 = vrot.lane.b32.xlu0 %v1686, 32
      %v1969 = vpop.permute.xlu0 %1968
      %1970 = vrot.lane.b32.xlu0 %v1688, 32
      %v1971 = vpop.permute.xlu0 %1970
      %1972 = vrot.lane.b32.xlu0 %v1933, 32
      %v1973 = vpop.permute.xlu0 %1972
      %1974 = vrot.lane.b32.xlu0 %v1935, 32
      %v1975 = vpop.permute.xlu0 %1974
      %v1996 = vadd.f32 %v1911, %v1937
      %v1997 = vadd.f32 %v1912, %v1939
      %v1998 = vadd.f32 %v1913, %v1941
      %v1999 = vadd.f32 %v1914, %v1943
      %v2000 = vadd.f32 %v1915, %v1945
      %v2001 = vadd.f32 %v1916, %v1947
      %v2002 = vadd.f32 %v1917, %v1949
      %v2003 = vadd.f32 %v1918, %v1951
      %v2004 = vadd.f32 %v1919, %v1953
      %v2005 = vadd.f32 %v1920, %v1955
      %v2006 = vadd.f32 %v1921, %v1957
      %v2007 = vadd.f32 %v1922, %v1959
      %v2008 = vadd.f32 %v1923, %v1961
      %v2009 = vadd.f32 %v1924, %v1963
      %v2010 = vadd.f32 %v1925, %v1965
      %v2011 = vadd.f32 %v1926, %v1967
      %v2012 = vadd.f32 %v1927, %v1969
      %v2013 = vadd.f32 %v1928, %v1971
      %v2014 = vadd.f32 %v1929, %v1973
      %v2015 = vadd.f32 %v1930, %v1975
      %v2037 = vrot.slane %v1196, 2
      %v2038 = vrot.slane %v1199, 2
      %v2039 = vsel %vm1424, %v2037, %v2038
      %v2040 = vrot.slane %v1204, 2
      %v2041 = vsel %vm1424, %v2038, %v2040
      %v2042 = vrot.slane %v1207, 2
      %v2043 = vsel %vm1424, %v2040, %v2042
      %v2044 = vrot.slane %v1212, 2
      %v2045 = vsel %vm1424, %v2042, %v2044
      %v2046 = vrot.slane %v1215, 2
      %v2047 = vsel %vm1424, %v2044, %v2046
      %v2048 = vrot.slane %v1220, 2
      %v2049 = vsel %vm1424, %v2046, %v2048
      %v2050 = vrot.slane %v1223, 2
      %v2051 = vsel %vm1424, %v2048, %v2050
      %v2052 = vrot.slane %v1228, 2
      %v2053 = vsel %vm1424, %v2050, %v2052
      %v2054 = vrot.slane %v1231, 2
      %v2055 = vsel %vm1424, %v2052, %v2054
      %v2056 = vrot.slane %v1236, 2
      %v2057 = vsel %vm1424, %v2054, %v2056
      %v2058 = vrot.slane %v1239, 2
      %v2059 = vsel %vm1424, %v2056, %v2058
      %v2060 = vrot.slane %v1244, 2
      %v2061 = vsel %vm1424, %v2058, %v2060
      %v2062 = vrot.slane %v1247, 2
      %v2063 = vsel %vm1424, %v2060, %v2062
      %v2064 = vrot.slane %v1252, 2
      %v2065 = vsel %vm1424, %v2062, %v2064
      %v2066 = vrot.slane %v1255, 2
      %v2067 = vsel %vm1424, %v2064, %v2066
      %v2068 = vrot.slane %v1260, 2
      %v2069 = vsel %vm1424, %v2066, %v2068
      %v2070 = vrot.slane %v1263, 2
      %v2071 = vsel %vm1424, %v2068, %v2070
      %v2072 = vrot.slane %v1268, 2
      %v2073 = vsel %vm1424, %v2070, %v2072
      %v2074 = vrot.slane %v1271, 2
      %v2075 = vsel %vm1424, %v2072, %v2074
      %v2076 = vrot.slane %v1276, 2
      %v2077 = vsel %vm1424, %v2074, %v2076
      %v2098 = vadd.f32 %v1996, %v2039
      %v2099 = vadd.f32 %v1997, %v2041
      %v2100 = vadd.f32 %v1998, %v2043
      %v2101 = vadd.f32 %v1999, %v2045
      %v2102 = vadd.f32 %v2000, %v2047
      %v2103 = vadd.f32 %v2001, %v2049
      %v2104 = vadd.f32 %v2002, %v2051
      %v2105 = vadd.f32 %v2003, %v2053
      %v2106 = vadd.f32 %v2004, %v2055
      %v2107 = vadd.f32 %v2005, %v2057
      %v2108 = vadd.f32 %v2006, %v2059
      %v2109 = vadd.f32 %v2007, %v2061
      %v2110 = vadd.f32 %v2008, %v2063
      %v2111 = vadd.f32 %v2009, %v2065
      %v2112 = vadd.f32 %v2010, %v2067
      %v2113 = vadd.f32 %v2011, %v2069
      %v2114 = vadd.f32 %v2012, %v2071
      %v2115 = vadd.f32 %v2013, %v2073
      %v2116 = vadd.f32 %v2014, %v2075
      %v2117 = vadd.f32 %v2015, %v2077
      %v2118 = vld [vmem:[%s7] sm:$0x1]
      %v2120 = vlaneseq
      %v2121 = vshrl.u32 %v2120, 7
      %v2122 = vsub.s32 0, %v2121
      %v2123 = vrot.slane %v2118, %v2122
      %v2125 = vadd.f32 %v2098, %v2123
      %v2126 = vadd.f32 %v2099, %v2123
      %v2127 = vadd.f32 %v2100, %v2123
      %v2128 = vadd.f32 %v2101, %v2123
      %v2129 = vadd.f32 %v2102, %v2123
      %v2130 = vadd.f32 %v2103, %v2123
      %v2131 = vadd.f32 %v2104, %v2123
      %v2132 = vadd.f32 %v2105, %v2123
      %v2133 = vadd.f32 %v2106, %v2123
      %v2134 = vadd.f32 %v2107, %v2123
      %v2135 = vadd.f32 %v2108, %v2123
      %v2136 = vadd.f32 %v2109, %v2123
      %v2137 = vadd.f32 %v2110, %v2123
      %v2138 = vadd.f32 %v2111, %v2123
      %v2139 = vadd.f32 %v2112, %v2123
      %v2140 = vadd.f32 %v2113, %v2123
      %v2141 = vadd.f32 %v2114, %v2123
      %v2142 = vadd.f32 %v2115, %v2123
      %v2143 = vadd.f32 %v2116, %v2123
      %v2144 = vadd.f32 %v2117, %v2123
      %v2145 = vmul.f32 %v2125, %v621
      %v2146 = vmul.f32 %v2126, %v626
      %v2147 = vmul.f32 %v2127, %v631
      %v2148 = vmul.f32 %v2128, %v636
      %v2149 = vmul.f32 %v2129, %v641
      %v2150 = vmul.f32 %v2130, %v646
      %v2151 = vmul.f32 %v2131, %v651
      %v2152 = vmul.f32 %v2132, %v656
      %v2153 = vmul.f32 %v2133, %v661
      %v2154 = vmul.f32 %v2134, %v666
      %v2155 = vmul.f32 %v2135, %v671
      %v2156 = vmul.f32 %v2136, %v676
      %v2157 = vmul.f32 %v2137, %v681
      %v2158 = vmul.f32 %v2138, %v686
      %v2159 = vmul.f32 %v2139, %v691
      %v2160 = vmul.f32 %v2140, %v696
      %v2161 = vmul.f32 %v2141, %v701
      %v2162 = vmul.f32 %v2142, %v706
      %v2163 = vmul.f32 %v2143, %v711
      %v2164 = vmul.f32 %v2144, %v716
      %v2165 = vsel %vm434, %v2145, 0.0
      %v2166 = vsel %vm434, %v2146, 0.0
      %v2167 = vsel %vm434, %v2147, 0.0
      %v2168 = vsel %vm434, %v2148, 0.0
      %v2169 = vsel %vm434, %v2149, 0.0
      %v2170 = vsel %vm434, %v2150, 0.0
      %v2171 = vsel %vm434, %v2151, 0.0
      %v2172 = vsel %vm434, %v2152, 0.0
      %v2173 = vsel %vm434, %v2153, 0.0
      %v2174 = vsel %vm434, %v2154, 0.0
      %v2175 = vsel %vm434, %v2155, 0.0
      %v2176 = vsel %vm434, %v2156, 0.0
      %v2177 = vsel %vm434, %v2157, 0.0
      %v2178 = vsel %vm434, %v2158, 0.0
      %v2179 = vsel %vm434, %v2159, 0.0
      %v2180 = vsel %vm434, %v2160, 0.0
      %v2181 = vsel %vm434, %v2161, 0.0
      %v2182 = vsel %vm434, %v2162, 0.0
      %v2183 = vsel %vm434, %v2163, 0.0
      %v2184 = vsel %vm434, %v2164, 0.0
      %2185 = vst [vmem:[%s305] sm:$0xff] %v2165
      %2186 = vst [vmem:[%s305 + $0x8] sm:$0xff] %v2166
      %2187 = vst [vmem:[%s305 + $0x10] sm:$0xff] %v2167
      %2188 = vst [vmem:[%s305 + $0x18] sm:$0xff] %v2168
      %2189 = vst [vmem:[%s305 + $0x20] sm:$0xff] %v2169
      %2190 = vst [vmem:[%s305 + $0x28] sm:$0xff] %v2170
      %2191 = vst [vmem:[%s305 + $0x30] sm:$0xff] %v2171
      %2192 = vst [vmem:[%s305 + $0x38] sm:$0xff] %v2172
      %2193 = vst [vmem:[%s305 + $0x40] sm:$0xff] %v2173
      %2194 = vst [vmem:[%s305 + $0x48] sm:$0xff] %v2174
      %2195 = vst [vmem:[%s305 + $0x50] sm:$0xff] %v2175
      %2196 = vst [vmem:[%s305 + $0x58] sm:$0xff] %v2176
      %2197 = vst [vmem:[%s305 + $0x60] sm:$0xff] %v2177
      %2198 = vst [vmem:[%s305 + $0x68] sm:$0xff] %v2178
      %2199 = vst [vmem:[%s305 + $0x70] sm:$0xff] %v2179
      %2200 = vst [vmem:[%s305 + $0x78] sm:$0xff] %v2180
      %2201 = vst [vmem:[%s305 + $0x80] sm:$0xff] %v2181
      %2202 = vst [vmem:[%s305 + $0x88] sm:$0xff] %v2182
      %2203 = vst [vmem:[%s305 + $0x90] sm:$0xff] %v2183
      %2204 = vst [vmem:[%s305 + $0x98] sm:$0xff] %v2184
      %p2205 = scmp.lt.s32.totalorder %s19, 1
      %s2206 = scalar_select %p2205, %s19, 1
      %s2207 = smul.addr %s2206, 20
      %s2208 = smul.addr %s2207, 8
      %s2209 = scalar_lea.vmem %s8, %s2208
      // Predicated region
      $region53: #{dense_block_forward.3} parent=51 // pred_check
        %p2210 = pneg %p210
      $region54: #{dense_block_forward.3} parent=51 // pred_check_branch
        %2212 = sbr.rel (%p2210) target = $region56
      $region55: #{dense_block_forward.3} parent=51 // pred_region
        _
      $region56: #{dense_block_forward.3} parent=51 // pred_fallthru
        _
    $region52: #{dense_block_forward.3} parent=5 // pred_fallthru
      _
    %p2213 = scmp.le.s32.totalorder 2, %s14
    // Predicated region
    $region57: #{dense_block_forward.3} parent=5 // pred_check
      %p2214 = pneg %p2213
    $region58: #{dense_block_forward.3} parent=5 // pred_check_branch
      %2216 = sbr.rel (%p2214) target = $region60
    $region59: #{dense_block_forward.3} parent=5 // pred_region
      %s2217 = ssub.s32 %s14, 2
      // Predicated region
      $region61: #{dense_block_forward.3} parent=59 // pred_check
        %p2218 = pneg %p216
      $region62: #{dense_block_forward.3} parent=59 // pred_check_branch
        %2220 = sbr.rel (%p2218) target = $region64
      $region63: #{dense_block_forward.3} parent=59 // pred_region
        %p2221 = scmp.lt.s32.totalorder %s20, 1
        %s2222 = scalar_select %p2221, %s20, 1
        %s2223 = smul.addr %s2222, 20
        %s2224 = smul.addr %s2223, 8
        %s2225 = scalar_lea.vmem %s8, %s2224
      $region64: #{dense_block_forward.3} parent=59 // pred_fallthru
        _
    $region60: #{dense_block_forward.3} parent=5 // pred_fallthru
      _
  $region6: #{dense_block_forward.3} parent=0 // loop_footer
    %s18 = sadd.s32 1, %s14
  $region7: #{dense_block_forward.3} parent=0 // loop_footer_branch
    %13 = sbr.rel target = $region3
  $region8: #{dense_block_forward.3} parent=0 // loop_exit
    _

// kernel: dense_block_forward.4
$region0: #{dense_block_forward.4}
  #allocation0 [shape = 'u32[]', space=smem, size = 0x4, offset = 0x4, fixed_abs, tag = 'smem constant byte address 0x4 - core index']
  #allocation1 [shape = 'u32[144,128]{1,0:T(1,128)}', space=vmem, size = 0x12000, scoped, tag = 'internal scratch']
  %s0 = inlined_call_operand.vmem [shape: f32[2,160,64], index: 0, kind: input, shape index: {}]
  %s1 = inlined_call_operand.vmem [shape: f32[160,1], index: 1, kind: input, shape index: {}]
  %s2 = inlined_call_operand.vmem [shape: f32[1,64], index: 2, kind: input, shape index: {}]
  %s3 = inlined_call_operand.vmem [shape: f32[1,64], index: 3, kind: input, shape index: {}]
  %s4 = inlined_call_operand.vmem [shape: bf16[64,128], index: 4, kind: input, shape index: {}]
  %s5 = inlined_call_operand.vmem [shape: f32[1,128], index: 5, kind: input, shape index: {}]
  %s6 = inlined_call_operand.vmem [shape: bf16[128,288], index: 6, kind: input, shape index: {}]
  %s7 = inlined_call_operand.vmem [shape: f32[1,32], index: 7, kind: input, shape index: {}]
  %s8 = inlined_call_operand.vmem [shape: f32[2,160,128], index: 8, kind: output, shape index: {}]
  %s9 = sld [smem:[#allocation0]]
  $region65: #{dense_block_forward.4} parent=0
    _
  %s11 = ssub.s32 1, %s9
  %s12 = scalar_select 0, %s11, %s9
  loop: start=0, step=1, limit=4
  $region2: #{dense_block_forward.4} parent=0 // loop_pre_header
    _
  $region3: #{dense_block_forward.4} parent=0 // loop_header
    %s14 = sphi 0, %s18
    %p15 = scmp.ge.s32.totalorder %s14, 4
    %s24 = sphi 0, %s26
    %s27 = sphi 0, %s24
    %s28 = sphi 0, %s27
    %s44 = sphi 0, %s28
    %s48 = sphi 0, %s48
    %s50 = sphi 0, %s48
    %s51 = sphi 0, %s50
    %s65 = sphi 0, %s51
    %s69 = sphi 0, %s69
    %s71 = sphi 0, %s69
    %s72 = sphi 0, %s71
    %s86 = sphi 0, %s72
    %s90 = sphi 0, %s90
    %s92 = sphi 0, %s90
    %s93 = sphi 0, %s92
    %s107 = sphi 0, %s93
    %s111 = sphi 0, %s111
    %s113 = sphi 0, %s111
    %s114 = sphi 0, %s113
    %s128 = sphi 0, %s114
    %s132 = sphi 0, %s132
    %s134 = sphi 0, %s132
    %s135 = sphi 0, %s134
    %s149 = sphi 0, %s135
    %s153 = sphi 0, %s153
    %s155 = sphi 0, %s153
    %s156 = sphi 0, %s155
    %s170 = sphi 0, %s156
    %s174 = sphi 0, %s174
    %s176 = sphi 0, %s174
    %s177 = sphi 0, %s176
    %s191 = sphi 0, %s177
    %s197 = sphi 0, %s199
    %s200 = sphi 0, %s197
    %s201 = sphi 0, %s200
    %s217 = sphi 0, %s201
  $region4: #{dense_block_forward.4} parent=0 // loop_header_branch
    %17 = sbr.rel (%p15) target = $region8
  $region5: #{dense_block_forward.4} parent=0 // loop_body
    %s19 = ssub.s32 %s14, 1
    %s20 = ssub.s32 %s14, 2
    %s21 = sadd.s32 %s14, 1
    %s22 = ssub.s32 %s14, %s21
    %p23 = scmp.eq.s32.totalorder %s22, 0
    %s25 = sadd.s32 %s24, 1
    %s26 = scalar_select %p23, %s24, %s25
    %p29 = pneg %p23
    %p30 = scmp.eq.s32.totalorder %s14, 1
    %p31 = por %p29, %p30
    %p32 = scmp.ne.s32.totalorder %s24, %s27
    %p33 = scmp.eq.s32.totalorder %s14, 0
    %p34 = por %p32, %p33
    %p35 = scmp.ne.s32.totalorder %s24, %s27
    %p36 = scmp.eq.s32.totalorder %s19, 1
    %p37 = por %p35, %p36
    %p38 = scmp.ne.s32.totalorder %s27, %s28
    %p39 = scmp.eq.s32.totalorder %s19, 0
    %p40 = por %p38, %p39
    %p41 = scmp.ne.s32.totalorder %s27, %s28
    %p42 = scmp.eq.s32.totalorder %s20, 1
    %p43 = por %p41, %p42
    %p45 = scmp.ne.s32.totalorder %s28, %s44
    %p46 = scmp.eq.s32.totalorder %s20, 0
    %p47 = por %p45, %p46
    %s49 = sadd.s32 %s48, 1
    %p52 = scmp.eq.s32.totalorder %s14, 1
    %p53 = scmp.ne.s32.totalorder %s48, %s50
    %p54 = scmp.eq.s32.totalorder %s14, 0
    %p55 = por %p53, %p54
    %p56 = scmp.ne.s32.totalorder %s48, %s50
    %p57 = scmp.eq.s32.totalorder %s19, 1
    %p58 = por %p56, %p57
    %p59 = scmp.ne.s32.totalorder %s50, %s51
    %p60 = scmp.eq.s32.totalorder %s19, 0
    %p61 = por %p59, %p60
    %p62 = scmp.ne.s32.totalorder %s50, %s51
    %p63 = scmp.eq.s32.totalorder %s20, 1
    %p64 = por %p62, %p63
    %p66 = scmp.ne.s32.totalorder %s51, %s65
    %p67 = scmp.eq.s32.totalorder %s20, 0
    %p68 = por %p66, %p67
    %s70 = sadd.s32 %s69, 1
    %p73 = scmp.eq.s32.totalorder %s14, 1
    %p74 = scmp.ne.s32.totalorder %s69, %s71
    %p75 = scmp.eq.s32.totalorder %s14, 0
    %p76 = por %p74, %p75
    %p77 = scmp.ne.s32.totalorder %s69, %s71
    %p78 = scmp.eq.s32.totalorder %s19, 1
    %p79 = por %p77, %p78
    %p80 = scmp.ne.s32.totalorder %s71, %s72
    %p81 = scmp.eq.s32.totalorder %s19, 0
    %p82 = por %p80, %p81
    %p83 = scmp.ne.s32.totalorder %s71, %s72
    %p84 = scmp.eq.s32.totalorder %s20, 1
    %p85 = por %p83, %p84
    %p87 = scmp.ne.s32.totalorder %s72, %s86
    %p88 = scmp.eq.s32.totalorder %s20, 0
    %p89 = por %p87, %p88
    %s91 = sadd.s32 %s90, 1
    %p94 = scmp.eq.s32.totalorder %s14, 1
    %p95 = scmp.ne.s32.totalorder %s90, %s92
    %p96 = scmp.eq.s32.totalorder %s14, 0
    %p97 = por %p95, %p96
    %p98 = scmp.ne.s32.totalorder %s90, %s92
    %p99 = scmp.eq.s32.totalorder %s19, 1
    %p100 = por %p98, %p99
    %p101 = scmp.ne.s32.totalorder %s92, %s93
    %p102 = scmp.eq.s32.totalorder %s19, 0
    %p103 = por %p101, %p102
    %p104 = scmp.ne.s32.totalorder %s92, %s93
    %p105 = scmp.eq.s32.totalorder %s20, 1
    %p106 = por %p104, %p105
    %p108 = scmp.ne.s32.totalorder %s93, %s107
    %p109 = scmp.eq.s32.totalorder %s20, 0
    %p110 = por %p108, %p109
    %s112 = sadd.s32 %s111, 1
    %p115 = scmp.eq.s32.totalorder %s14, 1
    %p116 = scmp.ne.s32.totalorder %s111, %s113
    %p117 = scmp.eq.s32.totalorder %s14, 0
    %p118 = por %p116, %p117
    %p119 = scmp.ne.s32.totalorder %s111, %s113
    %p120 = scmp.eq.s32.totalorder %s19, 1
    %p121 = por %p119, %p120
    %p122 = scmp.ne.s32.totalorder %s113, %s114
    %p123 = scmp.eq.s32.totalorder %s19, 0
    %p124 = por %p122, %p123
    %p125 = scmp.ne.s32.totalorder %s113, %s114
    %p126 = scmp.eq.s32.totalorder %s20, 1
    %p127 = por %p125, %p126
    %p129 = scmp.ne.s32.totalorder %s114, %s128
    %p130 = scmp.eq.s32.totalorder %s20, 0
    %p131 = por %p129, %p130
    %s133 = sadd.s32 %s132, 1
    %p136 = scmp.eq.s32.totalorder %s14, 1
    %p137 = scmp.ne.s32.totalorder %s132, %s134
    %p138 = scmp.eq.s32.totalorder %s14, 0
    %p139 = por %p137, %p138
    %p140 = scmp.ne.s32.totalorder %s132, %s134
    %p141 = scmp.eq.s32.totalorder %s19, 1
    %p142 = por %p140, %p141
    %p143 = scmp.ne.s32.totalorder %s134, %s135
    %p144 = scmp.eq.s32.totalorder %s19, 0
    %p145 = por %p143, %p144
    %p146 = scmp.ne.s32.totalorder %s134, %s135
    %p147 = scmp.eq.s32.totalorder %s20, 1
    %p148 = por %p146, %p147
    %p150 = scmp.ne.s32.totalorder %s135, %s149
    %p151 = scmp.eq.s32.totalorder %s20, 0
    %p152 = por %p150, %p151
    %s154 = sadd.s32 %s153, 1
    %p157 = scmp.eq.s32.totalorder %s14, 1
    %p158 = scmp.ne.s32.totalorder %s153, %s155
    %p159 = scmp.eq.s32.totalorder %s14, 0
    %p160 = por %p158, %p159
    %p161 = scmp.ne.s32.totalorder %s153, %s155
    %p162 = scmp.eq.s32.totalorder %s19, 1
    %p163 = por %p161, %p162
    %p164 = scmp.ne.s32.totalorder %s155, %s156
    %p165 = scmp.eq.s32.totalorder %s19, 0
    %p166 = por %p164, %p165
    %p167 = scmp.ne.s32.totalorder %s155, %s156
    %p168 = scmp.eq.s32.totalorder %s20, 1
    %p169 = por %p167, %p168
    %p171 = scmp.ne.s32.totalorder %s156, %s170
    %p172 = scmp.eq.s32.totalorder %s20, 0
    %p173 = por %p171, %p172
    %s175 = sadd.s32 %s174, 1
    %p178 = scmp.eq.s32.totalorder %s14, 1
    %p179 = scmp.ne.s32.totalorder %s174, %s176
    %p180 = scmp.eq.s32.totalorder %s14, 0
    %p181 = por %p179, %p180
    %p182 = scmp.ne.s32.totalorder %s174, %s176
    %p183 = scmp.eq.s32.totalorder %s19, 1
    %p184 = por %p182, %p183
    %p185 = scmp.ne.s32.totalorder %s176, %s177
    %p186 = scmp.eq.s32.totalorder %s19, 0
    %p187 = por %p185, %p186
    %p188 = scmp.ne.s32.totalorder %s176, %s177
    %p189 = scmp.eq.s32.totalorder %s20, 1
    %p190 = por %p188, %p189
    %p192 = scmp.ne.s32.totalorder %s177, %s191
    %p193 = scmp.eq.s32.totalorder %s20, 0
    %p194 = por %p192, %p193
    %s195 = ssub.s32 %s14, %s21
    %p196 = scmp.eq.s32.totalorder %s195, 0
    %s198 = sadd.s32 %s197, 1
    %s199 = scalar_select %p196, %s197, %s198
    %p202 = pneg %p196
    %p203 = scmp.eq.s32.totalorder %s14, 1
    %p204 = por %p202, %p203
    %p205 = scmp.ne.s32.totalorder %s197, %s200
    %p206 = scmp.eq.s32.totalorder %s14, 0
    %p207 = por %p205, %p206
    %p208 = scmp.ne.s32.totalorder %s197, %s200
    %p209 = scmp.eq.s32.totalorder %s19, 1
    %p210 = por %p208, %p209
    %p211 = scmp.ne.s32.totalorder %s200, %s201
    %p212 = scmp.eq.s32.totalorder %s19, 0
    %p213 = por %p211, %p212
    %p214 = scmp.ne.s32.totalorder %s200, %s201
    %p215 = scmp.eq.s32.totalorder %s20, 1
    %p216 = por %p214, %p215
    %p218 = scmp.ne.s32.totalorder %s201, %s217
    %p219 = scmp.eq.s32.totalorder %s20, 0
    %p220 = por %p218, %p219
    %p221 = scmp.le.s32.totalorder 1, %s14
    %p222 = scmp.lt.s32.totalorder %s14, 3
    %p223 = pnand %p221, %p222
    %p224 = pneg %p223
    // Predicated region
    $region9: #{dense_block_forward.4} parent=5 // pred_check
      _
    $region10: #{dense_block_forward.4} parent=5 // pred_check_branch
      %226 = sbr.rel (%p223) target = $region12
    $region11: #{dense_block_forward.4} parent=5 // pred_region
      %s227 = ssub.s32 %s14, 1
      // Predicated region
      $region13: #{dense_block_forward.4} parent=11 // pred_check
        %p228 = pneg %p61
      $region14: #{dense_block_forward.4} parent=11 // pred_check_branch
        %230 = sbr.rel (%p228) target = $region16
      $region15: #{dense_block_forward.4} parent=11 // pred_region
        _
      $region16: #{dense_block_forward.4} parent=11 // pred_fallthru
        _
      // Predicated region
      $region17: #{dense_block_forward.4} parent=11 // pred_check
        %p231 = pneg %p82
      $region18: #{dense_block_forward.4} parent=11 // pred_check_branch
        %233 = sbr.rel (%p231) target = $region20
      $region19: #{dense_block_forward.4} parent=11 // pred_region
        _
      $region20: #{dense_block_forward.4} parent=11 // pred_fallthru
        _
      // Predicated region
      $region21: #{dense_block_forward.4} parent=11 // pred_check
        %p234 = pneg %p103
      $region22: #{dense_block_forward.4} parent=11 // pred_check_branch
        %236 = sbr.rel (%p234) target = $region24
      $region23: #{dense_block_forward.4} parent=11 // pred_region
        _
      $region24: #{dense_block_forward.4} parent=11 // pred_fallthru
        _
      // Predicated region
      $region25: #{dense_block_forward.4} parent=11 // pred_check
        %p237 = pneg %p124
      $region26: #{dense_block_forward.4} parent=11 // pred_check_branch
        %239 = sbr.rel (%p237) target = $region28
      $region27: #{dense_block_forward.4} parent=11 // pred_region
        _
      $region28: #{dense_block_forward.4} parent=11 // pred_fallthru
        _
      // Predicated region
      $region29: #{dense_block_forward.4} parent=11 // pred_check
        %p240 = pneg %p145
      $region30: #{dense_block_forward.4} parent=11 // pred_check_branch
        %242 = sbr.rel (%p240) target = $region32
      $region31: #{dense_block_forward.4} parent=11 // pred_region
        _
      $region32: #{dense_block_forward.4} parent=11 // pred_fallthru
        _
      // Predicated region
      $region33: #{dense_block_forward.4} parent=11 // pred_check
        %p243 = pneg %p166
      $region34: #{dense_block_forward.4} parent=11 // pred_check_branch
        %245 = sbr.rel (%p243) target = $region36
      $region35: #{dense_block_forward.4} parent=11 // pred_region
        _
      $region36: #{dense_block_forward.4} parent=11 // pred_fallthru
        _
      // Predicated region
      $region37: #{dense_block_forward.4} parent=11 // pred_check
        %p246 = pneg %p187
      $region38: #{dense_block_forward.4} parent=11 // pred_check_branch
        %248 = sbr.rel (%p246) target = $region40
      $region39: #{dense_block_forward.4} parent=11 // pred_region
        _
      $region40: #{dense_block_forward.4} parent=11 // pred_fallthru
        _
    $region12: #{dense_block_forward.4} parent=5 // pred_fallthru
      _
    %p249 = scmp.lt.s32.totalorder %s14, 2
    // Predicated region
    $region41: #{dense_block_forward.4} parent=5 // pred_check
      %p250 = pneg %p249
    $region42: #{dense_block_forward.4} parent=5 // pred_check_branch
      %252 = sbr.rel (%p250) target = $region44
    $region43: #{dense_block_forward.4} parent=5 // pred_region
      // Predicated region
      $region45: #{dense_block_forward.4} parent=43 // pred_check
        %p253 = pneg %p34
      $region46: #{dense_block_forward.4} parent=43 // pred_check_branch
        %255 = sbr.rel (%p253) target = $region48
      $region47: #{dense_block_forward.4} parent=43 // pred_region
        %p256 = scmp.lt.s32.totalorder %s14, 1
        %s257 = scalar_select %p256, %s14, 1
        %s258 = smul.addr %s257, 20
        %s259 = smul.addr %s258, 8
        %s260 = scalar_lea.vmem %s0, %s259
      $region48: #{dense_block_forward.4} parent=43 // pred_fallthru
        _
    $region44: #{dense_block_forward.4} parent=5 // pred_fallthru
      _
    %p261 = scmp.le.s32.totalorder 1, %s14
    %p262 = scmp.lt.s32.totalorder %s14, 3
    %p263 = pnand %p261, %p262
    %p264 = pneg %p263
    // Predicated region
    $region49: #{dense_block_forward.4} parent=5 // pred_check
      _
    $region50: #{dense_block_forward.4} parent=5 // pred_check_branch
      %266 = sbr.rel (%p263) target = $region52
    $region51: #{dense_block_forward.4} parent=5 // pred_region
      %s267 = ssub.s32 %s14, 1
      %p268 = scmp.lt.s32.totalorder %s19, 1
      %s269 = scalar_select %p268, %s19, 1
      %s270 = smul.addr %s269, 20
      %s271 = smul.addr %s270, 8
      %s272 = scalar_lea.vmem %s0, %s271
      %p273 = pneg %p40
      %p274 = pneg %p37
      %p275 = pneg %p61
      %p276 = pneg %p58
      %p277 = pneg %p82
      %p278 = pneg %p79
      %p279 = pneg %p103
      %p280 = pneg %p100
      %p281 = pneg %p124
      %p282 = pneg %p121
      %p283 = pneg %p145
      %p284 = pneg %p142
      %p285 = pneg %p166
      %p286 = pneg %p163
      %p287 = pneg %p187
      %p288 = pneg %p184
      %p289 = pneg %p213
      %p290 = pneg %p210
      %p291 = scmp.lt.s32.totalorder %s19, 1
      %s292 = scalar_select %p291, %s19, 1
      %s293 = smul.addr %s292, 20
      %s294 = smul.addr %s293, 8
      %s295 = scalar_lea.vmem %s8, %s294
      %p296 = scmp.lt.s32.totalorder %s19, 1
      %s297 = scalar_select %p296, %s19, 1
      %s298 = smul.addr %s297, 20
      %s299 = smul.addr %s298, 8
      %s300 = scalar_lea.vmem %s0, %s299
      %p301 = scmp.lt.s32.totalorder %s19, 1
      %s302 = scalar_select %p301, %s19, 1
      %s303 = smul.addr %s302, 20
      %s304 = smul.addr %s303, 8
      %s305 = scalar_lea.vmem %s8, %s304
      %v307 = vld [vmem:[%s300] sm:$0xff]
      %v308 = vld [vmem:[%s300 + $0x8] sm:$0xff]
      %v309 = vld [vmem:[%s300 + $0x10] sm:$0xff]
      %v310 = vld [vmem:[%s300 + $0x18] sm:$0xff]
      %v311 = vld [vmem:[%s300 + $0x20] sm:$0xff]
      %v312 = vld [vmem:[%s300 + $0x28] sm:$0xff]
      %v313 = vld [vmem:[%s300 + $0x30] sm:$0xff]
      %v314 = vld [vmem:[%s300 + $0x38] sm:$0xff]
      %v315 = vld [vmem:[%s300 + $0x40] sm:$0xff]
      %v316 = vld [vmem:[%s300 + $0x48] sm:$0xff]
      %v317 = vld [vmem:[%s300 + $0x50] sm:$0xff]
      %v318 = vld [vmem:[%s300 + $0x58] sm:$0xff]
      %v319 = vld [vmem:[%s300 + $0x60] sm:$0xff]
      %v320 = vld [vmem:[%s300 + $0x68] sm:$0xff]
      %v321 = vld [vmem:[%s300 + $0x70] sm:$0xff]
      %v322 = vld [vmem:[%s300 + $0x78] sm:$0xff]
      %v323 = vld [vmem:[%s300 + $0x80] sm:$0xff]
      %v324 = vld [vmem:[%s300 + $0x88] sm:$0xff]
      %v325 = vld [vmem:[%s300 + $0x90] sm:$0xff]
      %v326 = vld [vmem:[%s300 + $0x98] sm:$0xff]
      %v327 = vld [vmem:[%s2] sm:$0x1]
      %v329 = vlaneseq
      %v330 = vshrl.u32 %v329, 7
      %v331 = vsub.s32 0, %v330
      %v332 = vrot.slane %v327, %v331
      %v334 = vmul.f32 %v307, %v332
      %v335 = vmul.f32 %v308, %v332
      %v336 = vmul.f32 %v309, %v332
      %v337 = vmul.f32 %v310, %v332
      %v338 = vmul.f32 %v311, %v332
      %v339 = vmul.f32 %v312, %v332
      %v340 = vmul.f32 %v313, %v332
      %v341 = vmul.f32 %v314, %v332
      %v342 = vmul.f32 %v315, %v332
      %v343 = vmul.f32 %v316, %v332
      %v344 = vmul.f32 %v317, %v332
      %v345 = vmul.f32 %v318, %v332
      %v346 = vmul.f32 %v319, %v332
      %v347 = vmul.f32 %v320, %v332
      %v348 = vmul.f32 %v321, %v332
      %v349 = vmul.f32 %v322, %v332
      %v350 = vmul.f32 %v323, %v332
      %v351 = vmul.f32 %v324, %v332
      %v352 = vmul.f32 %v325, %v332
      %v353 = vmul.f32 %v326, %v332
      %v354 = vld [vmem:[%s3] sm:$0x1]
      %v356 = vlaneseq
      %v357 = vshrl.u32 %v356, 7
      %v358 = vsub.s32 0, %v357
      %v359 = vrot.slane %v354, %v358
      %v361 = vadd.f32 %v334, %v359
      %v362 = vadd.f32 %v335, %v359
      %v363 = vadd.f32 %v336, %v359
      %v364 = vadd.f32 %v337, %v359
      %v365 = vadd.f32 %v338, %v359
      %v366 = vadd.f32 %v339, %v359
      %v367 = vadd.f32 %v340, %v359
      %v368 = vadd.f32 %v341, %v359
      %v369 = vadd.f32 %v342, %v359
      %v370 = vadd.f32 %v343, %v359
      %v371 = vadd.f32 %v344, %v359
      %v372 = vadd.f32 %v345, %v359
      %v373 = vadd.f32 %v346, %v359
      %v374 = vadd.f32 %v347, %v359
      %v375 = vadd.f32 %v348, %v359
      %v376 = vadd.f32 %v349, %v359
      %v377 = vadd.f32 %v350, %v359
      %v378 = vadd.f32 %v351, %v359
      %v379 = vadd.f32 %v352, %v359
      %v380 = vadd.f32 %v353, %v359
      %v381 = vmax.f32 %v361, 0.0
      %v382 = vmax.f32 %v362, 0.0
      %v383 = vmax.f32 %v363, 0.0
      %v384 = vmax.f32 %v364, 0.0
      %v385 = vmax.f32 %v365, 0.0
      %v386 = vmax.f32 %v366, 0.0
      %v387 = vmax.f32 %v367, 0.0
      %v388 = vmax.f32 %v368, 0.0
      %v389 = vmax.f32 %v369, 0.0
      %v390 = vmax.f32 %v370, 0.0
      %v391 = vmax.f32 %v371, 0.0
      %v392 = vmax.f32 %v372, 0.0
      %v393 = vmax.f32 %v373, 0.0
      %v394 = vmax.f32 %v374, 0.0
      %v395 = vmax.f32 %v375, 0.0
      %v396 = vmax.f32 %v376, 0.0
      %v397 = vmax.f32 %v377, 0.0
      %v398 = vmax.f32 %v378, 0.0
      %v399 = vmax.f32 %v379, 0.0
      %v400 = vmax.f32 %v380, 0.0
      %v401 = vpack.c.bf16 %v382, %v381
      %v402 = vpack.c.bf16 %v384, %v383
      %v403 = vpack.c.bf16 %v386, %v385
      %v404 = vpack.c.bf16 %v388, %v387
      %v405 = vpack.c.bf16 %v390, %v389
      %v406 = vpack.c.bf16 %v392, %v391
      %v407 = vpack.c.bf16 %v394, %v393
      %v408 = vpack.c.bf16 %v396, %v395
      %v409 = vpack.c.bf16 %v398, %v397
      %v410 = vpack.c.bf16 %v400, %v399
      %v411 = vld [vmem:[%s4] sm:$0xf]
      %v412 = vld [vmem:[%s4 + $0x4] sm:$0xf]
      %v413 = vld [vmem:[%s4 + $0x8] sm:$0xf]
      %v414 = vld [vmem:[%s4 + $0xc] sm:$0xf]
      %v415 = vld [vmem:[%s4 + $0x10] sm:$0xf]
      %v416 = vld [vmem:[%s4 + $0x14] sm:$0xf]
      %v417 = vld [vmem:[%s4 + $0x18] sm:$0xf]
      %v418 = vld [vmem:[%s4 + $0x1c] sm:$0xf]
      %v419 = vld [vmem:[%s5] sm:$0x1]
      %v421 = vlaneseq
      %v422 = vshrl.u32 %v421, 7
      %v423 = vsub.s32 0, %v422
      %v424 = vrot.slane %v419, %v423
      %v434 = vunpack.c.l.b16 %v411
      %v435 = vunpack.c.l.b16 %v412
      %v436 = vunpack.c.l.b16 %v413
      %v437 = vunpack.c.l.b16 %v414
      %v438 = vunpack.c.l.b16 %v415
      %v439 = vunpack.c.l.b16 %v416
      %v440 = vunpack.c.l.b16 %v417
      %v441 = vunpack.c.l.b16 %v418
      %v442 = vpack.c.b16 %v435, %v434
      %v443 = vpack.c.b16 %v437, %v436
      %v444 = vpack.c.b16 %v439, %v438
      %v445 = vpack.c.b16 %v441, %v440
      %vm450 = vcmask 523264
      %v452 = vsel %vm450, %v401, 0
      %v455 = vsel %vm450, %v402, 0
      %v458 = vsel %vm450, %v403, 0
      %v461 = vsel %vm450, %v404, 0
      %v464 = vsel %vm450, %v405, 0
      %v467 = vsel %vm450, %v406, 0
      %v470 = vsel %vm450, %v407, 0
      %v473 = vsel %vm450, %v408, 0
      %v476 = vsel %vm450, %v409, 0
      %v479 = vsel %vm450, %v410, 0
      %481 = vmatprep.subr.bf16.mxu0 0
      %482 = vmatpush1.bf16.msra.mxu0 0
      %483 = vmatprep.subr.bf16.mxu0 0
      %484 = vmatpush1.bf16.msra.mxu0 0
      %485 = vmatprep.subr.bf16.mxu0 0
      %486 = vmatpush1.bf16.msra.mxu0 0
      %487 = vmatprep.subr.bf16.mxu0 0
      %488 = vmatpush1.bf16.msra.mxu0 0
      %489 = vmatprep.subr.bf16.mxu0 0
      %490 = vmatpush1.bf16.msra.mxu0 %v445
      %491 = vmatprep.subr.bf16.mxu0 0
      %492 = vmatpush1.bf16.msra.mxu0 %v444
      %493 = vmatprep.subr.bf16.mxu0 0
      %494 = vmatpush1.bf16.msra.mxu0 %v443
      %495 = vmatprep.subr.bf16.mxu0 0
      %496 = vmatpush1.bf16.msra.mxu0 %v442
      %497 = vmatprep.subr.bf16.mxu0 0
      %498 = vmatpush2.bf16.msra.mxu0 0
      %499 = vmatprep.subr.bf16.mxu0 0
      %500 = vmatpush2.bf16.msra.mxu0 0
      %501 = vmatprep.subr.bf16.mxu0 0
      %502 = vmatpush2.bf16.msra.mxu0 0
      %503 = vmatprep.subr.bf16.mxu0 0
      %504 = vmatpush2.bf16.msra.mxu0 0
      %505 = vmatprep.subr.bf16.mxu0 0
      %506 = vmatpush2.bf16.msra.mxu0 0
      %507 = vmatprep.subr.bf16.mxu0 0
      %508 = vmatpush2.bf16.msra.mxu0 0
      %509 = vmatprep.subr.bf16.mxu0 0
      %510 = vmatpush2.bf16.msra.mxu0 0
      %511 = vmatprep.subr.bf16.mxu0 0
      %512 = vmatpush2.bf16.msra.mxu0 0
      %513 = vmatprep.mubr.bf16.mxu0 0
      %514 = vmatmul.mubr.bf16.gmra.mxu0 %v452
      %v515 = vpop.f32.mrf.mxu0
      %v516 = vadd.f32 %v424, %v515
      %v517 = vpop.f32.mrf.mxu0
      %v518 = vpop.f32.mrf.mxu0
      %v519 = vadd.f32 %v424, %v518
      %v520 = vpop.f32.mrf.mxu0
      %521 = vmatprep.mubr.bf16.mxu0 0
      %522 = vmatmul.mubr.bf16.gmra.mxu0 %v455
      %v523 = vpop.f32.mrf.mxu0
      %v524 = vadd.f32 %v424, %v523
      %v525 = vpop.f32.mrf.mxu0
      %v526 = vpop.f32.mrf.mxu0
      %v527 = vadd.f32 %v424, %v526
      %v528 = vpop.f32.mrf.mxu0
      %529 = vmatprep.mubr.bf16.mxu0 0
      %530 = vmatmul.mubr.bf16.gmra.mxu0 %v458
      %v531 = vpop.f32.mrf.mxu0
      %v532 = vadd.f32 %v424, %v531
      %v533 = vpop.f32.mrf.mxu0
      %v534 = vpop.f32.mrf.mxu0
      %v535 = vadd.f32 %v424, %v534
      %v536 = vpop.f32.mrf.mxu0
      %537 = vmatprep.mubr.bf16.mxu0 0
      %538 = vmatmul.mubr.bf16.gmra.mxu0 %v461
      %v539 = vpop.f32.mrf.mxu0
      %v540 = vadd.f32 %v424, %v539
      %v541 = vpop.f32.mrf.mxu0
      %v542 = vpop.f32.mrf.mxu0
      %v543 = vadd.f32 %v424, %v542
      %v544 = vpop.f32.mrf.mxu0
      %545 = vmatprep.mubr.bf16.mxu0 0
      %546 = vmatmul.mubr.bf16.gmra.mxu0 %v464
      %v547 = vpop.f32.mrf.mxu0
      %v548 = vadd.f32 %v424, %v547
      %v549 = vpop.f32.mrf.mxu0
      %v550 = vpop.f32.mrf.mxu0
      %v551 = vadd.f32 %v424, %v550
      %v552 = vpop.f32.mrf.mxu0
      %553 = vmatprep.mubr.bf16.mxu0 0
      %554 = vmatmul.mubr.bf16.gmra.mxu0 %v467
      %v555 = vpop.f32.mrf.mxu0
      %v556 = vadd.f32 %v424, %v555
      %v557 = vpop.f32.mrf.mxu0
      %v558 = vpop.f32.mrf.mxu0
      %v559 = vadd.f32 %v424, %v558
      %v560 = vpop.f32.mrf.mxu0
      %561 = vmatprep.mubr.bf16.mxu0 0
      %562 = vmatmul.mubr.bf16.gmra.mxu0 %v470
      %v563 = vpop.f32.mrf.mxu0
      %v564 = vadd.f32 %v424, %v563
      %v565 = vpop.f32.mrf.mxu0
      %v566 = vpop.f32.mrf.mxu0
      %v567 = vadd.f32 %v424, %v566
      %v568 = vpop.f32.mrf.mxu0
      %569 = vmatprep.mubr.bf16.mxu0 0
      %570 = vmatmul.mubr.bf16.gmra.mxu0 %v473
      %v571 = vpop.f32.mrf.mxu0
      %v572 = vadd.f32 %v424, %v571
      %v573 = vpop.f32.mrf.mxu0
      %v574 = vpop.f32.mrf.mxu0
      %v575 = vadd.f32 %v424, %v574
      %v576 = vpop.f32.mrf.mxu0
      %577 = vmatprep.mubr.bf16.mxu0 0
      %578 = vmatmul.mubr.bf16.gmra.mxu0 %v476
      %v579 = vpop.f32.mrf.mxu0
      %v580 = vadd.f32 %v424, %v579
      %v581 = vpop.f32.mrf.mxu0
      %v582 = vpop.f32.mrf.mxu0
      %v583 = vadd.f32 %v424, %v582
      %v584 = vpop.f32.mrf.mxu0
      %585 = vmatprep.mubr.bf16.mxu0 0
      %586 = vmatmul.mubr.bf16.gmra.mxu0 %v479
      %v587 = vpop.f32.mrf.mxu0
      %v588 = vadd.f32 %v424, %v587
      %v589 = vpop.f32.mrf.mxu0
      %v590 = vpop.f32.mrf.mxu0
      %v591 = vadd.f32 %v424, %v590
      %v592 = vpop.f32.mrf.mxu0
      %593 = vdwg.mxu0
      %v594 = vmax.f32 %v516, 0.0
      %v595 = vmax.f32 %v519, 0.0
      %v596 = vmax.f32 %v524, 0.0
      %v597 = vmax.f32 %v527, 0.0
      %v598 = vmax.f32 %v532, 0.0
      %v599 = vmax.f32 %v535, 0.0
      %v600 = vmax.f32 %v540, 0.0
      %v601 = vmax.f32 %v543, 0.0
      %v602 = vmax.f32 %v548, 0.0
      %v603 = vmax.f32 %v551, 0.0
      %v604 = vmax.f32 %v556, 0.0
      %v605 = vmax.f32 %v559, 0.0
      %v606 = vmax.f32 %v564, 0.0
      %v607 = vmax.f32 %v567, 0.0
      %v608 = vmax.f32 %v572, 0.0
      %v609 = vmax.f32 %v575, 0.0
      %v610 = vmax.f32 %v580, 0.0
      %v611 = vmax.f32 %v583, 0.0
      %v612 = vmax.f32 %v588, 0.0
      %v613 = vmax.f32 %v591, 0.0
      %v614 = vld [vmem:[%s1] sm:$0xff]
      %v615 = vld [vmem:[%s1 + $0x8] sm:$0xff]
      %v616 = vld [vmem:[%s1 + $0x10] sm:$0xff]
      %v617 = vld [vmem:[%s1 + $0x18] sm:$0xff]
      %v618 = vld [vmem:[%s1 + $0x20] sm:$0xff]
      %v619 = vld [vmem:[%s1 + $0x28] sm:$0xff]
      %v620 = vld [vmem:[%s1 + $0x30] sm:$0xff]
      %v621 = vld [vmem:[%s1 + $0x38] sm:$0xff]
      %v622 = vld [vmem:[%s1 + $0x40] sm:$0xff]
      %v623 = vld [vmem:[%s1 + $0x48] sm:$0xff]
      %v624 = vld [vmem:[%s1 + $0x50] sm:$0xff]
      %v625 = vld [vmem:[%s1 + $0x58] sm:$0xff]
      %v626 = vld [vmem:[%s1 + $0x60] sm:$0xff]
      %v627 = vld [vmem:[%s1 + $0x68] sm:$0xff]
      %v628 = vld [vmem:[%s1 + $0x70] sm:$0xff]
      %v629 = vld [vmem:[%s1 + $0x78] sm:$0xff]
      %v630 = vld [vmem:[%s1 + $0x80] sm:$0xff]
      %v631 = vld [vmem:[%s1 + $0x88] sm:$0xff]
      %v632 = vld [vmem:[%s1 + $0x90] sm:$0xff]
      %v633 = vld [vmem:[%s1 + $0x98] sm:$0xff]
      %635 = vset.pattern.permute.xlu0 0
      %636 = vperm.xlu0 %635, %v614
      %v637 = vpop.permute.xlu0 %636
      %640 = vset.pattern.permute.xlu0 0
      %641 = vperm.xlu0 %640, %v615
      %v642 = vpop.permute.xlu0 %641
      %645 = vset.pattern.permute.xlu0 0
      %646 = vperm.xlu0 %645, %v616
      %v647 = vpop.permute.xlu0 %646
      %650 = vset.pattern.permute.xlu0 0
      %651 = vperm.xlu0 %650, %v617
      %v652 = vpop.permute.xlu0 %651
      %655 = vset.pattern.permute.xlu0 0
      %656 = vperm.xlu0 %655, %v618
      %v657 = vpop.permute.xlu0 %656
      %660 = vset.pattern.permute.xlu0 0
      %661 = vperm.xlu0 %660, %v619
      %v662 = vpop.permute.xlu0 %661
      %665 = vset.pattern.permute.xlu0 0
      %666 = vperm.xlu0 %665, %v620
      %v667 = vpop.permute.xlu0 %666
      %670 = vset.pattern.permute.xlu0 0
      %671 = vperm.xlu0 %670, %v621
      %v672 = vpop.permute.xlu0 %671
      %675 = vset.pattern.permute.xlu0 0
      %676 = vperm.xlu0 %675, %v622
      %v677 = vpop.permute.xlu0 %676
      %680 = vset.pattern.permute.xlu0 0
      %681 = vperm.xlu0 %680, %v623
      %v682 = vpop.permute.xlu0 %681
      %685 = vset.pattern.permute.xlu0 0
      %686 = vperm.xlu0 %685, %v624
      %v687 = vpop.permute.xlu0 %686
      %690 = vset.pattern.permute.xlu0 0
      %691 = vperm.xlu0 %690, %v625
      %v692 = vpop.permute.xlu0 %691
      %695 = vset.pattern.permute.xlu0 0
      %696 = vperm.xlu0 %695, %v626
      %v697 = vpop.permute.xlu0 %696
      %700 = vset.pattern.permute.xlu0 0
      %701 = vperm.xlu0 %700, %v627
      %v702 = vpop.permute.xlu0 %701
      %705 = vset.pattern.permute.xlu0 0
      %706 = vperm.xlu0 %705, %v628
      %v707 = vpop.permute.xlu0 %706
      %710 = vset.pattern.permute.xlu0 0
      %711 = vperm.xlu0 %710, %v629
      %v712 = vpop.permute.xlu0 %711
      %715 = vset.pattern.permute.xlu0 0
      %716 = vperm.xlu0 %715, %v630
      %v717 = vpop.permute.xlu0 %716
      %720 = vset.pattern.permute.xlu0 0
      %721 = vperm.xlu0 %720, %v631
      %v722 = vpop.permute.xlu0 %721
      %725 = vset.pattern.permute.xlu0 0
      %726 = vperm.xlu0 %725, %v632
      %v727 = vpop.permute.xlu0 %726
      %730 = vset.pattern.permute.xlu0 0
      %731 = vperm.xlu0 %730, %v633
      %v732 = vpop.permute.xlu0 %731
      %v734 = vmul.f32 %v594, %v637
      %v735 = vmul.f32 %v595, %v642
      %v736 = vmul.f32 %v596, %v647
      %v737 = vmul.f32 %v597, %v652
      %v738 = vmul.f32 %v598, %v657
      %v739 = vmul.f32 %v599, %v662
      %v740 = vmul.f32 %v600, %v667
      %v741 = vmul.f32 %v601, %v672
      %v742 = vmul.f32 %v602, %v677
      %v743 = vmul.f32 %v603, %v682
      %v744 = vmul.f32 %v604, %v687
      %v745 = vmul.f32 %v605, %v692
      %v746 = vmul.f32 %v606, %v697
      %v747 = vmul.f32 %v607, %v702
      %v748 = vmul.f32 %v608, %v707
      %v749 = vmul.f32 %v609, %v712
      %v750 = vmul.f32 %v610, %v717
      %v751 = vmul.f32 %v611, %v722
      %v752 = vmul.f32 %v612, %v727
      %v753 = vmul.f32 %v613, %v732
      %vm774 = vcmask 1040384
      %v775 = vrot.slane %v734, 7
      %v776 = vrot.slane %v735, 7
      %v777 = vsel %vm774, %v775, %v776
      %v778 = vrot.slane %v736, 7
      %v779 = vsel %vm774, %v776, %v778
      %v780 = vrot.slane %v737, 7
      %v781 = vsel %vm774, %v778, %v780
      %v782 = vrot.slane %v738, 7
      %v783 = vsel %vm774, %v780, %v782
      %v784 = vrot.slane %v739, 7
      %v785 = vsel %vm774, %v782, %v784
      %v786 = vrot.slane %v740, 7
      %v787 = vsel %vm774, %v784, %v786
      %v788 = vrot.slane %v741, 7
      %v789 = vsel %vm774, %v786, %v788
      %v790 = vrot.slane %v742, 7
      %v791 = vsel %vm774, %v788, %v790
      %v792 = vrot.slane %v743, 7
      %v793 = vsel %vm774, %v790, %v792
      %v794 = vrot.slane %v744, 7
      %v795 = vsel %vm774, %v792, %v794
      %v796 = vrot.slane %v745, 7
      %v797 = vsel %vm774, %v794, %v796
      %v798 = vrot.slane %v746, 7
      %v799 = vsel %vm774, %v796, %v798
      %v800 = vrot.slane %v747, 7
      %v801 = vsel %vm774, %v798, %v800
      %v802 = vrot.slane %v748, 7
      %v803 = vsel %vm774, %v800, %v802
      %v804 = vrot.slane %v749, 7
      %v805 = vsel %vm774, %v802, %v804
      %v806 = vrot.slane %v750, 7
      %v807 = vsel %vm774, %v804, %v806
      %v808 = vrot.slane %v751, 7
      %v809 = vsel %vm774, %v806, %v808
      %v810 = vrot.slane %v752, 7
      %v811 = vsel %vm774, %v808, %v810
      %v812 = vrot.slane %v753, 7
      %v813 = vsel %vm774, %v810, %v812
      %v835 = vsel %vm774, 0.0, %v775
      %v836 = vsel %vm774, %v812, 0.0
      %v837 = vpack.c.bf16 0.0, 0.0
      %v838 = vpack.c.bf16 %v777, %v835
      %v839 = vpack.c.bf16 %v781, %v779
      %v840 = vpack.c.bf16 %v785, %v783
      %v841 = vpack.c.bf16 %v789, %v787
      %v842 = vpack.c.bf16 %v793, %v791
      %v843 = vpack.c.bf16 %v797, %v795
      %v844 = vpack.c.bf16 %v801, %v799
      %v845 = vpack.c.bf16 %v805, %v803
      %v846 = vpack.c.bf16 %v809, %v807
      %v847 = vpack.c.bf16 %v813, %v811
      %v848 = vpack.c.bf16 0.0, %v836
      %v849 = vld [vmem:[%s6] sm:$0xff]
      %v850 = vld [vmem:[%s6 + $0x8] sm:$0xf]
      %v851 = vld [vmem:[%s6 + $0xc] sm:$0xff]
      %v852 = vld [vmem:[%s6 + $0x14] sm:$0xf]
      %v853 = vld [vmem:[%s6 + $0x18] sm:$0xff]
      %v854 = vld [vmem:[%s6 + $0x20] sm:$0xf]
      %v855 = vld [vmem:[%s6 + $0x24] sm:$0xff]
      %v856 = vld [vmem:[%s6 + $0x2c] sm:$0xf]
      %v857 = vld [vmem:[%s6 + $0x30] sm:$0xff]
      %v858 = vld [vmem:[%s6 + $0x38] sm:$0xf]
      %v859 = vld [vmem:[%s6 + $0x3c] sm:$0xff]
      %v860 = vld [vmem:[%s6 + $0x44] sm:$0xf]
      %v861 = vld [vmem:[%s6 + $0x48] sm:$0xff]
      %v862 = vld [vmem:[%s6 + $0x50] sm:$0xf]
      %v863 = vld [vmem:[%s6 + $0x54] sm:$0xff]
      %v864 = vld [vmem:[%s6 + $0x5c] sm:$0xf]
      %v865 = vld [vmem:[%s6 + $0x60] sm:$0xff]
      %v866 = vld [vmem:[%s6 + $0x68] sm:$0xf]
      %v867 = vld [vmem:[%s6 + $0x6c] sm:$0xff]
      %v868 = vld [vmem:[%s6 + $0x74] sm:$0xf]
      %v869 = vld [vmem:[%s6 + $0x78] sm:$0xff]
      %v870 = vld [vmem:[%s6 + $0x80] sm:$0xf]
      %v871 = vld [vmem:[%s6 + $0x84] sm:$0xff]
      %v872 = vld [vmem:[%s6 + $0x8c] sm:$0xf]
      %v873 = vld [vmem:[%s6 + $0x90] sm:$0xff]
      %v874 = vld [vmem:[%s6 + $0x98] sm:$0xf]
      %v875 = vld [vmem:[%s6 + $0x9c] sm:$0xff]
      %v876 = vld [vmem:[%s6 + $0xa4] sm:$0xf]
      %v877 = vld [vmem:[%s6 + $0xa8] sm:$0xff]
      %v878 = vld [vmem:[%s6 + $0xb0] sm:$0xf]
      %v879 = vld [vmem:[%s6 + $0xb4] sm:$0xff]
      %v880 = vld [vmem:[%s6 + $0xbc] sm:$0xf]
      %v913 = vunpack.c.l.b16 %v849
      %v914 = vunpack.c.h.b16 %v849
      %v915 = vunpack.c.l.b16 %v850
      %v916 = vunpack.c.l.b16 %v851
      %v917 = vunpack.c.h.b16 %v851
      %v918 = vunpack.c.l.b16 %v852
      %v919 = vunpack.c.l.b16 %v853
      %v920 = vunpack.c.h.b16 %v853
      %v921 = vunpack.c.l.b16 %v854
      %v922 = vunpack.c.l.b16 %v855
      %v923 = vunpack.c.h.b16 %v855
      %v924 = vunpack.c.l.b16 %v856
      %v925 = vunpack.c.l.b16 %v857
      %v926 = vunpack.c.h.b16 %v857
      %v927 = vunpack.c.l.b16 %v858
      %v928 = vunpack.c.l.b16 %v859
      %v929 = vunpack.c.h.b16 %v859
      %v930 = vunpack.c.l.b16 %v860
      %v931 = vunpack.c.l.b16 %v861
      %v932 = vunpack.c.h.b16 %v861
      %v933 = vunpack.c.l.b16 %v862
      %v934 = vunpack.c.l.b16 %v863
      %v935 = vunpack.c.h.b16 %v863
      %v936 = vunpack.c.l.b16 %v864
      %v937 = vunpack.c.l.b16 %v865
      %v938 = vunpack.c.h.b16 %v865
      %v939 = vunpack.c.l.b16 %v866
      %v940 = vunpack.c.l.b16 %v867
      %v941 = vunpack.c.h.b16 %v867
      %v942 = vunpack.c.l.b16 %v868
      %v943 = vunpack.c.l.b16 %v869
      %v944 = vunpack.c.h.b16 %v869
      %v945 = vunpack.c.l.b16 %v870
      %v946 = vunpack.c.l.b16 %v871
      %v947 = vunpack.c.h.b16 %v871
      %v948 = vunpack.c.l.b16 %v872
      %v949 = vunpack.c.l.b16 %v873
      %v950 = vunpack.c.h.b16 %v873
      %v951 = vunpack.c.l.b16 %v874
      %v952 = vunpack.c.l.b16 %v875
      %v953 = vunpack.c.h.b16 %v875
      %v954 = vunpack.c.l.b16 %v876
      %v955 = vunpack.c.l.b16 %v877
      %v956 = vunpack.c.h.b16 %v877
      %v957 = vunpack.c.l.b16 %v878
      %v958 = vunpack.c.l.b16 %v879
      %v959 = vunpack.c.h.b16 %v879
      %v960 = vunpack.c.l.b16 %v880
      %v961 = vpack.c.b16 %v916, %v913
      %v962 = vpack.c.b16 %v917, %v914
      %v963 = vpack.c.b16 %v918, %v915
      %v964 = vpack.c.b16 %v922, %v919
      %v965 = vpack.c.b16 %v923, %v920
      %v966 = vpack.c.b16 %v924, %v921
      %v967 = vpack.c.b16 %v928, %v925
      %v968 = vpack.c.b16 %v929, %v926
      %v969 = vpack.c.b16 %v930, %v927
      %v970 = vpack.c.b16 %v934, %v931
      %v971 = vpack.c.b16 %v935, %v932
      %v972 = vpack.c.b16 %v936, %v933
      %v973 = vpack.c.b16 %v940, %v937
      %v974 = vpack.c.b16 %v941, %v938
      %v975 = vpack.c.b16 %v942, %v939
      %v976 = vpack.c.b16 %v946, %v943
      %v977 = vpack.c.b16 %v947, %v944
      %v978 = vpack.c.b16 %v948, %v945
      %v979 = vpack.c.b16 %v952, %v949
      %v980 = vpack.c.b16 %v953, %v950
      %v981 = vpack.c.b16 %v954, %v951
      %v982 = vpack.c.b16 %v958, %v955
      %v983 = vpack.c.b16 %v959, %v956
      %v984 = vpack.c.b16 %v960, %v957
      %1009 = vmatprep.subr.bf16.mxu0 %v983
      %1010 = vmatpush1.bf16.msra.mxu0 %v982
      %1011 = vmatprep.subr.bf16.mxu0 %v980
      %1012 = vmatpush1.bf16.msra.mxu0 %v979
      %1013 = vmatprep.subr.bf16.mxu0 %v977
      %1014 = vmatpush1.bf16.msra.mxu0 %v976
      %1015 = vmatprep.subr.bf16.mxu0 %v974
      %1016 = vmatpush1.bf16.msra.mxu0 %v973
      %1017 = vmatprep.subr.bf16.mxu0 %v971
      %1018 = vmatpush1.bf16.msra.mxu0 %v970
      %1019 = vmatprep.subr.bf16.mxu0 %v968
      %1020 = vmatpush1.bf16.msra.mxu0 %v967
      %1021 = vmatprep.subr.bf16.mxu0 %v965
      %1022 = vmatpush1.bf16.msra.mxu0 %v964
      %1023 = vmatprep.subr.bf16.mxu0 %v962
      %1024 = vmatpush1.bf16.msra.mxu0 %v961
      %1025 = vmatprep.subr.bf16.mxu0 0
      %1026 = vmatpush2.bf16.msra.mxu0 0
      %1027 = vmatprep.subr.bf16.mxu0 0
      %1028 = vmatpush2.bf16.msra.mxu0 0
      %1029 = vmatprep.subr.bf16.mxu0 0
      %1030 = vmatpush2.bf16.msra.mxu0 0
      %1031 = vmatprep.subr.bf16.mxu0 0
      %1032 = vmatpush2.bf16.msra.mxu0 0
      %1033 = vmatprep.subr.bf16.mxu0 0
      %1034 = vmatpush2.bf16.msra.mxu0 0
      %1035 = vmatprep.subr.bf16.mxu0 0
      %1036 = vmatpush2.bf16.msra.mxu0 0
      %1037 = vmatprep.subr.bf16.mxu0 0
      %1038 = vmatpush2.bf16.msra.mxu0 0
      %1039 = vmatprep.subr.bf16.mxu0 0
      %1040 = vmatpush2.bf16.msra.mxu0 0
      %1041 = vmatprep.mubr.bf16.mxu0 0
      %1042 = vmatmul.mubr.bf16.gmra.mxu0 %v837
      %v1043 = vpop.f32.mrf.mxu0
      %v1044 = vadd.f32 0.0, %v1043
      %v1045 = vpop.f32.mrf.mxu0
      %v1046 = vpop.f32.mrf.mxu0
      %v1047 = vadd.f32 0.0, %v1046
      %v1048 = vpop.f32.mrf.mxu0
      %1049 = vmatprep.mubr.bf16.mxu0 0
      %1050 = vmatmul.mubr.bf16.gmra.mxu0 %v838
      %v1051 = vpop.f32.mrf.mxu0
      %v1052 = vadd.f32 0.0, %v1051
      %v1053 = vpop.f32.mrf.mxu0
      %v1054 = vadd.f32 0.0, %v1053
      %v1055 = vpop.f32.mrf.mxu0
      %v1056 = vadd.f32 0.0, %v1055
      %v1057 = vpop.f32.mrf.mxu0
      %v1058 = vadd.f32 0.0, %v1057
      %1059 = vmatprep.mubr.bf16.mxu0 0
      %1060 = vmatmul.mubr.bf16.gmra.mxu0 %v839
      %v1061 = vpop.f32.mrf.mxu0
      %v1062 = vadd.f32 0.0, %v1061
      %v1063 = vpop.f32.mrf.mxu0
      %v1064 = vadd.f32 0.0, %v1063
      %v1065 = vpop.f32.mrf.mxu0
      %v1066 = vadd.f32 0.0, %v1065
      %v1067 = vpop.f32.mrf.mxu0
      %v1068 = vadd.f32 0.0, %v1067
      %1069 = vmatprep.mubr.bf16.mxu0 0
      %1070 = vmatmul.mubr.bf16.gmra.mxu0 %v840
      %v1071 = vpop.f32.mrf.mxu0
      %v1072 = vadd.f32 0.0, %v1071
      %v1073 = vpop.f32.mrf.mxu0
      %v1074 = vadd.f32 0.0, %v1073
      %v1075 = vpop.f32.mrf.mxu0
      %v1076 = vadd.f32 0.0, %v1075
      %v1077 = vpop.f32.mrf.mxu0
      %v1078 = vadd.f32 0.0, %v1077
      %1079 = vmatprep.mubr.bf16.mxu0 0
      %1080 = vmatmul.mubr.bf16.gmra.mxu0 %v841
      %v1081 = vpop.f32.mrf.mxu0
      %v1082 = vadd.f32 0.0, %v1081
      %v1083 = vpop.f32.mrf.mxu0
      %v1084 = vadd.f32 0.0, %v1083
      %v1085 = vpop.f32.mrf.mxu0
      %v1086 = vadd.f32 0.0, %v1085
      %v1087 = vpop.f32.mrf.mxu0
      %v1088 = vadd.f32 0.0, %v1087
      %1089 = vmatprep.mubr.bf16.mxu0 0
      %1090 = vmatmul.mubr.bf16.gmra.mxu0 %v842
      %v1091 = vpop.f32.mrf.mxu0
      %v1092 = vadd.f32 0.0, %v1091
      %v1093 = vpop.f32.mrf.mxu0
      %v1094 = vadd.f32 0.0, %v1093
      %v1095 = vpop.f32.mrf.mxu0
      %v1096 = vadd.f32 0.0, %v1095
      %v1097 = vpop.f32.mrf.mxu0
      %v1098 = vadd.f32 0.0, %v1097
      %1099 = vmatprep.mubr.bf16.mxu0 0
      %1100 = vmatmul.mubr.bf16.gmra.mxu0 %v843
      %v1101 = vpop.f32.mrf.mxu0
      %v1102 = vadd.f32 0.0, %v1101
      %v1103 = vpop.f32.mrf.mxu0
      %v1104 = vadd.f32 0.0, %v1103
      %v1105 = vpop.f32.mrf.mxu0
      %v1106 = vadd.f32 0.0, %v1105
      %v1107 = vpop.f32.mrf.mxu0
      %v1108 = vadd.f32 0.0, %v1107
      %1109 = vmatprep.mubr.bf16.mxu0 0
      %1110 = vmatmul.mubr.bf16.gmra.mxu0 %v844
      %v1111 = vpop.f32.mrf.mxu0
      %v1112 = vadd.f32 0.0, %v1111
      %v1113 = vpop.f32.mrf.mxu0
      %v1114 = vadd.f32 0.0, %v1113
      %v1115 = vpop.f32.mrf.mxu0
      %v1116 = vadd.f32 0.0, %v1115
      %v1117 = vpop.f32.mrf.mxu0
      %v1118 = vadd.f32 0.0, %v1117
      %1119 = vmatprep.mubr.bf16.mxu0 0
      %1120 = vmatmul.mubr.bf16.gmra.mxu0 %v845
      %v1121 = vpop.f32.mrf.mxu0
      %v1122 = vadd.f32 0.0, %v1121
      %v1123 = vpop.f32.mrf.mxu0
      %v1124 = vadd.f32 0.0, %v1123
      %v1125 = vpop.f32.mrf.mxu0
      %v1126 = vadd.f32 0.0, %v1125
      %v1127 = vpop.f32.mrf.mxu0
      %v1128 = vadd.f32 0.0, %v1127
      %1129 = vmatprep.mubr.bf16.mxu0 0
      %1130 = vmatmul.mubr.bf16.gmra.mxu0 %v846
      %v1131 = vpop.f32.mrf.mxu0
      %v1132 = vadd.f32 0.0, %v1131
      %v1133 = vpop.f32.mrf.mxu0
      %v1134 = vadd.f32 0.0, %v1133
      %v1135 = vpop.f32.mrf.mxu0
      %v1136 = vadd.f32 0.0, %v1135
      %v1137 = vpop.f32.mrf.mxu0
      %v1138 = vadd.f32 0.0, %v1137
      %1139 = vmatprep.mubr.bf16.mxu0 0
      %1140 = vmatmul.mubr.bf16.gmra.mxu0 %v847
      %v1141 = vpop.f32.mrf.mxu0
      %v1142 = vadd.f32 0.0, %v1141
      %v1143 = vpop.f32.mrf.mxu0
      %v1144 = vadd.f32 0.0, %v1143
      %v1145 = vpop.f32.mrf.mxu0
      %v1146 = vadd.f32 0.0, %v1145
      %v1147 = vpop.f32.mrf.mxu0
      %v1148 = vadd.f32 0.0, %v1147
      %1149 = vmatprep.mubr.bf16.mxu0 0
      %1150 = vmatmul.mubr.bf16.gmra.mxu0 %v848
      %v1151 = vpop.f32.mrf.mxu0
      %v1152 = vpop.f32.mrf.mxu0
      %v1153 = vadd.f32 0.0, %v1152
      %v1154 = vpop.f32.mrf.mxu0
      %v1155 = vpop.f32.mrf.mxu0
      %v1156 = vadd.f32 0.0, %v1155
      %1157 = vmatprep.mubr.bf16.mxu0 0
      %1158 = vmatmul.mubr.bf16.gmra.mxu0 %v837
      %v1159 = vpop.f32.mrf.mxu0
      %v1160 = vpop.f32.mrf.mxu0
      %v1161 = vadd.f32 0.0, %v1160
      %v1162 = vpop.f32.mrf.mxu0
      %v1163 = vpop.f32.mrf.mxu0
      %1164 = vdwg.mxu0
      %1165 = vmatprep.subr.bf16.mxu0 0
      %1166 = vmatpush1.bf16.msra.mxu0 %v984
      %1167 = vmatprep.subr.bf16.mxu0 0
      %1168 = vmatpush1.bf16.msra.mxu0 %v981
      %1169 = vmatprep.subr.bf16.mxu0 0
      %1170 = vmatpush1.bf16.msra.mxu0 %v978
      %1171 = vmatprep.subr.bf16.mxu0 0
      %1172 = vmatpush1.bf16.msra.mxu0 %v975
      %1173 = vmatprep.subr.bf16.mxu0 0
      %1174 = vmatpush1.bf16.msra.mxu0 %v972
      %1175 = vmatprep.subr.bf16.mxu0 0
      %1176 = vmatpush1.bf16.msra.mxu0 %v969
      %1177 = vmatprep.subr.bf16.mxu0 0
      %1178 = vmatpush1.bf16.msra.mxu0 %v966
      %1179 = vmatprep.subr.bf16.mxu0 0
      %1180 = vmatpush1.bf16.msra.mxu0 %v963
      %1181 = vmatprep.subr.bf16.mxu0 0
      %1182 = vmatpush2.bf16.msra.mxu0 0
      %1183 = vmatprep.subr.bf16.mxu0 0
      %1184 = vmatpush2.bf16.msra.mxu0 0
      %1185 = vmatprep.subr.bf16.mxu0 0
      %1186 = vmatpush2.bf16.msra.mxu0 0
      %1187 = vmatprep.subr.bf16.mxu0 0
      %1188 = vmatpush2.bf16.msra.mxu0 0
      %1189 = vmatprep.subr.bf16.mxu0 0
      %1190 = vmatpush2.bf16.msra.mxu0 0
      %1191 = vmatprep.subr.bf16.mxu0 0
      %1192 = vmatpush2.bf16.msra.mxu0 0
      %1193 = vmatprep.subr.bf16.mxu0 0
      %1194 = vmatpush2.bf16.msra.mxu0 0
      %1195 = vmatprep.subr.bf16.mxu0 0
      %1196 = vmatpush2.bf16.msra.mxu0 0
      %1197 = vmatprep.mubr.bf16.mxu0 0
      %1198 = vmatmul.mubr.bf16.gmra.mxu0 %v837
      %v1199 = vpop.f32.mrf.mxu0
      %v1200 = vpop.f32.mrf.mxu0
      %v1201 = vpop.f32.mrf.mxu0
      %v1202 = vpop.f32.mrf.mxu0
      %1203 = vmatprep.mubr.bf16.mxu0 0
      %1204 = vmatmul.mubr.bf16.gmra.mxu0 %v838
      %v1205 = vpop.f32.mrf.mxu0
      %v1206 = vpop.f32.mrf.mxu0
      %v1207 = vpop.f32.mrf.mxu0
      %v1208 = vpop.f32.mrf.mxu0
      %1209 = vmatprep.mubr.bf16.mxu0 0
      %1210 = vmatmul.mubr.bf16.gmra.mxu0 %v839
      %v1211 = vpop.f32.mrf.mxu0
      %v1212 = vadd.f32 0.0, %v1211
      %v1213 = vpop.f32.mrf.mxu0
      %v1214 = vpop.f32.mrf.mxu0
      %v1215 = vadd.f32 0.0, %v1214
      %v1216 = vpop.f32.mrf.mxu0
      %1217 = vmatprep.mubr.bf16.mxu0 0
      %1218 = vmatmul.mubr.bf16.gmra.mxu0 %v840
      %v1219 = vpop.f32.mrf.mxu0
      %v1220 = vadd.f32 0.0, %v1219
      %v1221 = vpop.f32.mrf.mxu0
      %v1222 = vpop.f32.mrf.mxu0
      %v1223 = vadd.f32 0.0, %v1222
      %v1224 = vpop.f32.mrf.mxu0
      %1225 = vmatprep.mubr.bf16.mxu0 0
      %1226 = vmatmul.mubr.bf16.gmra.mxu0 %v841
      %v1227 = vpop.f32.mrf.mxu0
      %v1228 = vadd.f32 0.0, %v1227
      %v1229 = vpop.f32.mrf.mxu0
      %v1230 = vpop.f32.mrf.mxu0
      %v1231 = vadd.f32 0.0, %v1230
      %v1232 = vpop.f32.mrf.mxu0
      %1233 = vmatprep.mubr.bf16.mxu0 0
      %1234 = vmatmul.mubr.bf16.gmra.mxu0 %v842
      %v1235 = vpop.f32.mrf.mxu0
      %v1236 = vadd.f32 0.0, %v1235
      %v1237 = vpop.f32.mrf.mxu0
      %v1238 = vpop.f32.mrf.mxu0
      %v1239 = vadd.f32 0.0, %v1238
      %v1240 = vpop.f32.mrf.mxu0
      %1241 = vmatprep.mubr.bf16.mxu0 0
      %1242 = vmatmul.mubr.bf16.gmra.mxu0 %v843
      %v1243 = vpop.f32.mrf.mxu0
      %v1244 = vadd.f32 0.0, %v1243
      %v1245 = vpop.f32.mrf.mxu0
      %v1246 = vpop.f32.mrf.mxu0
      %v1247 = vadd.f32 0.0, %v1246
      %v1248 = vpop.f32.mrf.mxu0
      %1249 = vmatprep.mubr.bf16.mxu0 0
      %1250 = vmatmul.mubr.bf16.gmra.mxu0 %v844
      %v1251 = vpop.f32.mrf.mxu0
      %v1252 = vadd.f32 0.0, %v1251
      %v1253 = vpop.f32.mrf.mxu0
      %v1254 = vpop.f32.mrf.mxu0
      %v1255 = vadd.f32 0.0, %v1254
      %v1256 = vpop.f32.mrf.mxu0
      %1257 = vmatprep.mubr.bf16.mxu0 0
      %1258 = vmatmul.mubr.bf16.gmra.mxu0 %v845
      %v1259 = vpop.f32.mrf.mxu0
      %v1260 = vadd.f32 0.0, %v1259
      %v1261 = vpop.f32.mrf.mxu0
      %v1262 = vpop.f32.mrf.mxu0
      %v1263 = vadd.f32 0.0, %v1262
      %v1264 = vpop.f32.mrf.mxu0
      %1265 = vmatprep.mubr.bf16.mxu0 0
      %1266 = vmatmul.mubr.bf16.gmra.mxu0 %v846
      %v1267 = vpop.f32.mrf.mxu0
      %v1268 = vadd.f32 0.0, %v1267
      %v1269 = vpop.f32.mrf.mxu0
      %v1270 = vpop.f32.mrf.mxu0
      %v1271 = vadd.f32 0.0, %v1270
      %v1272 = vpop.f32.mrf.mxu0
      %1273 = vmatprep.mubr.bf16.mxu0 0
      %1274 = vmatmul.mubr.bf16.gmra.mxu0 %v847
      %v1275 = vpop.f32.mrf.mxu0
      %v1276 = vadd.f32 0.0, %v1275
      %v1277 = vpop.f32.mrf.mxu0
      %v1278 = vpop.f32.mrf.mxu0
      %v1279 = vadd.f32 0.0, %v1278
      %v1280 = vpop.f32.mrf.mxu0
      %1281 = vmatprep.mubr.bf16.mxu0 0
      %1282 = vmatmul.mubr.bf16.gmra.mxu0 %v848
      %v1283 = vpop.f32.mrf.mxu0
      %v1284 = vadd.f32 0.0, %v1283
      %v1285 = vpop.f32.mrf.mxu0
      %v1286 = vpop.f32.mrf.mxu0
      %v1287 = vadd.f32 0.0, %v1286
      %v1288 = vpop.f32.mrf.mxu0
      %1289 = vmatprep.mubr.bf16.mxu0 0
      %1290 = vmatmul.mubr.bf16.gmra.mxu0 %v837
      %v1291 = vpop.f32.mrf.mxu0
      %v1292 = vadd.f32 0.0, %v1291
      %v1293 = vpop.f32.mrf.mxu0
      %v1294 = vpop.f32.mrf.mxu0
      %v1295 = vpop.f32.mrf.mxu0
      %1296 = vdwg.mxu0
      %vm1318 = vcmask 1046528
      %v1319 = vrot.slane %v1044, 1
      %v1320 = vrot.slane %v1047, 1
      %v1321 = vsel %vm1318, %v1319, %v1320
      %v1322 = vrot.slane %v1052, 1
      %v1323 = vsel %vm1318, %v1320, %v1322
      %v1324 = vrot.slane %v1056, 1
      %v1325 = vsel %vm1318, %v1322, %v1324
      %v1326 = vrot.slane %v1062, 1
      %v1327 = vsel %vm1318, %v1324, %v1326
      %v1328 = vrot.slane %v1066, 1
      %v1329 = vsel %vm1318, %v1326, %v1328
      %v1330 = vrot.slane %v1072, 1
      %v1331 = vsel %vm1318, %v1328, %v1330
      %v1332 = vrot.slane %v1076, 1
      %v1333 = vsel %vm1318, %v1330, %v1332
      %v1334 = vrot.slane %v1082, 1
      %v1335 = vsel %vm1318, %v1332, %v1334
      %v1336 = vrot.slane %v1086, 1
      %v1337 = vsel %vm1318, %v1334, %v1336
      %v1338 = vrot.slane %v1092, 1
      %v1339 = vsel %vm1318, %v1336, %v1338
      %v1340 = vrot.slane %v1096, 1
      %v1341 = vsel %vm1318, %v1338, %v1340
      %v1342 = vrot.slane %v1102, 1
      %v1343 = vsel %vm1318, %v1340, %v1342
      %v1344 = vrot.slane %v1106, 1
      %v1345 = vsel %vm1318, %v1342, %v1344
      %v1346 = vrot.slane %v1112, 1
      %v1347 = vsel %vm1318, %v1344, %v1346
      %v1348 = vrot.slane %v1116, 1
      %v1349 = vsel %vm1318, %v1346, %v1348
      %v1350 = vrot.slane %v1122, 1
      %v1351 = vsel %vm1318, %v1348, %v1350
      %v1352 = vrot.slane %v1126, 1
      %v1353 = vsel %vm1318, %v1350, %v1352
      %v1354 = vrot.slane %v1132, 1
      %v1355 = vsel %vm1318, %v1352, %v1354
      %v1356 = vrot.slane %v1136, 1
      %v1357 = vsel %vm1318, %v1354, %v1356
      %v1358 = vrot.slane %v1142, 1
      %v1359 = vsel %vm1318, %v1356, %v1358
      %1360 = vrot.lane.b32.xlu0 %v1321, 96
      %v1361 = vpop.permute.xlu0 %1360
      %1362 = vrot.lane.b32.xlu0 %v1323, 96
      %v1363 = vpop.permute.xlu0 %1362
      %1364 = vrot.lane.b32.xlu0 %v1325, 96
      %v1365 = vpop.permute.xlu0 %1364
      %1366 = vrot.lane.b32.xlu0 %v1327, 96
      %v1367 = vpop.permute.xlu0 %1366
      %1368 = vrot.lane.b32.xlu0 %v1329, 96
      %v1369 = vpop.permute.xlu0 %1368
      %1370 = vrot.lane.b32.xlu0 %v1331, 96
      %v1371 = vpop.permute.xlu0 %1370
      %1372 = vrot.lane.b32.xlu0 %v1333, 96
      %v1373 = vpop.permute.xlu0 %1372
      %1374 = vrot.lane.b32.xlu0 %v1335, 96
      %v1375 = vpop.permute.xlu0 %1374
      %1376 = vrot.lane.b32.xlu0 %v1337, 96
      %v1377 = vpop.permute.xlu0 %1376
      %1378 = vrot.lane.b32.xlu0 %v1339, 96
      %v1379 = vpop.permute.xlu0 %1378
      %1380 = vrot.lane.b32.xlu0 %v1341, 96
      %v1381 = vpop.permute.xlu0 %1380
      %1382 = vrot.lane.b32.xlu0 %v1343, 96
      %v1383 = vpop.permute.xlu0 %1382
      %1384 = vrot.lane.b32.xlu0 %v1345, 96
      %v1385 = vpop.permute.xlu0 %1384
      %1386 = vrot.lane.b32.xlu0 %v1347, 96
      %v1387 = vpop.permute.xlu0 %1386
      %1388 = vrot.lane.b32.xlu0 %v1349, 96
      %v1389 = vpop.permute.xlu0 %1388
      %1390 = vrot.lane.b32.xlu0 %v1351, 96
      %v1391 = vpop.permute.xlu0 %1390
      %1392 = vrot.lane.b32.xlu0 %v1353, 96
      %v1393 = vpop.permute.xlu0 %1392
      %1394 = vrot.lane.b32.xlu0 %v1355, 96
      %v1395 = vpop.permute.xlu0 %1394
      %1396 = vrot.lane.b32.xlu0 %v1357, 96
      %v1397 = vpop.permute.xlu0 %1396
      %1398 = vrot.lane.b32.xlu0 %v1359, 96
      %v1399 = vpop.permute.xlu0 %1398
      %v1420 = vadd.f32 %v1044, %v1361
      %v1421 = vadd.f32 %v1047, %v1363
      %v1422 = vadd.f32 %v1052, %v1365
      %v1423 = vadd.f32 %v1056, %v1367
      %v1424 = vadd.f32 %v1062, %v1369
      %v1425 = vadd.f32 %v1066, %v1371
      %v1426 = vadd.f32 %v1072, %v1373
      %v1427 = vadd.f32 %v1076, %v1375
      %v1428 = vadd.f32 %v1082, %v1377
      %v1429 = vadd.f32 %v1086, %v1379
      %v1430 = vadd.f32 %v1092, %v1381
      %v1431 = vadd.f32 %v1096, %v1383
      %v1432 = vadd.f32 %v1102, %v1385
      %v1433 = vadd.f32 %v1106, %v1387
      %v1434 = vadd.f32 %v1112, %v1389
      %v1435 = vadd.f32 %v1116, %v1391
      %v1436 = vadd.f32 %v1122, %v1393
      %v1437 = vadd.f32 %v1126, %v1395
      %v1438 = vadd.f32 %v1132, %v1397
      %v1439 = vadd.f32 %v1136, %v1399
      %vm1440 = vcmask 1045504
      %v1441 = vrot.slane %v1044, 2
      %v1442 = vrot.slane %v1047, 2
      %v1443 = vsel %vm1440, %v1441, %v1442
      %v1444 = vrot.slane %v1052, 2
      %v1445 = vsel %vm1440, %v1442, %v1444
      %v1446 = vrot.slane %v1056, 2
      %v1447 = vsel %vm1440, %v1444, %v1446
      %v1448 = vrot.slane %v1062, 2
      %v1449 = vsel %vm1440, %v1446, %v1448
      %v1450 = vrot.slane %v1066, 2
      %v1451 = vsel %vm1440, %v1448, %v1450
      %v1452 = vrot.slane %v1072, 2
      %v1453 = vsel %vm1440, %v1450, %v1452
      %v1454 = vrot.slane %v1076, 2
      %v1455 = vsel %vm1440, %v1452, %v1454
      %v1456 = vrot.slane %v1082, 2
      %v1457 = vsel %vm1440, %v1454, %v1456
      %v1458 = vrot.slane %v1086, 2
      %v1459 = vsel %vm1440, %v1456, %v1458
      %v1460 = vrot.slane %v1092, 2
      %v1461 = vsel %vm1440, %v1458, %v1460
      %v1462 = vrot.slane %v1096, 2
      %v1463 = vsel %vm1440, %v1460, %v1462
      %v1464 = vrot.slane %v1102, 2
      %v1465 = vsel %vm1440, %v1462, %v1464
      %v1466 = vrot.slane %v1106, 2
      %v1467 = vsel %vm1440, %v1464, %v1466
      %v1468 = vrot.slane %v1112, 2
      %v1469 = vsel %vm1440, %v1466, %v1468
      %v1470 = vrot.slane %v1116, 2
      %v1471 = vsel %vm1440, %v1468, %v1470
      %v1472 = vrot.slane %v1122, 2
      %v1473 = vsel %vm1440, %v1470, %v1472
      %v1474 = vrot.slane %v1126, 2
      %v1475 = vsel %vm1440, %v1472, %v1474
      %v1476 = vrot.slane %v1132, 2
      %v1477 = vsel %vm1440, %v1474, %v1476
      %v1478 = vrot.slane %v1136, 2
      %v1479 = vsel %vm1440, %v1476, %v1478
      %v1480 = vrot.slane %v1142, 2
      %v1481 = vsel %vm1440, %v1478, %v1480
      %1482 = vrot.lane.b32.xlu0 %v1443, 64
      %v1483 = vpop.permute.xlu0 %1482
      %1484 = vrot.lane.b32.xlu0 %v1445, 64
      %v1485 = vpop.permute.xlu0 %1484
      %1486 = vrot.lane.b32.xlu0 %v1447, 64
      %v1487 = vpop.permute.xlu0 %1486
      %1488 = vrot.lane.b32.xlu0 %v1449, 64
      %v1489 = vpop.permute.xlu0 %1488
      %1490 = vrot.lane.b32.xlu0 %v1451, 64
      %v1491 = vpop.permute.xlu0 %1490
      %1492 = vrot.lane.b32.xlu0 %v1453, 64
      %v1493 = vpop.permute.xlu0 %1492
      %1494 = vrot.lane.b32.xlu0 %v1455, 64
      %v1495 = vpop.permute.xlu0 %1494
      %1496 = vrot.lane.b32.xlu0 %v1457, 64
      %v1497 = vpop.permute.xlu0 %1496
      %1498 = vrot.lane.b32.xlu0 %v1459, 64
      %v1499 = vpop.permute.xlu0 %1498
      %1500 = vrot.lane.b32.xlu0 %v1461, 64
      %v1501 = vpop.permute.xlu0 %1500
      %1502 = vrot.lane.b32.xlu0 %v1463, 64
      %v1503 = vpop.permute.xlu0 %1502
      %1504 = vrot.lane.b32.xlu0 %v1465, 64
      %v1505 = vpop.permute.xlu0 %1504
      %1506 = vrot.lane.b32.xlu0 %v1467, 64
      %v1507 = vpop.permute.xlu0 %1506
      %1508 = vrot.lane.b32.xlu0 %v1469, 64
      %v1509 = vpop.permute.xlu0 %1508
      %1510 = vrot.lane.b32.xlu0 %v1471, 64
      %v1511 = vpop.permute.xlu0 %1510
      %1512 = vrot.lane.b32.xlu0 %v1473, 64
      %v1513 = vpop.permute.xlu0 %1512
      %1514 = vrot.lane.b32.xlu0 %v1475, 64
      %v1515 = vpop.permute.xlu0 %1514
      %1516 = vrot.lane.b32.xlu0 %v1477, 64
      %v1517 = vpop.permute.xlu0 %1516
      %1518 = vrot.lane.b32.xlu0 %v1479, 64
      %v1519 = vpop.permute.xlu0 %1518
      %1520 = vrot.lane.b32.xlu0 %v1481, 64
      %v1521 = vpop.permute.xlu0 %1520
      %v1542 = vadd.f32 %v1420, %v1483
      %v1543 = vadd.f32 %v1421, %v1485
      %v1544 = vadd.f32 %v1422, %v1487
      %v1545 = vadd.f32 %v1423, %v1489
      %v1546 = vadd.f32 %v1424, %v1491
      %v1547 = vadd.f32 %v1425, %v1493
      %v1548 = vadd.f32 %v1426, %v1495
      %v1549 = vadd.f32 %v1427, %v1497
      %v1550 = vadd.f32 %v1428, %v1499
      %v1551 = vadd.f32 %v1429, %v1501
      %v1552 = vadd.f32 %v1430, %v1503
      %v1553 = vadd.f32 %v1431, %v1505
      %v1554 = vadd.f32 %v1432, %v1507
      %v1555 = vadd.f32 %v1433, %v1509
      %v1556 = vadd.f32 %v1434, %v1511
      %v1557 = vadd.f32 %v1435, %v1513
      %v1558 = vadd.f32 %v1436, %v1515
      %v1559 = vadd.f32 %v1437, %v1517
      %v1560 = vadd.f32 %v1438, %v1519
      %v1561 = vadd.f32 %v1439, %v1521
      %1563 = vrot.lane.b32.xlu0 %v1052, 32
      %v1564 = vpop.permute.xlu0 %1563
      %1565 = vrot.lane.b32.xlu0 %v1056, 32
      %v1566 = vpop.permute.xlu0 %1565
      %1567 = vrot.lane.b32.xlu0 %v1062, 32
      %v1568 = vpop.permute.xlu0 %1567
      %1569 = vrot.lane.b32.xlu0 %v1066, 32
      %v1570 = vpop.permute.xlu0 %1569
      %1571 = vrot.lane.b32.xlu0 %v1072, 32
      %v1572 = vpop.permute.xlu0 %1571
      %1573 = vrot.lane.b32.xlu0 %v1076, 32
      %v1574 = vpop.permute.xlu0 %1573
      %1575 = vrot.lane.b32.xlu0 %v1082, 32
      %v1576 = vpop.permute.xlu0 %1575
      %1577 = vrot.lane.b32.xlu0 %v1086, 32
      %v1578 = vpop.permute.xlu0 %1577
      %1579 = vrot.lane.b32.xlu0 %v1092, 32
      %v1580 = vpop.permute.xlu0 %1579
      %1581 = vrot.lane.b32.xlu0 %v1096, 32
      %v1582 = vpop.permute.xlu0 %1581
      %1583 = vrot.lane.b32.xlu0 %v1102, 32
      %v1584 = vpop.permute.xlu0 %1583
      %1585 = vrot.lane.b32.xlu0 %v1106, 32
      %v1586 = vpop.permute.xlu0 %1585
      %1587 = vrot.lane.b32.xlu0 %v1112, 32
      %v1588 = vpop.permute.xlu0 %1587
      %1589 = vrot.lane.b32.xlu0 %v1116, 32
      %v1590 = vpop.permute.xlu0 %1589
      %1591 = vrot.lane.b32.xlu0 %v1122, 32
      %v1592 = vpop.permute.xlu0 %1591
      %1593 = vrot.lane.b32.xlu0 %v1126, 32
      %v1594 = vpop.permute.xlu0 %1593
      %1595 = vrot.lane.b32.xlu0 %v1132, 32
      %v1596 = vpop.permute.xlu0 %1595
      %1597 = vrot.lane.b32.xlu0 %v1136, 32
      %v1598 = vpop.permute.xlu0 %1597
      %1599 = vrot.lane.b32.xlu0 %v1142, 32
      %v1600 = vpop.permute.xlu0 %1599
      %1601 = vrot.lane.b32.xlu0 %v1146, 32
      %v1602 = vpop.permute.xlu0 %1601
      %v1623 = vadd.f32 %v1542, %v1564
      %v1624 = vadd.f32 %v1543, %v1566
      %v1625 = vadd.f32 %v1544, %v1568
      %v1626 = vadd.f32 %v1545, %v1570
      %v1627 = vadd.f32 %v1546, %v1572
      %v1628 = vadd.f32 %v1547, %v1574
      %v1629 = vadd.f32 %v1548, %v1576
      %v1630 = vadd.f32 %v1549, %v1578
      %v1631 = vadd.f32 %v1550, %v1580
      %v1632 = vadd.f32 %v1551, %v1582
      %v1633 = vadd.f32 %v1552, %v1584
      %v1634 = vadd.f32 %v1553, %v1586
      %v1635 = vadd.f32 %v1554, %v1588
      %v1636 = vadd.f32 %v1555, %v1590
      %v1637 = vadd.f32 %v1556, %v1592
      %v1638 = vadd.f32 %v1557, %v1594
      %v1639 = vadd.f32 %v1558, %v1596
      %v1640 = vadd.f32 %v1559, %v1598
      %v1641 = vadd.f32 %v1560, %v1600
      %v1642 = vadd.f32 %v1561, %v1602
      %v1664 = vrot.slane %v1054, 1
      %v1665 = vrot.slane %v1058, 1
      %v1666 = vsel %vm1318, %v1664, %v1665
      %v1667 = vrot.slane %v1064, 1
      %v1668 = vsel %vm1318, %v1665, %v1667
      %v1669 = vrot.slane %v1068, 1
      %v1670 = vsel %vm1318, %v1667, %v1669
      %v1671 = vrot.slane %v1074, 1
      %v1672 = vsel %vm1318, %v1669, %v1671
      %v1673 = vrot.slane %v1078, 1
      %v1674 = vsel %vm1318, %v1671, %v1673
      %v1675 = vrot.slane %v1084, 1
      %v1676 = vsel %vm1318, %v1673, %v1675
      %v1677 = vrot.slane %v1088, 1
      %v1678 = vsel %vm1318, %v1675, %v1677
      %v1679 = vrot.slane %v1094, 1
      %v1680 = vsel %vm1318, %v1677, %v1679
      %v1681 = vrot.slane %v1098, 1
      %v1682 = vsel %vm1318, %v1679, %v1681
      %v1683 = vrot.slane %v1104, 1
      %v1684 = vsel %vm1318, %v1681, %v1683
      %v1685 = vrot.slane %v1108, 1
      %v1686 = vsel %vm1318, %v1683, %v1685
      %v1687 = vrot.slane %v1114, 1
      %v1688 = vsel %vm1318, %v1685, %v1687
      %v1689 = vrot.slane %v1118, 1
      %v1690 = vsel %vm1318, %v1687, %v1689
      %v1691 = vrot.slane %v1124, 1
      %v1692 = vsel %vm1318, %v1689, %v1691
      %v1693 = vrot.slane %v1128, 1
      %v1694 = vsel %vm1318, %v1691, %v1693
      %v1695 = vrot.slane %v1134, 1
      %v1696 = vsel %vm1318, %v1693, %v1695
      %v1697 = vrot.slane %v1138, 1
      %v1698 = vsel %vm1318, %v1695, %v1697
      %v1699 = vrot.slane %v1144, 1
      %v1700 = vsel %vm1318, %v1697, %v1699
      %v1701 = vrot.slane %v1148, 1
      %v1702 = vsel %vm1318, %v1699, %v1701
      %v1703 = vrot.slane %v1153, 1
      %v1704 = vsel %vm1318, %v1701, %v1703
      %v1725 = vadd.f32 %v1623, %v1666
      %v1726 = vadd.f32 %v1624, %v1668
      %v1727 = vadd.f32 %v1625, %v1670
      %v1728 = vadd.f32 %v1626, %v1672
      %v1729 = vadd.f32 %v1627, %v1674
      %v1730 = vadd.f32 %v1628, %v1676
      %v1731 = vadd.f32 %v1629, %v1678
      %v1732 = vadd.f32 %v1630, %v1680
      %v1733 = vadd.f32 %v1631, %v1682
      %v1734 = vadd.f32 %v1632, %v1684
      %v1735 = vadd.f32 %v1633, %v1686
      %v1736 = vadd.f32 %v1634, %v1688
      %v1737 = vadd.f32 %v1635, %v1690
      %v1738 = vadd.f32 %v1636, %v1692
      %v1739 = vadd.f32 %v1637, %v1694
      %v1740 = vadd.f32 %v1638, %v1696
      %v1741 = vadd.f32 %v1639, %v1698
      %v1742 = vadd.f32 %v1640, %v1700
      %v1743 = vadd.f32 %v1641, %v1702
      %v1744 = vadd.f32 %v1642, %v1704
      %v1745 = vrot.slane %v1054, 2
      %v1746 = vrot.slane %v1058, 2
      %v1747 = vsel %vm1440, %v1745, %v1746
      %v1748 = vrot.slane %v1064, 2
      %v1749 = vsel %vm1440, %v1746, %v1748
      %v1750 = vrot.slane %v1068, 2
      %v1751 = vsel %vm1440, %v1748, %v1750
      %v1752 = vrot.slane %v1074, 2
      %v1753 = vsel %vm1440, %v1750, %v1752
      %v1754 = vrot.slane %v1078, 2
      %v1755 = vsel %vm1440, %v1752, %v1754
      %v1756 = vrot.slane %v1084, 2
      %v1757 = vsel %vm1440, %v1754, %v1756
      %v1758 = vrot.slane %v1088, 2
      %v1759 = vsel %vm1440, %v1756, %v1758
      %v1760 = vrot.slane %v1094, 2
      %v1761 = vsel %vm1440, %v1758, %v1760
      %v1762 = vrot.slane %v1098, 2
      %v1763 = vsel %vm1440, %v1760, %v1762
      %v1764 = vrot.slane %v1104, 2
      %v1765 = vsel %vm1440, %v1762, %v1764
      %v1766 = vrot.slane %v1108, 2
      %v1767 = vsel %vm1440, %v1764, %v1766
      %v1768 = vrot.slane %v1114, 2
      %v1769 = vsel %vm1440, %v1766, %v1768
      %v1770 = vrot.slane %v1118, 2
      %v1771 = vsel %vm1440, %v1768, %v1770
      %v1772 = vrot.slane %v1124, 2
      %v1773 = vsel %vm1440, %v1770, %v1772
      %v1774 = vrot.slane %v1128, 2
      %v1775 = vsel %vm1440, %v1772, %v1774
      %v1776 = vrot.slane %v1134, 2
      %v1777 = vsel %vm1440, %v1774, %v1776
      %v1778 = vrot.slane %v1138, 2
      %v1779 = vsel %vm1440, %v1776, %v1778
      %v1780 = vrot.slane %v1144, 2
      %v1781 = vsel %vm1440, %v1778, %v1780
      %v1782 = vrot.slane %v1148, 2
      %v1783 = vsel %vm1440, %v1780, %v1782
      %v1784 = vrot.slane %v1153, 2
      %v1785 = vsel %vm1440, %v1782, %v1784
      %1786 = vrot.lane.b32.xlu0 %v1747, 96
      %v1787 = vpop.permute.xlu0 %1786
      %1788 = vrot.lane.b32.xlu0 %v1749, 96
      %v1789 = vpop.permute.xlu0 %1788
      %1790 = vrot.lane.b32.xlu0 %v1751, 96
      %v1791 = vpop.permute.xlu0 %1790
      %1792 = vrot.lane.b32.xlu0 %v1753, 96
      %v1793 = vpop.permute.xlu0 %1792
      %1794 = vrot.lane.b32.xlu0 %v1755, 96
      %v1795 = vpop.permute.xlu0 %1794
      %1796 = vrot.lane.b32.xlu0 %v1757, 96
      %v1797 = vpop.permute.xlu0 %1796
      %1798 = vrot.lane.b32.xlu0 %v1759, 96
      %v1799 = vpop.permute.xlu0 %1798
      %1800 = vrot.lane.b32.xlu0 %v1761, 96
      %v1801 = vpop.permute.xlu0 %1800
      %1802 = vrot.lane.b32.xlu0 %v1763, 96
      %v1803 = vpop.permute.xlu0 %1802
      %1804 = vrot.lane.b32.xlu0 %v1765, 96
      %v1805 = vpop.permute.xlu0 %1804
      %1806 = vrot.lane.b32.xlu0 %v1767, 96
      %v1807 = vpop.permute.xlu0 %1806
      %1808 = vrot.lane.b32.xlu0 %v1769, 96
      %v1809 = vpop.permute.xlu0 %1808
      %1810 = vrot.lane.b32.xlu0 %v1771, 96
      %v1811 = vpop.permute.xlu0 %1810
      %1812 = vrot.lane.b32.xlu0 %v1773, 96
      %v1813 = vpop.permute.xlu0 %1812
      %1814 = vrot.lane.b32.xlu0 %v1775, 96
      %v1815 = vpop.permute.xlu0 %1814
      %1816 = vrot.lane.b32.xlu0 %v1777, 96
      %v1817 = vpop.permute.xlu0 %1816
      %1818 = vrot.lane.b32.xlu0 %v1779, 96
      %v1819 = vpop.permute.xlu0 %1818
      %1820 = vrot.lane.b32.xlu0 %v1781, 96
      %v1821 = vpop.permute.xlu0 %1820
      %1822 = vrot.lane.b32.xlu0 %v1783, 96
      %v1823 = vpop.permute.xlu0 %1822
      %1824 = vrot.lane.b32.xlu0 %v1785, 96
      %v1825 = vpop.permute.xlu0 %1824
      %v1846 = vadd.f32 %v1725, %v1787
      %v1847 = vadd.f32 %v1726, %v1789
      %v1848 = vadd.f32 %v1727, %v1791
      %v1849 = vadd.f32 %v1728, %v1793
      %v1850 = vadd.f32 %v1729, %v1795
      %v1851 = vadd.f32 %v1730, %v1797
      %v1852 = vadd.f32 %v1731, %v1799
      %v1853 = vadd.f32 %v1732, %v1801
      %v1854 = vadd.f32 %v1733, %v1803
      %v1855 = vadd.f32 %v1734, %v1805
      %v1856 = vadd.f32 %v1735, %v1807
      %v1857 = vadd.f32 %v1736, %v1809
      %v1858 = vadd.f32 %v1737, %v1811
      %v1859 = vadd.f32 %v1738, %v1813
      %v1860 = vadd.f32 %v1739, %v1815
      %v1861 = vadd.f32 %v1740, %v1817
      %v1862 = vadd.f32 %v1741, %v1819
      %v1863 = vadd.f32 %v1742, %v1821
      %v1864 = vadd.f32 %v1743, %v1823
      %v1865 = vadd.f32 %v1744, %v1825
      %1867 = vrot.lane.b32.xlu0 %v1064, 64
      %v1868 = vpop.permute.xlu0 %1867
      %1869 = vrot.lane.b32.xlu0 %v1068, 64
      %v1870 = vpop.permute.xlu0 %1869
      %1871 = vrot.lane.b32.xlu0 %v1074, 64
      %v1872 = vpop.permute.xlu0 %1871
      %1873 = vrot.lane.b32.xlu0 %v1078, 64
      %v1874 = vpop.permute.xlu0 %1873
      %1875 = vrot.lane.b32.xlu0 %v1084, 64
      %v1876 = vpop.permute.xlu0 %1875
      %1877 = vrot.lane.b32.xlu0 %v1088, 64
      %v1878 = vpop.permute.xlu0 %1877
      %1879 = vrot.lane.b32.xlu0 %v1094, 64
      %v1880 = vpop.permute.xlu0 %1879
      %1881 = vrot.lane.b32.xlu0 %v1098, 64
      %v1882 = vpop.permute.xlu0 %1881
      %1883 = vrot.lane.b32.xlu0 %v1104, 64
      %v1884 = vpop.permute.xlu0 %1883
      %1885 = vrot.lane.b32.xlu0 %v1108, 64
      %v1886 = vpop.permute.xlu0 %1885
      %1887 = vrot.lane.b32.xlu0 %v1114, 64
      %v1888 = vpop.permute.xlu0 %1887
      %1889 = vrot.lane.b32.xlu0 %v1118, 64
      %v1890 = vpop.permute.xlu0 %1889
      %1891 = vrot.lane.b32.xlu0 %v1124, 64
      %v1892 = vpop.permute.xlu0 %1891
      %1893 = vrot.lane.b32.xlu0 %v1128, 64
      %v1894 = vpop.permute.xlu0 %1893
      %1895 = vrot.lane.b32.xlu0 %v1134, 64
      %v1896 = vpop.permute.xlu0 %1895
      %1897 = vrot.lane.b32.xlu0 %v1138, 64
      %v1898 = vpop.permute.xlu0 %1897
      %1899 = vrot.lane.b32.xlu0 %v1144, 64
      %v1900 = vpop.permute.xlu0 %1899
      %1901 = vrot.lane.b32.xlu0 %v1148, 64
      %v1902 = vpop.permute.xlu0 %1901
      %1903 = vrot.lane.b32.xlu0 %v1153, 64
      %v1904 = vpop.permute.xlu0 %1903
      %1905 = vrot.lane.b32.xlu0 %v1156, 64
      %v1906 = vpop.permute.xlu0 %1905
      %v1927 = vadd.f32 %v1846, %v1868
      %v1928 = vadd.f32 %v1847, %v1870
      %v1929 = vadd.f32 %v1848, %v1872
      %v1930 = vadd.f32 %v1849, %v1874
      %v1931 = vadd.f32 %v1850, %v1876
      %v1932 = vadd.f32 %v1851, %v1878
      %v1933 = vadd.f32 %v1852, %v1880
      %v1934 = vadd.f32 %v1853, %v1882
      %v1935 = vadd.f32 %v1854, %v1884
      %v1936 = vadd.f32 %v1855, %v1886
      %v1937 = vadd.f32 %v1856, %v1888
      %v1938 = vadd.f32 %v1857, %v1890
      %v1939 = vadd.f32 %v1858, %v1892
      %v1940 = vadd.f32 %v1859, %v1894
      %v1941 = vadd.f32 %v1860, %v1896
      %v1942 = vadd.f32 %v1861, %v1898
      %v1943 = vadd.f32 %v1862, %v1900
      %v1944 = vadd.f32 %v1863, %v1902
      %v1945 = vadd.f32 %v1864, %v1904
      %v1946 = vadd.f32 %v1865, %v1906
      %v1948 = vrot.slane %v1156, 1
      %v1949 = vsel %vm1318, %v1703, %v1948
      %v1950 = vrot.slane %v1161, 1
      %v1951 = vsel %vm1318, %v1948, %v1950
      %1952 = vrot.lane.b32.xlu0 %v1670, 32
      %v1953 = vpop.permute.xlu0 %1952
      %1954 = vrot.lane.b32.xlu0 %v1672, 32
      %v1955 = vpop.permute.xlu0 %1954
      %1956 = vrot.lane.b32.xlu0 %v1674, 32
      %v1957 = vpop.permute.xlu0 %1956
      %1958 = vrot.lane.b32.xlu0 %v1676, 32
      %v1959 = vpop.permute.xlu0 %1958
      %1960 = vrot.lane.b32.xlu0 %v1678, 32
      %v1961 = vpop.permute.xlu0 %1960
      %1962 = vrot.lane.b32.xlu0 %v1680, 32
      %v1963 = vpop.permute.xlu0 %1962
      %1964 = vrot.lane.b32.xlu0 %v1682, 32
      %v1965 = vpop.permute.xlu0 %1964
      %1966 = vrot.lane.b32.xlu0 %v1684, 32
      %v1967 = vpop.permute.xlu0 %1966
      %1968 = vrot.lane.b32.xlu0 %v1686, 32
      %v1969 = vpop.permute.xlu0 %1968
      %1970 = vrot.lane.b32.xlu0 %v1688, 32
      %v1971 = vpop.permute.xlu0 %1970
      %1972 = vrot.lane.b32.xlu0 %v1690, 32
      %v1973 = vpop.permute.xlu0 %1972
      %1974 = vrot.lane.b32.xlu0 %v1692, 32
      %v1975 = vpop.permute.xlu0 %1974
      %1976 = vrot.lane.b32.xlu0 %v1694, 32
      %v1977 = vpop.permute.xlu0 %1976
      %1978 = vrot.lane.b32.xlu0 %v1696, 32
      %v1979 = vpop.permute.xlu0 %1978
      %1980 = vrot.lane.b32.xlu0 %v1698, 32
      %v1981 = vpop.permute.xlu0 %1980
      %1982 = vrot.lane.b32.xlu0 %v1700, 32
      %v1983 = vpop.permute.xlu0 %1982
      %1984 = vrot.lane.b32.xlu0 %v1702, 32
      %v1985 = vpop.permute.xlu0 %1984
      %1986 = vrot.lane.b32.xlu0 %v1704, 32
      %v1987 = vpop.permute.xlu0 %1986
      %1988 = vrot.lane.b32.xlu0 %v1949, 32
      %v1989 = vpop.permute.xlu0 %1988
      %1990 = vrot.lane.b32.xlu0 %v1951, 32
      %v1991 = vpop.permute.xlu0 %1990
      %v2012 = vadd.f32 %v1927, %v1953
      %v2013 = vadd.f32 %v1928, %v1955
      %v2014 = vadd.f32 %v1929, %v1957
      %v2015 = vadd.f32 %v1930, %v1959
      %v2016 = vadd.f32 %v1931, %v1961
      %v2017 = vadd.f32 %v1932, %v1963
      %v2018 = vadd.f32 %v1933, %v1965
      %v2019 = vadd.f32 %v1934, %v1967
      %v2020 = vadd.f32 %v1935, %v1969
      %v2021 = vadd.f32 %v1936, %v1971
      %v2022 = vadd.f32 %v1937, %v1973
      %v2023 = vadd.f32 %v1938, %v1975
      %v2024 = vadd.f32 %v1939, %v1977
      %v2025 = vadd.f32 %v1940, %v1979
      %v2026 = vadd.f32 %v1941, %v1981
      %v2027 = vadd.f32 %v1942, %v1983
      %v2028 = vadd.f32 %v1943, %v1985
      %v2029 = vadd.f32 %v1944, %v1987
      %v2030 = vadd.f32 %v1945, %v1989
      %v2031 = vadd.f32 %v1946, %v1991
      %v2053 = vrot.slane %v1212, 2
      %v2054 = vrot.slane %v1215, 2
      %v2055 = vsel %vm1440, %v2053, %v2054
      %v2056 = vrot.slane %v1220, 2
      %v2057 = vsel %vm1440, %v2054, %v2056
      %v2058 = vrot.slane %v1223, 2
      %v2059 = vsel %vm1440, %v2056, %v2058
      %v2060 = vrot.slane %v1228, 2
      %v2061 = vsel %vm1440, %v2058, %v2060
      %v2062 = vrot.slane %v1231, 2
      %v2063 = vsel %vm1440, %v2060, %v2062
      %v2064 = vrot.slane %v1236, 2
      %v2065 = vsel %vm1440, %v2062, %v2064
      %v2066 = vrot.slane %v1239, 2
      %v2067 = vsel %vm1440, %v2064, %v2066
      %v2068 = vrot.slane %v1244, 2
      %v2069 = vsel %vm1440, %v2066, %v2068
      %v2070 = vrot.slane %v1247, 2
      %v2071 = vsel %vm1440, %v2068, %v2070
      %v2072 = vrot.slane %v1252, 2
      %v2073 = vsel %vm1440, %v2070, %v2072
      %v2074 = vrot.slane %v1255, 2
      %v2075 = vsel %vm1440, %v2072, %v2074
      %v2076 = vrot.slane %v1260, 2
      %v2077 = vsel %vm1440, %v2074, %v2076
      %v2078 = vrot.slane %v1263, 2
      %v2079 = vsel %vm1440, %v2076, %v2078
      %v2080 = vrot.slane %v1268, 2
      %v2081 = vsel %vm1440, %v2078, %v2080
      %v2082 = vrot.slane %v1271, 2
      %v2083 = vsel %vm1440, %v2080, %v2082
      %v2084 = vrot.slane %v1276, 2
      %v2085 = vsel %vm1440, %v2082, %v2084
      %v2086 = vrot.slane %v1279, 2
      %v2087 = vsel %vm1440, %v2084, %v2086
      %v2088 = vrot.slane %v1284, 2
      %v2089 = vsel %vm1440, %v2086, %v2088
      %v2090 = vrot.slane %v1287, 2
      %v2091 = vsel %vm1440, %v2088, %v2090
      %v2092 = vrot.slane %v1292, 2
      %v2093 = vsel %vm1440, %v2090, %v2092
      %v2114 = vadd.f32 %v2012, %v2055
      %v2115 = vadd.f32 %v2013, %v2057
      %v2116 = vadd.f32 %v2014, %v2059
      %v2117 = vadd.f32 %v2015, %v2061
      %v2118 = vadd.f32 %v2016, %v2063
      %v2119 = vadd.f32 %v2017, %v2065
      %v2120 = vadd.f32 %v2018, %v2067
      %v2121 = vadd.f32 %v2019, %v2069
      %v2122 = vadd.f32 %v2020, %v2071
      %v2123 = vadd.f32 %v2021, %v2073
      %v2124 = vadd.f32 %v2022, %v2075
      %v2125 = vadd.f32 %v2023, %v2077
      %v2126 = vadd.f32 %v2024, %v2079
      %v2127 = vadd.f32 %v2025, %v2081
      %v2128 = vadd.f32 %v2026, %v2083
      %v2129 = vadd.f32 %v2027, %v2085
      %v2130 = vadd.f32 %v2028, %v2087
      %v2131 = vadd.f32 %v2029, %v2089
      %v2132 = vadd.f32 %v2030, %v2091
      %v2133 = vadd.f32 %v2031, %v2093
      %v2134 = vld [vmem:[%s7] sm:$0x1]
      %v2136 = vlaneseq
      %v2137 = vshrl.u32 %v2136, 7
      %v2138 = vsub.s32 0, %v2137
      %v2139 = vrot.slane %v2134, %v2138
      %v2141 = vadd.f32 %v2114, %v2139
      %v2142 = vadd.f32 %v2115, %v2139
      %v2143 = vadd.f32 %v2116, %v2139
      %v2144 = vadd.f32 %v2117, %v2139
      %v2145 = vadd.f32 %v2118, %v2139
      %v2146 = vadd.f32 %v2119, %v2139
      %v2147 = vadd.f32 %v2120, %v2139
      %v2148 = vadd.f32 %v2121, %v2139
      %v2149 = vadd.f32 %v2122, %v2139
      %v2150 = vadd.f32 %v2123, %v2139
      %v2151 = vadd.f32 %v2124, %v2139
      %v2152 = vadd.f32 %v2125, %v2139
      %v2153 = vadd.f32 %v2126, %v2139
      %v2154 = vadd.f32 %v2127, %v2139
      %v2155 = vadd.f32 %v2128, %v2139
      %v2156 = vadd.f32 %v2129, %v2139
      %v2157 = vadd.f32 %v2130, %v2139
      %v2158 = vadd.f32 %v2131, %v2139
      %v2159 = vadd.f32 %v2132, %v2139
      %v2160 = vadd.f32 %v2133, %v2139
      %v2161 = vmul.f32 %v2141, %v637
      %v2162 = vmul.f32 %v2142, %v642
      %v2163 = vmul.f32 %v2143, %v647
      %v2164 = vmul.f32 %v2144, %v652
      %v2165 = vmul.f32 %v2145, %v657
      %v2166 = vmul.f32 %v2146, %v662
      %v2167 = vmul.f32 %v2147, %v667
      %v2168 = vmul.f32 %v2148, %v672
      %v2169 = vmul.f32 %v2149, %v677
      %v2170 = vmul.f32 %v2150, %v682
      %v2171 = vmul.f32 %v2151, %v687
      %v2172 = vmul.f32 %v2152, %v692
      %v2173 = vmul.f32 %v2153, %v697
      %v2174 = vmul.f32 %v2154, %v702
      %v2175 = vmul.f32 %v2155, %v707
      %v2176 = vmul.f32 %v2156, %v712
      %v2177 = vmul.f32 %v2157, %v717
      %v2178 = vmul.f32 %v2158, %v722
      %v2179 = vmul.f32 %v2159, %v727
      %v2180 = vmul.f32 %v2160, %v732
      %vm2181 = vcmask 261120
      %v2182 = vsel %vm2181, %v2161, 0.0
      %v2183 = vsel %vm2181, %v2162, 0.0
      %v2184 = vsel %vm2181, %v2163, 0.0
      %v2185 = vsel %vm2181, %v2164, 0.0
      %v2186 = vsel %vm2181, %v2165, 0.0
      %v2187 = vsel %vm2181, %v2166, 0.0
      %v2188 = vsel %vm2181, %v2167, 0.0
      %v2189 = vsel %vm2181, %v2168, 0.0
      %v2190 = vsel %vm2181, %v2169, 0.0
      %v2191 = vsel %vm2181, %v2170, 0.0
      %v2192 = vsel %vm2181, %v2171, 0.0
      %v2193 = vsel %vm2181, %v2172, 0.0
      %v2194 = vsel %vm2181, %v2173, 0.0
      %v2195 = vsel %vm2181, %v2174, 0.0
      %v2196 = vsel %vm2181, %v2175, 0.0
      %v2197 = vsel %vm2181, %v2176, 0.0
      %v2198 = vsel %vm2181, %v2177, 0.0
      %v2199 = vsel %vm2181, %v2178, 0.0
      %v2200 = vsel %vm2181, %v2179, 0.0
      %v2201 = vsel %vm2181, %v2180, 0.0
      %2202 = vst [vmem:[%s305] sm:$0xff] %v2182
      %2203 = vst [vmem:[%s305 + $0x8] sm:$0xff] %v2183
      %2204 = vst [vmem:[%s305 + $0x10] sm:$0xff] %v2184
      %2205 = vst [vmem:[%s305 + $0x18] sm:$0xff] %v2185
      %2206 = vst [vmem:[%s305 + $0x20] sm:$0xff] %v2186
      %2207 = vst [vmem:[%s305 + $0x28] sm:$0xff] %v2187
      %2208 = vst [vmem:[%s305 + $0x30] sm:$0xff] %v2188
      %2209 = vst [vmem:[%s305 + $0x38] sm:$0xff] %v2189
      %2210 = vst [vmem:[%s305 + $0x40] sm:$0xff] %v2190
      %2211 = vst [vmem:[%s305 + $0x48] sm:$0xff] %v2191
      %2212 = vst [vmem:[%s305 + $0x50] sm:$0xff] %v2192
      %2213 = vst [vmem:[%s305 + $0x58] sm:$0xff] %v2193
      %2214 = vst [vmem:[%s305 + $0x60] sm:$0xff] %v2194
      %2215 = vst [vmem:[%s305 + $0x68] sm:$0xff] %v2195
      %2216 = vst [vmem:[%s305 + $0x70] sm:$0xff] %v2196
      %2217 = vst [vmem:[%s305 + $0x78] sm:$0xff] %v2197
      %2218 = vst [vmem:[%s305 + $0x80] sm:$0xff] %v2198
      %2219 = vst [vmem:[%s305 + $0x88] sm:$0xff] %v2199
      %2220 = vst [vmem:[%s305 + $0x90] sm:$0xff] %v2200
      %2221 = vst [vmem:[%s305 + $0x98] sm:$0xff] %v2201
      %p2222 = scmp.lt.s32.totalorder %s19, 1
      %s2223 = scalar_select %p2222, %s19, 1
      %s2224 = smul.addr %s2223, 20
      %s2225 = smul.addr %s2224, 8
      %s2226 = scalar_lea.vmem %s8, %s2225
      // Predicated region
      $region53: #{dense_block_forward.4} parent=51 // pred_check
        %p2227 = pneg %p210
      $region54: #{dense_block_forward.4} parent=51 // pred_check_branch
        %2229 = sbr.rel (%p2227) target = $region56
      $region55: #{dense_block_forward.4} parent=51 // pred_region
        _
      $region56: #{dense_block_forward.4} parent=51 // pred_fallthru
        _
    $region52: #{dense_block_forward.4} parent=5 // pred_fallthru
      _
    %p2230 = scmp.le.s32.totalorder 2, %s14
    // Predicated region
    $region57: #{dense_block_forward.4} parent=5 // pred_check
      %p2231 = pneg %p2230
    $region58: #{dense_block_forward.4} parent=5 // pred_check_branch
      %2233 = sbr.rel (%p2231) target = $region60
    $region59: #{dense_block_forward.4} parent=5 // pred_region
      %s2234 = ssub.s32 %s14, 2
      // Predicated region
      $region61: #{dense_block_forward.4} parent=59 // pred_check
        %p2235 = pneg %p216
      $region62: #{dense_block_forward.4} parent=59 // pred_check_branch
        %2237 = sbr.rel (%p2235) target = $region64
      $region63: #{dense_block_forward.4} parent=59 // pred_region
        %p2238 = scmp.lt.s32.totalorder %s20, 1
        %s2239 = scalar_select %p2238, %s20, 1
        %s2240 = smul.addr %s2239, 20
        %s2241 = smul.addr %s2240, 8
        %s2242 = scalar_lea.vmem %s8, %s2241
      $region64: #{dense_block_forward.4} parent=59 // pred_fallthru
        _
    $region60: #{dense_block_forward.4} parent=5 // pred_fallthru
      _
  $region6: #{dense_block_forward.4} parent=0 // loop_footer
    %s18 = sadd.s32 1, %s14
  $region7: #{dense_block_forward.4} parent=0 // loop_footer_branch
    %13 = sbr.rel target = $region3
  $region8: #{dense_block_forward.4} parent=0 // loop_exit
    _

// kernel: dense_block_forward.5
$region0: #{dense_block_forward.5}
  #allocation0 [shape = 'u32[]', space=smem, size = 0x4, offset = 0x4, fixed_abs, tag = 'smem constant byte address 0x4 - core index']
  #allocation1 [shape = 'u32[144,128]{1,0:T(1,128)}', space=vmem, size = 0x12000, scoped, tag = 'internal scratch']
  %s0 = inlined_call_operand.vmem [shape: f32[2,160,96], index: 0, kind: input, shape index: {}]
  %s1 = inlined_call_operand.vmem [shape: f32[160,1], index: 1, kind: input, shape index: {}]
  %s2 = inlined_call_operand.vmem [shape: f32[1,96], index: 2, kind: input, shape index: {}]
  %s3 = inlined_call_operand.vmem [shape: f32[1,96], index: 3, kind: input, shape index: {}]
  %s4 = inlined_call_operand.vmem [shape: bf16[96,128], index: 4, kind: input, shape index: {}]
  %s5 = inlined_call_operand.vmem [shape: f32[1,128], index: 5, kind: input, shape index: {}]
  %s6 = inlined_call_operand.vmem [shape: bf16[128,288], index: 6, kind: input, shape index: {}]
  %s7 = inlined_call_operand.vmem [shape: f32[1,32], index: 7, kind: input, shape index: {}]
  %s8 = inlined_call_operand.vmem [shape: f32[2,160,128], index: 8, kind: output, shape index: {}]
  %s9 = sld [smem:[#allocation0]]
  $region65: #{dense_block_forward.5} parent=0
    _
  %s11 = ssub.s32 1, %s9
  %s12 = scalar_select 0, %s11, %s9
  loop: start=0, step=1, limit=4
  $region2: #{dense_block_forward.5} parent=0 // loop_pre_header
    _
  $region3: #{dense_block_forward.5} parent=0 // loop_header
    %s14 = sphi 0, %s18
    %p15 = scmp.ge.s32.totalorder %s14, 4
    %s24 = sphi 0, %s26
    %s27 = sphi 0, %s24
    %s28 = sphi 0, %s27
    %s44 = sphi 0, %s28
    %s48 = sphi 0, %s48
    %s50 = sphi 0, %s48
    %s51 = sphi 0, %s50
    %s65 = sphi 0, %s51
    %s69 = sphi 0, %s69
    %s71 = sphi 0, %s69
    %s72 = sphi 0, %s71
    %s86 = sphi 0, %s72
    %s90 = sphi 0, %s90
    %s92 = sphi 0, %s90
    %s93 = sphi 0, %s92
    %s107 = sphi 0, %s93
    %s111 = sphi 0, %s111
    %s113 = sphi 0, %s111
    %s114 = sphi 0, %s113
    %s128 = sphi 0, %s114
    %s132 = sphi 0, %s132
    %s134 = sphi 0, %s132
    %s135 = sphi 0, %s134
    %s149 = sphi 0, %s135
    %s153 = sphi 0, %s153
    %s155 = sphi 0, %s153
    %s156 = sphi 0, %s155
    %s170 = sphi 0, %s156
    %s174 = sphi 0, %s174
    %s176 = sphi 0, %s174
    %s177 = sphi 0, %s176
    %s191 = sphi 0, %s177
    %s197 = sphi 0, %s199
    %s200 = sphi 0, %s197
    %s201 = sphi 0, %s200
    %s217 = sphi 0, %s201
  $region4: #{dense_block_forward.5} parent=0 // loop_header_branch
    %17 = sbr.rel (%p15) target = $region8
  $region5: #{dense_block_forward.5} parent=0 // loop_body
    %s19 = ssub.s32 %s14, 1
    %s20 = ssub.s32 %s14, 2
    %s21 = sadd.s32 %s14, 1
    %s22 = ssub.s32 %s14, %s21
    %p23 = scmp.eq.s32.totalorder %s22, 0
    %s25 = sadd.s32 %s24, 1
    %s26 = scalar_select %p23, %s24, %s25
    %p29 = pneg %p23
    %p30 = scmp.eq.s32.totalorder %s14, 1
    %p31 = por %p29, %p30
    %p32 = scmp.ne.s32.totalorder %s24, %s27
    %p33 = scmp.eq.s32.totalorder %s14, 0
    %p34 = por %p32, %p33
    %p35 = scmp.ne.s32.totalorder %s24, %s27
    %p36 = scmp.eq.s32.totalorder %s19, 1
    %p37 = por %p35, %p36
    %p38 = scmp.ne.s32.totalorder %s27, %s28
    %p39 = scmp.eq.s32.totalorder %s19, 0
    %p40 = por %p38, %p39
    %p41 = scmp.ne.s32.totalorder %s27, %s28
    %p42 = scmp.eq.s32.totalorder %s20, 1
    %p43 = por %p41, %p42
    %p45 = scmp.ne.s32.totalorder %s28, %s44
    %p46 = scmp.eq.s32.totalorder %s20, 0
    %p47 = por %p45, %p46
    %s49 = sadd.s32 %s48, 1
    %p52 = scmp.eq.s32.totalorder %s14, 1
    %p53 = scmp.ne.s32.totalorder %s48, %s50
    %p54 = scmp.eq.s32.totalorder %s14, 0
    %p55 = por %p53, %p54
    %p56 = scmp.ne.s32.totalorder %s48, %s50
    %p57 = scmp.eq.s32.totalorder %s19, 1
    %p58 = por %p56, %p57
    %p59 = scmp.ne.s32.totalorder %s50, %s51
    %p60 = scmp.eq.s32.totalorder %s19, 0
    %p61 = por %p59, %p60
    %p62 = scmp.ne.s32.totalorder %s50, %s51
    %p63 = scmp.eq.s32.totalorder %s20, 1
    %p64 = por %p62, %p63
    %p66 = scmp.ne.s32.totalorder %s51, %s65
    %p67 = scmp.eq.s32.totalorder %s20, 0
    %p68 = por %p66, %p67
    %s70 = sadd.s32 %s69, 1
    %p73 = scmp.eq.s32.totalorder %s14, 1
    %p74 = scmp.ne.s32.totalorder %s69, %s71
    %p75 = scmp.eq.s32.totalorder %s14, 0
    %p76 = por %p74, %p75
    %p77 = scmp.ne.s32.totalorder %s69, %s71
    %p78 = scmp.eq.s32.totalorder %s19, 1
    %p79 = por %p77, %p78
    %p80 = scmp.ne.s32.totalorder %s71, %s72
    %p81 = scmp.eq.s32.totalorder %s19, 0
    %p82 = por %p80, %p81
    %p83 = scmp.ne.s32.totalorder %s71, %s72
    %p84 = scmp.eq.s32.totalorder %s20, 1
    %p85 = por %p83, %p84
    %p87 = scmp.ne.s32.totalorder %s72, %s86
    %p88 = scmp.eq.s32.totalorder %s20, 0
    %p89 = por %p87, %p88
    %s91 = sadd.s32 %s90, 1
    %p94 = scmp.eq.s32.totalorder %s14, 1
    %p95 = scmp.ne.s32.totalorder %s90, %s92
    %p96 = scmp.eq.s32.totalorder %s14, 0
    %p97 = por %p95, %p96
    %p98 = scmp.ne.s32.totalorder %s90, %s92
    %p99 = scmp.eq.s32.totalorder %s19, 1
    %p100 = por %p98, %p99
    %p101 = scmp.ne.s32.totalorder %s92, %s93
    %p102 = scmp.eq.s32.totalorder %s19, 0
    %p103 = por %p101, %p102
    %p104 = scmp.ne.s32.totalorder %s92, %s93
    %p105 = scmp.eq.s32.totalorder %s20, 1
    %p106 = por %p104, %p105
    %p108 = scmp.ne.s32.totalorder %s93, %s107
    %p109 = scmp.eq.s32.totalorder %s20, 0
    %p110 = por %p108, %p109
    %s112 = sadd.s32 %s111, 1
    %p115 = scmp.eq.s32.totalorder %s14, 1
    %p116 = scmp.ne.s32.totalorder %s111, %s113
    %p117 = scmp.eq.s32.totalorder %s14, 0
    %p118 = por %p116, %p117
    %p119 = scmp.ne.s32.totalorder %s111, %s113
    %p120 = scmp.eq.s32.totalorder %s19, 1
    %p121 = por %p119, %p120
    %p122 = scmp.ne.s32.totalorder %s113, %s114
    %p123 = scmp.eq.s32.totalorder %s19, 0
    %p124 = por %p122, %p123
    %p125 = scmp.ne.s32.totalorder %s113, %s114
    %p126 = scmp.eq.s32.totalorder %s20, 1
    %p127 = por %p125, %p126
    %p129 = scmp.ne.s32.totalorder %s114, %s128
    %p130 = scmp.eq.s32.totalorder %s20, 0
    %p131 = por %p129, %p130
    %s133 = sadd.s32 %s132, 1
    %p136 = scmp.eq.s32.totalorder %s14, 1
    %p137 = scmp.ne.s32.totalorder %s132, %s134
    %p138 = scmp.eq.s32.totalorder %s14, 0
    %p139 = por %p137, %p138
    %p140 = scmp.ne.s32.totalorder %s132, %s134
    %p141 = scmp.eq.s32.totalorder %s19, 1
    %p142 = por %p140, %p141
    %p143 = scmp.ne.s32.totalorder %s134, %s135
    %p144 = scmp.eq.s32.totalorder %s19, 0
    %p145 = por %p143, %p144
    %p146 = scmp.ne.s32.totalorder %s134, %s135
    %p147 = scmp.eq.s32.totalorder %s20, 1
    %p148 = por %p146, %p147
    %p150 = scmp.ne.s32.totalorder %s135, %s149
    %p151 = scmp.eq.s32.totalorder %s20, 0
    %p152 = por %p150, %p151
    %s154 = sadd.s32 %s153, 1
    %p157 = scmp.eq.s32.totalorder %s14, 1
    %p158 = scmp.ne.s32.totalorder %s153, %s155
    %p159 = scmp.eq.s32.totalorder %s14, 0
    %p160 = por %p158, %p159
    %p161 = scmp.ne.s32.totalorder %s153, %s155
    %p162 = scmp.eq.s32.totalorder %s19, 1
    %p163 = por %p161, %p162
    %p164 = scmp.ne.s32.totalorder %s155, %s156
    %p165 = scmp.eq.s32.totalorder %s19, 0
    %p166 = por %p164, %p165
    %p167 = scmp.ne.s32.totalorder %s155, %s156
    %p168 = scmp.eq.s32.totalorder %s20, 1
    %p169 = por %p167, %p168
    %p171 = scmp.ne.s32.totalorder %s156, %s170
    %p172 = scmp.eq.s32.totalorder %s20, 0
    %p173 = por %p171, %p172
    %s175 = sadd.s32 %s174, 1
    %p178 = scmp.eq.s32.totalorder %s14, 1
    %p179 = scmp.ne.s32.totalorder %s174, %s176
    %p180 = scmp.eq.s32.totalorder %s14, 0
    %p181 = por %p179, %p180
    %p182 = scmp.ne.s32.totalorder %s174, %s176
    %p183 = scmp.eq.s32.totalorder %s19, 1
    %p184 = por %p182, %p183
    %p185 = scmp.ne.s32.totalorder %s176, %s177
    %p186 = scmp.eq.s32.totalorder %s19, 0
    %p187 = por %p185, %p186
    %p188 = scmp.ne.s32.totalorder %s176, %s177
    %p189 = scmp.eq.s32.totalorder %s20, 1
    %p190 = por %p188, %p189
    %p192 = scmp.ne.s32.totalorder %s177, %s191
    %p193 = scmp.eq.s32.totalorder %s20, 0
    %p194 = por %p192, %p193
    %s195 = ssub.s32 %s14, %s21
    %p196 = scmp.eq.s32.totalorder %s195, 0
    %s198 = sadd.s32 %s197, 1
    %s199 = scalar_select %p196, %s197, %s198
    %p202 = pneg %p196
    %p203 = scmp.eq.s32.totalorder %s14, 1
    %p204 = por %p202, %p203
    %p205 = scmp.ne.s32.totalorder %s197, %s200
    %p206 = scmp.eq.s32.totalorder %s14, 0
    %p207 = por %p205, %p206
    %p208 = scmp.ne.s32.totalorder %s197, %s200
    %p209 = scmp.eq.s32.totalorder %s19, 1
    %p210 = por %p208, %p209
    %p211 = scmp.ne.s32.totalorder %s200, %s201
    %p212 = scmp.eq.s32.totalorder %s19, 0
    %p213 = por %p211, %p212
    %p214 = scmp.ne.s32.totalorder %s200, %s201
    %p215 = scmp.eq.s32.totalorder %s20, 1
    %p216 = por %p214, %p215
    %p218 = scmp.ne.s32.totalorder %s201, %s217
    %p219 = scmp.eq.s32.totalorder %s20, 0
    %p220 = por %p218, %p219
    %p221 = scmp.le.s32.totalorder 1, %s14
    %p222 = scmp.lt.s32.totalorder %s14, 3
    %p223 = pnand %p221, %p222
    %p224 = pneg %p223
    // Predicated region
    $region9: #{dense_block_forward.5} parent=5 // pred_check
      _
    $region10: #{dense_block_forward.5} parent=5 // pred_check_branch
      %226 = sbr.rel (%p223) target = $region12
    $region11: #{dense_block_forward.5} parent=5 // pred_region
      %s227 = ssub.s32 %s14, 1
      // Predicated region
      $region13: #{dense_block_forward.5} parent=11 // pred_check
        %p228 = pneg %p61
      $region14: #{dense_block_forward.5} parent=11 // pred_check_branch
        %230 = sbr.rel (%p228) target = $region16
      $region15: #{dense_block_forward.5} parent=11 // pred_region
        _
      $region16: #{dense_block_forward.5} parent=11 // pred_fallthru
        _
      // Predicated region
      $region17: #{dense_block_forward.5} parent=11 // pred_check
        %p231 = pneg %p82
      $region18: #{dense_block_forward.5} parent=11 // pred_check_branch
        %233 = sbr.rel (%p231) target = $region20
      $region19: #{dense_block_forward.5} parent=11 // pred_region
        _
      $region20: #{dense_block_forward.5} parent=11 // pred_fallthru
        _
      // Predicated region
      $region21: #{dense_block_forward.5} parent=11 // pred_check
        %p234 = pneg %p103
      $region22: #{dense_block_forward.5} parent=11 // pred_check_branch
        %236 = sbr.rel (%p234) target = $region24
      $region23: #{dense_block_forward.5} parent=11 // pred_region
        _
      $region24: #{dense_block_forward.5} parent=11 // pred_fallthru
        _
      // Predicated region
      $region25: #{dense_block_forward.5} parent=11 // pred_check
        %p237 = pneg %p124
      $region26: #{dense_block_forward.5} parent=11 // pred_check_branch
        %239 = sbr.rel (%p237) target = $region28
      $region27: #{dense_block_forward.5} parent=11 // pred_region
        _
      $region28: #{dense_block_forward.5} parent=11 // pred_fallthru
        _
      // Predicated region
      $region29: #{dense_block_forward.5} parent=11 // pred_check
        %p240 = pneg %p145
      $region30: #{dense_block_forward.5} parent=11 // pred_check_branch
        %242 = sbr.rel (%p240) target = $region32
      $region31: #{dense_block_forward.5} parent=11 // pred_region
        _
      $region32: #{dense_block_forward.5} parent=11 // pred_fallthru
        _
      // Predicated region
      $region33: #{dense_block_forward.5} parent=11 // pred_check
        %p243 = pneg %p166
      $region34: #{dense_block_forward.5} parent=11 // pred_check_branch
        %245 = sbr.rel (%p243) target = $region36
      $region35: #{dense_block_forward.5} parent=11 // pred_region
        _
      $region36: #{dense_block_forward.5} parent=11 // pred_fallthru
        _
      // Predicated region
      $region37: #{dense_block_forward.5} parent=11 // pred_check
        %p246 = pneg %p187
      $region38: #{dense_block_forward.5} parent=11 // pred_check_branch
        %248 = sbr.rel (%p246) target = $region40
      $region39: #{dense_block_forward.5} parent=11 // pred_region
        _
      $region40: #{dense_block_forward.5} parent=11 // pred_fallthru
        _
    $region12: #{dense_block_forward.5} parent=5 // pred_fallthru
      _
    %p249 = scmp.lt.s32.totalorder %s14, 2
    // Predicated region
    $region41: #{dense_block_forward.5} parent=5 // pred_check
      %p250 = pneg %p249
    $region42: #{dense_block_forward.5} parent=5 // pred_check_branch
      %252 = sbr.rel (%p250) target = $region44
    $region43: #{dense_block_forward.5} parent=5 // pred_region
      // Predicated region
      $region45: #{dense_block_forward.5} parent=43 // pred_check
        %p253 = pneg %p34
      $region46: #{dense_block_forward.5} parent=43 // pred_check_branch
        %255 = sbr.rel (%p253) target = $region48
      $region47: #{dense_block_forward.5} parent=43 // pred_region
        %p256 = scmp.lt.s32.totalorder %s14, 1
        %s257 = scalar_select %p256, %s14, 1
        %s258 = smul.addr %s257, 20
        %s259 = smul.addr %s258, 8
        %s260 = scalar_lea.vmem %s0, %s259
      $region48: #{dense_block_forward.5} parent=43 // pred_fallthru
        _
    $region44: #{dense_block_forward.5} parent=5 // pred_fallthru
      _
    %p261 = scmp.le.s32.totalorder 1, %s14
    %p262 = scmp.lt.s32.totalorder %s14, 3
    %p263 = pnand %p261, %p262
    %p264 = pneg %p263
    // Predicated region
    $region49: #{dense_block_forward.5} parent=5 // pred_check
      _
    $region50: #{dense_block_forward.5} parent=5 // pred_check_branch
      %266 = sbr.rel (%p263) target = $region52
    $region51: #{dense_block_forward.5} parent=5 // pred_region
      %s267 = ssub.s32 %s14, 1
      %p268 = scmp.lt.s32.totalorder %s19, 1
      %s269 = scalar_select %p268, %s19, 1
      %s270 = smul.addr %s269, 20
      %s271 = smul.addr %s270, 8
      %s272 = scalar_lea.vmem %s0, %s271
      %p273 = pneg %p40
      %p274 = pneg %p37
      %p275 = pneg %p61
      %p276 = pneg %p58
      %p277 = pneg %p82
      %p278 = pneg %p79
      %p279 = pneg %p103
      %p280 = pneg %p100
      %p281 = pneg %p124
      %p282 = pneg %p121
      %p283 = pneg %p145
      %p284 = pneg %p142
      %p285 = pneg %p166
      %p286 = pneg %p163
      %p287 = pneg %p187
      %p288 = pneg %p184
      %p289 = pneg %p213
      %p290 = pneg %p210
      %p291 = scmp.lt.s32.totalorder %s19, 1
      %s292 = scalar_select %p291, %s19, 1
      %s293 = smul.addr %s292, 20
      %s294 = smul.addr %s293, 8
      %s295 = scalar_lea.vmem %s8, %s294
      %p296 = scmp.lt.s32.totalorder %s19, 1
      %s297 = scalar_select %p296, %s19, 1
      %s298 = smul.addr %s297, 20
      %s299 = smul.addr %s298, 8
      %s300 = scalar_lea.vmem %s0, %s299
      %p301 = scmp.lt.s32.totalorder %s19, 1
      %s302 = scalar_select %p301, %s19, 1
      %s303 = smul.addr %s302, 20
      %s304 = smul.addr %s303, 8
      %s305 = scalar_lea.vmem %s8, %s304
      %v307 = vld [vmem:[%s300] sm:$0xff]
      %v308 = vld [vmem:[%s300 + $0x8] sm:$0xff]
      %v309 = vld [vmem:[%s300 + $0x10] sm:$0xff]
      %v310 = vld [vmem:[%s300 + $0x18] sm:$0xff]
      %v311 = vld [vmem:[%s300 + $0x20] sm:$0xff]
      %v312 = vld [vmem:[%s300 + $0x28] sm:$0xff]
      %v313 = vld [vmem:[%s300 + $0x30] sm:$0xff]
      %v314 = vld [vmem:[%s300 + $0x38] sm:$0xff]
      %v315 = vld [vmem:[%s300 + $0x40] sm:$0xff]
      %v316 = vld [vmem:[%s300 + $0x48] sm:$0xff]
      %v317 = vld [vmem:[%s300 + $0x50] sm:$0xff]
      %v318 = vld [vmem:[%s300 + $0x58] sm:$0xff]
      %v319 = vld [vmem:[%s300 + $0x60] sm:$0xff]
      %v320 = vld [vmem:[%s300 + $0x68] sm:$0xff]
      %v321 = vld [vmem:[%s300 + $0x70] sm:$0xff]
      %v322 = vld [vmem:[%s300 + $0x78] sm:$0xff]
      %v323 = vld [vmem:[%s300 + $0x80] sm:$0xff]
      %v324 = vld [vmem:[%s300 + $0x88] sm:$0xff]
      %v325 = vld [vmem:[%s300 + $0x90] sm:$0xff]
      %v326 = vld [vmem:[%s300 + $0x98] sm:$0xff]
      %v327 = vld [vmem:[%s2] sm:$0x1]
      %v329 = vlaneseq
      %v330 = vshrl.u32 %v329, 7
      %v331 = vsub.s32 0, %v330
      %v332 = vrot.slane %v327, %v331
      %v334 = vmul.f32 %v307, %v332
      %v335 = vmul.f32 %v308, %v332
      %v336 = vmul.f32 %v309, %v332
      %v337 = vmul.f32 %v310, %v332
      %v338 = vmul.f32 %v311, %v332
      %v339 = vmul.f32 %v312, %v332
      %v340 = vmul.f32 %v313, %v332
      %v341 = vmul.f32 %v314, %v332
      %v342 = vmul.f32 %v315, %v332
      %v343 = vmul.f32 %v316, %v332
      %v344 = vmul.f32 %v317, %v332
      %v345 = vmul.f32 %v318, %v332
      %v346 = vmul.f32 %v319, %v332
      %v347 = vmul.f32 %v320, %v332
      %v348 = vmul.f32 %v321, %v332
      %v349 = vmul.f32 %v322, %v332
      %v350 = vmul.f32 %v323, %v332
      %v351 = vmul.f32 %v324, %v332
      %v352 = vmul.f32 %v325, %v332
      %v353 = vmul.f32 %v326, %v332
      %v354 = vld [vmem:[%s3] sm:$0x1]
      %v356 = vlaneseq
      %v357 = vshrl.u32 %v356, 7
      %v358 = vsub.s32 0, %v357
      %v359 = vrot.slane %v354, %v358
      %v361 = vadd.f32 %v334, %v359
      %v362 = vadd.f32 %v335, %v359
      %v363 = vadd.f32 %v336, %v359
      %v364 = vadd.f32 %v337, %v359
      %v365 = vadd.f32 %v338, %v359
      %v366 = vadd.f32 %v339, %v359
      %v367 = vadd.f32 %v340, %v359
      %v368 = vadd.f32 %v341, %v359
      %v369 = vadd.f32 %v342, %v359
      %v370 = vadd.f32 %v343, %v359
      %v371 = vadd.f32 %v344, %v359
      %v372 = vadd.f32 %v345, %v359
      %v373 = vadd.f32 %v346, %v359
      %v374 = vadd.f32 %v347, %v359
      %v375 = vadd.f32 %v348, %v359
      %v376 = vadd.f32 %v349, %v359
      %v377 = vadd.f32 %v350, %v359
      %v378 = vadd.f32 %v351, %v359
      %v379 = vadd.f32 %v352, %v359
      %v380 = vadd.f32 %v353, %v359
      %v381 = vmax.f32 %v361, 0.0
      %v382 = vmax.f32 %v362, 0.0
      %v383 = vmax.f32 %v363, 0.0
      %v384 = vmax.f32 %v364, 0.0
      %v385 = vmax.f32 %v365, 0.0
      %v386 = vmax.f32 %v366, 0.0
      %v387 = vmax.f32 %v367, 0.0
      %v388 = vmax.f32 %v368, 0.0
      %v389 = vmax.f32 %v369, 0.0
      %v390 = vmax.f32 %v370, 0.0
      %v391 = vmax.f32 %v371, 0.0
      %v392 = vmax.f32 %v372, 0.0
      %v393 = vmax.f32 %v373, 0.0
      %v394 = vmax.f32 %v374, 0.0
      %v395 = vmax.f32 %v375, 0.0
      %v396 = vmax.f32 %v376, 0.0
      %v397 = vmax.f32 %v377, 0.0
      %v398 = vmax.f32 %v378, 0.0
      %v399 = vmax.f32 %v379, 0.0
      %v400 = vmax.f32 %v380, 0.0
      %v401 = vpack.c.bf16 %v382, %v381
      %v402 = vpack.c.bf16 %v384, %v383
      %v403 = vpack.c.bf16 %v386, %v385
      %v404 = vpack.c.bf16 %v388, %v387
      %v405 = vpack.c.bf16 %v390, %v389
      %v406 = vpack.c.bf16 %v392, %v391
      %v407 = vpack.c.bf16 %v394, %v393
      %v408 = vpack.c.bf16 %v396, %v395
      %v409 = vpack.c.bf16 %v398, %v397
      %v410 = vpack.c.bf16 %v400, %v399
      %v411 = vld [vmem:[%s4] sm:$0xf]
      %v412 = vld [vmem:[%s4 + $0x4] sm:$0xf]
      %v413 = vld [vmem:[%s4 + $0x8] sm:$0xf]
      %v414 = vld [vmem:[%s4 + $0xc] sm:$0xf]
      %v415 = vld [vmem:[%s4 + $0x10] sm:$0xf]
      %v416 = vld [vmem:[%s4 + $0x14] sm:$0xf]
      %v417 = vld [vmem:[%s4 + $0x18] sm:$0xf]
      %v418 = vld [vmem:[%s4 + $0x1c] sm:$0xf]
      %v419 = vld [vmem:[%s4 + $0x20] sm:$0xf]
      %v420 = vld [vmem:[%s4 + $0x24] sm:$0xf]
      %v421 = vld [vmem:[%s4 + $0x28] sm:$0xf]
      %v422 = vld [vmem:[%s4 + $0x2c] sm:$0xf]
      %v423 = vld [vmem:[%s5] sm:$0x1]
      %v425 = vlaneseq
      %v426 = vshrl.u32 %v425, 7
      %v427 = vsub.s32 0, %v426
      %v428 = vrot.slane %v423, %v427
      %v442 = vunpack.c.l.b16 %v411
      %v443 = vunpack.c.l.b16 %v412
      %v444 = vunpack.c.l.b16 %v413
      %v445 = vunpack.c.l.b16 %v414
      %v446 = vunpack.c.l.b16 %v415
      %v447 = vunpack.c.l.b16 %v416
      %v448 = vunpack.c.l.b16 %v417
      %v449 = vunpack.c.l.b16 %v418
      %v450 = vunpack.c.l.b16 %v419
      %v451 = vunpack.c.l.b16 %v420
      %v452 = vunpack.c.l.b16 %v421
      %v453 = vunpack.c.l.b16 %v422
      %v454 = vpack.c.b16 %v443, %v442
      %v455 = vpack.c.b16 %v445, %v444
      %v456 = vpack.c.b16 %v447, %v446
      %v457 = vpack.c.b16 %v449, %v448
      %v458 = vpack.c.b16 %v451, %v450
      %v459 = vpack.c.b16 %v453, %v452
      %vm466 = vcmask 785408
      %v468 = vsel %vm466, %v401, 0
      %v471 = vsel %vm466, %v402, 0
      %v474 = vsel %vm466, %v403, 0
      %v477 = vsel %vm466, %v404, 0
      %v480 = vsel %vm466, %v405, 0
      %v483 = vsel %vm466, %v406, 0
      %v486 = vsel %vm466, %v407, 0
      %v489 = vsel %vm466, %v408, 0
      %v492 = vsel %vm466, %v409, 0
      %v495 = vsel %vm466, %v410, 0
      %497 = vmatprep.subr.bf16.mxu0 0
      %498 = vmatpush1.bf16.msra.mxu0 0
      %499 = vmatprep.subr.bf16.mxu0 0
      %500 = vmatpush1.bf16.msra.mxu0 0
      %501 = vmatprep.subr.bf16.mxu0 0
      %502 = vmatpush1.bf16.msra.mxu0 %v459
      %503 = vmatprep.subr.bf16.mxu0 0
      %504 = vmatpush1.bf16.msra.mxu0 %v458
      %505 = vmatprep.subr.bf16.mxu0 0
      %506 = vmatpush1.bf16.msra.mxu0 %v457
      %507 = vmatprep.subr.bf16.mxu0 0
      %508 = vmatpush1.bf16.msra.mxu0 %v456
      %509 = vmatprep.subr.bf16.mxu0 0
      %510 = vmatpush1.bf16.msra.mxu0 %v455
      %511 = vmatprep.subr.bf16.mxu0 0
      %512 = vmatpush1.bf16.msra.mxu0 %v454
      %513 = vmatprep.subr.bf16.mxu0 0
      %514 = vmatpush2.bf16.msra.mxu0 0
      %515 = vmatprep.subr.bf16.mxu0 0
      %516 = vmatpush2.bf16.msra.mxu0 0
      %517 = vmatprep.subr.bf16.mxu0 0
      %518 = vmatpush2.bf16.msra.mxu0 0
      %519 = vmatprep.subr.bf16.mxu0 0
      %520 = vmatpush2.bf16.msra.mxu0 0
      %521 = vmatprep.subr.bf16.mxu0 0
      %522 = vmatpush2.bf16.msra.mxu0 0
      %523 = vmatprep.subr.bf16.mxu0 0
      %524 = vmatpush2.bf16.msra.mxu0 0
      %525 = vmatprep.subr.bf16.mxu0 0
      %526 = vmatpush2.bf16.msra.mxu0 0
      %527 = vmatprep.subr.bf16.mxu0 0
      %528 = vmatpush2.bf16.msra.mxu0 0
      %529 = vmatprep.mubr.bf16.mxu0 0
      %530 = vmatmul.mubr.bf16.gmra.mxu0 %v468
      %v531 = vpop.f32.mrf.mxu0
      %v532 = vadd.f32 %v428, %v531
      %v533 = vpop.f32.mrf.mxu0
      %v534 = vpop.f32.mrf.mxu0
      %v535 = vadd.f32 %v428, %v534
      %v536 = vpop.f32.mrf.mxu0
      %537 = vmatprep.mubr.bf16.mxu0 0
      %538 = vmatmul.mubr.bf16.gmra.mxu0 %v471
      %v539 = vpop.f32.mrf.mxu0
      %v540 = vadd.f32 %v428, %v539
      %v541 = vpop.f32.mrf.mxu0
      %v542 = vpop.f32.mrf.mxu0
      %v543 = vadd.f32 %v428, %v542
      %v544 = vpop.f32.mrf.mxu0
      %545 = vmatprep.mubr.bf16.mxu0 0
      %546 = vmatmul.mubr.bf16.gmra.mxu0 %v474
      %v547 = vpop.f32.mrf.mxu0
      %v548 = vadd.f32 %v428, %v547
      %v549 = vpop.f32.mrf.mxu0
      %v550 = vpop.f32.mrf.mxu0
      %v551 = vadd.f32 %v428, %v550
      %v552 = vpop.f32.mrf.mxu0
      %553 = vmatprep.mubr.bf16.mxu0 0
      %554 = vmatmul.mubr.bf16.gmra.mxu0 %v477
      %v555 = vpop.f32.mrf.mxu0
      %v556 = vadd.f32 %v428, %v555
      %v557 = vpop.f32.mrf.mxu0
      %v558 = vpop.f32.mrf.mxu0
      %v559 = vadd.f32 %v428, %v558
      %v560 = vpop.f32.mrf.mxu0
      %561 = vmatprep.mubr.bf16.mxu0 0
      %562 = vmatmul.mubr.bf16.gmra.mxu0 %v480
      %v563 = vpop.f32.mrf.mxu0
      %v564 = vadd.f32 %v428, %v563
      %v565 = vpop.f32.mrf.mxu0
      %v566 = vpop.f32.mrf.mxu0
      %v567 = vadd.f32 %v428, %v566
      %v568 = vpop.f32.mrf.mxu0
      %569 = vmatprep.mubr.bf16.mxu0 0
      %570 = vmatmul.mubr.bf16.gmra.mxu0 %v483
      %v571 = vpop.f32.mrf.mxu0
      %v572 = vadd.f32 %v428, %v571
      %v573 = vpop.f32.mrf.mxu0
      %v574 = vpop.f32.mrf.mxu0
      %v575 = vadd.f32 %v428, %v574
      %v576 = vpop.f32.mrf.mxu0
      %577 = vmatprep.mubr.bf16.mxu0 0
      %578 = vmatmul.mubr.bf16.gmra.mxu0 %v486
      %v579 = vpop.f32.mrf.mxu0
      %v580 = vadd.f32 %v428, %v579
      %v581 = vpop.f32.mrf.mxu0
      %v582 = vpop.f32.mrf.mxu0
      %v583 = vadd.f32 %v428, %v582
      %v584 = vpop.f32.mrf.mxu0
      %585 = vmatprep.mubr.bf16.mxu0 0
      %586 = vmatmul.mubr.bf16.gmra.mxu0 %v489
      %v587 = vpop.f32.mrf.mxu0
      %v588 = vadd.f32 %v428, %v587
      %v589 = vpop.f32.mrf.mxu0
      %v590 = vpop.f32.mrf.mxu0
      %v591 = vadd.f32 %v428, %v590
      %v592 = vpop.f32.mrf.mxu0
      %593 = vmatprep.mubr.bf16.mxu0 0
      %594 = vmatmul.mubr.bf16.gmra.mxu0 %v492
      %v595 = vpop.f32.mrf.mxu0
      %v596 = vadd.f32 %v428, %v595
      %v597 = vpop.f32.mrf.mxu0
      %v598 = vpop.f32.mrf.mxu0
      %v599 = vadd.f32 %v428, %v598
      %v600 = vpop.f32.mrf.mxu0
      %601 = vmatprep.mubr.bf16.mxu0 0
      %602 = vmatmul.mubr.bf16.gmra.mxu0 %v495
      %v603 = vpop.f32.mrf.mxu0
      %v604 = vadd.f32 %v428, %v603
      %v605 = vpop.f32.mrf.mxu0
      %v606 = vpop.f32.mrf.mxu0
      %v607 = vadd.f32 %v428, %v606
      %v608 = vpop.f32.mrf.mxu0
      %609 = vdwg.mxu0
      %v610 = vmax.f32 %v532, 0.0
      %v611 = vmax.f32 %v535, 0.0
      %v612 = vmax.f32 %v540, 0.0
      %v613 = vmax.f32 %v543, 0.0
      %v614 = vmax.f32 %v548, 0.0
      %v615 = vmax.f32 %v551, 0.0
      %v616 = vmax.f32 %v556, 0.0
      %v617 = vmax.f32 %v559, 0.0
      %v618 = vmax.f32 %v564, 0.0
      %v619 = vmax.f32 %v567, 0.0
      %v620 = vmax.f32 %v572, 0.0
      %v621 = vmax.f32 %v575, 0.0
      %v622 = vmax.f32 %v580, 0.0
      %v623 = vmax.f32 %v583, 0.0
      %v624 = vmax.f32 %v588, 0.0
      %v625 = vmax.f32 %v591, 0.0
      %v626 = vmax.f32 %v596, 0.0
      %v627 = vmax.f32 %v599, 0.0
      %v628 = vmax.f32 %v604, 0.0
      %v629 = vmax.f32 %v607, 0.0
      %v630 = vld [vmem:[%s1] sm:$0xff]
      %v631 = vld [vmem:[%s1 + $0x8] sm:$0xff]
      %v632 = vld [vmem:[%s1 + $0x10] sm:$0xff]
      %v633 = vld [vmem:[%s1 + $0x18] sm:$0xff]
      %v634 = vld [vmem:[%s1 + $0x20] sm:$0xff]
      %v635 = vld [vmem:[%s1 + $0x28] sm:$0xff]
      %v636 = vld [vmem:[%s1 + $0x30] sm:$0xff]
      %v637 = vld [vmem:[%s1 + $0x38] sm:$0xff]
      %v638 = vld [vmem:[%s1 + $0x40] sm:$0xff]
      %v639 = vld [vmem:[%s1 + $0x48] sm:$0xff]
      %v640 = vld [vmem:[%s1 + $0x50] sm:$0xff]
      %v641 = vld [vmem:[%s1 + $0x58] sm:$0xff]
      %v642 = vld [vmem:[%s1 + $0x60] sm:$0xff]
      %v643 = vld [vmem:[%s1 + $0x68] sm:$0xff]
      %v644 = vld [vmem:[%s1 + $0x70] sm:$0xff]
      %v645 = vld [vmem:[%s1 + $0x78] sm:$0xff]
      %v646 = vld [vmem:[%s1 + $0x80] sm:$0xff]
      %v647 = vld [vmem:[%s1 + $0x88] sm:$0xff]
      %v648 = vld [vmem:[%s1 + $0x90] sm:$0xff]
      %v649 = vld [vmem:[%s1 + $0x98] sm:$0xff]
      %651 = vset.pattern.permute.xlu0 0
      %652 = vperm.xlu0 %651, %v630
      %v653 = vpop.permute.xlu0 %652
      %656 = vset.pattern.permute.xlu0 0
      %657 = vperm.xlu0 %656, %v631
      %v658 = vpop.permute.xlu0 %657
      %661 = vset.pattern.permute.xlu0 0
      %662 = vperm.xlu0 %661, %v632
      %v663 = vpop.permute.xlu0 %662
      %666 = vset.pattern.permute.xlu0 0
      %667 = vperm.xlu0 %666, %v633
      %v668 = vpop.permute.xlu0 %667
      %671 = vset.pattern.permute.xlu0 0
      %672 = vperm.xlu0 %671, %v634
      %v673 = vpop.permute.xlu0 %672
      %676 = vset.pattern.permute.xlu0 0
      %677 = vperm.xlu0 %676, %v635
      %v678 = vpop.permute.xlu0 %677
      %681 = vset.pattern.permute.xlu0 0
      %682 = vperm.xlu0 %681, %v636
      %v683 = vpop.permute.xlu0 %682
      %686 = vset.pattern.permute.xlu0 0
      %687 = vperm.xlu0 %686, %v637
      %v688 = vpop.permute.xlu0 %687
      %691 = vset.pattern.permute.xlu0 0
      %692 = vperm.xlu0 %691, %v638
      %v693 = vpop.permute.xlu0 %692
      %696 = vset.pattern.permute.xlu0 0
      %697 = vperm.xlu0 %696, %v639
      %v698 = vpop.permute.xlu0 %697
      %701 = vset.pattern.permute.xlu0 0
      %702 = vperm.xlu0 %701, %v640
      %v703 = vpop.permute.xlu0 %702
      %706 = vset.pattern.permute.xlu0 0
      %707 = vperm.xlu0 %706, %v641
      %v708 = vpop.permute.xlu0 %707
      %711 = vset.pattern.permute.xlu0 0
      %712 = vperm.xlu0 %711, %v642
      %v713 = vpop.permute.xlu0 %712
      %716 = vset.pattern.permute.xlu0 0
      %717 = vperm.xlu0 %716, %v643
      %v718 = vpop.permute.xlu0 %717
      %721 = vset.pattern.permute.xlu0 0
      %722 = vperm.xlu0 %721, %v644
      %v723 = vpop.permute.xlu0 %722
      %726 = vset.pattern.permute.xlu0 0
      %727 = vperm.xlu0 %726, %v645
      %v728 = vpop.permute.xlu0 %727
      %731 = vset.pattern.permute.xlu0 0
      %732 = vperm.xlu0 %731, %v646
      %v733 = vpop.permute.xlu0 %732
      %736 = vset.pattern.permute.xlu0 0
      %737 = vperm.xlu0 %736, %v647
      %v738 = vpop.permute.xlu0 %737
      %741 = vset.pattern.permute.xlu0 0
      %742 = vperm.xlu0 %741, %v648
      %v743 = vpop.permute.xlu0 %742
      %746 = vset.pattern.permute.xlu0 0
      %747 = vperm.xlu0 %746, %v649
      %v748 = vpop.permute.xlu0 %747
      %v750 = vmul.f32 %v610, %v653
      %v751 = vmul.f32 %v611, %v658
      %v752 = vmul.f32 %v612, %v663
      %v753 = vmul.f32 %v613, %v668
      %v754 = vmul.f32 %v614, %v673
      %v755 = vmul.f32 %v615, %v678
      %v756 = vmul.f32 %v616, %v683
      %v757 = vmul.f32 %v617, %v688
      %v758 = vmul.f32 %v618, %v693
      %v759 = vmul.f32 %v619, %v698
      %v760 = vmul.f32 %v620, %v703
      %v761 = vmul.f32 %v621, %v708
      %v762 = vmul.f32 %v622, %v713
      %v763 = vmul.f32 %v623, %v718
      %v764 = vmul.f32 %v624, %v723
      %v765 = vmul.f32 %v625, %v728
      %v766 = vmul.f32 %v626, %v733
      %v767 = vmul.f32 %v627, %v738
      %v768 = vmul.f32 %v628, %v743
      %v769 = vmul.f32 %v629, %v748
      %vm790 = vcmask 1040384
      %v791 = vrot.slane %v750, 7
      %v792 = vrot.slane %v751, 7
      %v793 = vsel %vm790, %v791, %v792
      %v794 = vrot.slane %v752, 7
      %v795 = vsel %vm790, %v792, %v794
      %v796 = vrot.slane %v753, 7
      %v797 = vsel %vm790, %v794, %v796
      %v798 = vrot.slane %v754, 7
      %v799 = vsel %vm790, %v796, %v798
      %v800 = vrot.slane %v755, 7
      %v801 = vsel %vm790, %v798, %v800
      %v802 = vrot.slane %v756, 7
      %v803 = vsel %vm790, %v800, %v802
      %v804 = vrot.slane %v757, 7
      %v805 = vsel %vm790, %v802, %v804
      %v806 = vrot.slane %v758, 7
      %v807 = vsel %vm790, %v804, %v806
      %v808 = vrot.slane %v759, 7
      %v809 = vsel %vm790, %v806, %v808
      %v810 = vrot.slane %v760, 7
      %v811 = vsel %vm790, %v808, %v810
      %v812 = vrot.slane %v761, 7
      %v813 = vsel %vm790, %v810, %v812
      %v814 = vrot.slane %v762, 7
      %v815 = vsel %vm790, %v812, %v814
      %v816 = vrot.slane %v763, 7
      %v817 = vsel %vm790, %v814, %v816
      %v818 = vrot.slane %v764, 7
      %v819 = vsel %vm790, %v816, %v818
      %v820 = vrot.slane %v765, 7
      %v821 = vsel %vm790, %v818, %v820
      %v822 = vrot.slane %v766, 7
      %v823 = vsel %vm790, %v820, %v822
      %v824 = vrot.slane %v767, 7
      %v825 = vsel %vm790, %v822, %v824
      %v826 = vrot.slane %v768, 7
      %v827 = vsel %vm790, %v824, %v826
      %v828 = vrot.slane %v769, 7
      %v829 = vsel %vm790, %v826, %v828
      %v851 = vsel %vm790, 0.0, %v791
      %v852 = vsel %vm790, %v828, 0.0
      %v853 = vpack.c.bf16 0.0, 0.0
      %v854 = vpack.c.bf16 %v793, %v851
      %v855 = vpack.c.bf16 %v797, %v795
      %v856 = vpack.c.bf16 %v801, %v799
      %v857 = vpack.c.bf16 %v805, %v803
      %v858 = vpack.c.bf16 %v809, %v807
      %v859 = vpack.c.bf16 %v813, %v811
      %v860 = vpack.c.bf16 %v817, %v815
      %v861 = vpack.c.bf16 %v821, %v819
      %v862 = vpack.c.bf16 %v825, %v823
      %v863 = vpack.c.bf16 %v829, %v827
      %v864 = vpack.c.bf16 0.0, %v852
      %v865 = vld [vmem:[%s6] sm:$0xff]
      %v866 = vld [vmem:[%s6 + $0x8] sm:$0xf]
      %v867 = vld [vmem:[%s6 + $0xc] sm:$0xff]
      %v868 = vld [vmem:[%s6 + $0x14] sm:$0xf]
      %v869 = vld [vmem:[%s6 + $0x18] sm:$0xff]
      %v870 = vld [vmem:[%s6 + $0x20] sm:$0xf]
      %v871 = vld [vmem:[%s6 + $0x24] sm:$0xff]
      %v872 = vld [vmem:[%s6 + $0x2c] sm:$0xf]
      %v873 = vld [vmem:[%s6 + $0x30] sm:$0xff]
      %v874 = vld [vmem:[%s6 + $0x38] sm:$0xf]
      %v875 = vld [vmem:[%s6 + $0x3c] sm:$0xff]
      %v876 = vld [vmem:[%s6 + $0x44] sm:$0xf]
      %v877 = vld [vmem:[%s6 + $0x48] sm:$0xff]
      %v878 = vld [vmem:[%s6 + $0x50] sm:$0xf]
      %v879 = vld [vmem:[%s6 + $0x54] sm:$0xff]
      %v880 = vld [vmem:[%s6 + $0x5c] sm:$0xf]
      %v881 = vld [vmem:[%s6 + $0x60] sm:$0xff]
      %v882 = vld [vmem:[%s6 + $0x68] sm:$0xf]
      %v883 = vld [vmem:[%s6 + $0x6c] sm:$0xff]
      %v884 = vld [vmem:[%s6 + $0x74] sm:$0xf]
      %v885 = vld [vmem:[%s6 + $0x78] sm:$0xff]
      %v886 = vld [vmem:[%s6 + $0x80] sm:$0xf]
      %v887 = vld [vmem:[%s6 + $0x84] sm:$0xff]
      %v888 = vld [vmem:[%s6 + $0x8c] sm:$0xf]
      %v889 = vld [vmem:[%s6 + $0x90] sm:$0xff]
      %v890 = vld [vmem:[%s6 + $0x98] sm:$0xf]
      %v891 = vld [vmem:[%s6 + $0x9c] sm:$0xff]
      %v892 = vld [vmem:[%s6 + $0xa4] sm:$0xf]
      %v893 = vld [vmem:[%s6 + $0xa8] sm:$0xff]
      %v894 = vld [vmem:[%s6 + $0xb0] sm:$0xf]
      %v895 = vld [vmem:[%s6 + $0xb4] sm:$0xff]
      %v896 = vld [vmem:[%s6 + $0xbc] sm:$0xf]
      %v929 = vunpack.c.l.b16 %v865
      %v930 = vunpack.c.h.b16 %v865
      %v931 = vunpack.c.l.b16 %v866
      %v932 = vunpack.c.l.b16 %v867
      %v933 = vunpack.c.h.b16 %v867
      %v934 = vunpack.c.l.b16 %v868
      %v935 = vunpack.c.l.b16 %v869
      %v936 = vunpack.c.h.b16 %v869
      %v937 = vunpack.c.l.b16 %v870
      %v938 = vunpack.c.l.b16 %v871
      %v939 = vunpack.c.h.b16 %v871
      %v940 = vunpack.c.l.b16 %v872
      %v941 = vunpack.c.l.b16 %v873
      %v942 = vunpack.c.h.b16 %v873
      %v943 = vunpack.c.l.b16 %v874
      %v944 = vunpack.c.l.b16 %v875
      %v945 = vunpack.c.h.b16 %v875
      %v946 = vunpack.c.l.b16 %v876
      %v947 = vunpack.c.l.b16 %v877
      %v948 = vunpack.c.h.b16 %v877
      %v949 = vunpack.c.l.b16 %v878
      %v950 = vunpack.c.l.b16 %v879
      %v951 = vunpack.c.h.b16 %v879
      %v952 = vunpack.c.l.b16 %v880
      %v953 = vunpack.c.l.b16 %v881
      %v954 = vunpack.c.h.b16 %v881
      %v955 = vunpack.c.l.b16 %v882
      %v956 = vunpack.c.l.b16 %v883
      %v957 = vunpack.c.h.b16 %v883
      %v958 = vunpack.c.l.b16 %v884
      %v959 = vunpack.c.l.b16 %v885
      %v960 = vunpack.c.h.b16 %v885
      %v961 = vunpack.c.l.b16 %v886
      %v962 = vunpack.c.l.b16 %v887
      %v963 = vunpack.c.h.b16 %v887
      %v964 = vunpack.c.l.b16 %v888
      %v965 = vunpack.c.l.b16 %v889
      %v966 = vunpack.c.h.b16 %v889
      %v967 = vunpack.c.l.b16 %v890
      %v968 = vunpack.c.l.b16 %v891
      %v969 = vunpack.c.h.b16 %v891
      %v970 = vunpack.c.l.b16 %v892
      %v971 = vunpack.c.l.b16 %v893
      %v972 = vunpack.c.h.b16 %v893
      %v973 = vunpack.c.l.b16 %v894
      %v974 = vunpack.c.l.b16 %v895
      %v975 = vunpack.c.h.b16 %v895
      %v976 = vunpack.c.l.b16 %v896
      %v977 = vpack.c.b16 %v932, %v929
      %v978 = vpack.c.b16 %v933, %v930
      %v979 = vpack.c.b16 %v934, %v931
      %v980 = vpack.c.b16 %v938, %v935
      %v981 = vpack.c.b16 %v939, %v936
      %v982 = vpack.c.b16 %v940, %v937
      %v983 = vpack.c.b16 %v944, %v941
      %v984 = vpack.c.b16 %v945, %v942
      %v985 = vpack.c.b16 %v946, %v943
      %v986 = vpack.c.b16 %v950, %v947
      %v987 = vpack.c.b16 %v951, %v948
      %v988 = vpack.c.b16 %v952, %v949
      %v989 = vpack.c.b16 %v956, %v953
      %v990 = vpack.c.b16 %v957, %v954
      %v991 = vpack.c.b16 %v958, %v955
      %v992 = vpack.c.b16 %v962, %v959
      %v993 = vpack.c.b16 %v963, %v960
      %v994 = vpack.c.b16 %v964, %v961
      %v995 = vpack.c.b16 %v968, %v965
      %v996 = vpack.c.b16 %v969, %v966
      %v997 = vpack.c.b16 %v970, %v967
      %v998 = vpack.c.b16 %v974, %v971
      %v999 = vpack.c.b16 %v975, %v972
      %v1000 = vpack.c.b16 %v976, %v973
      %1025 = vmatprep.subr.bf16.mxu0 %v999
      %1026 = vmatpush1.bf16.msra.mxu0 %v998
      %1027 = vmatprep.subr.bf16.mxu0 %v996
      %1028 = vmatpush1.bf16.msra.mxu0 %v995
      %1029 = vmatprep.subr.bf16.mxu0 %v993
      %1030 = vmatpush1.bf16.msra.mxu0 %v992
      %1031 = vmatprep.subr.bf16.mxu0 %v990
      %1032 = vmatpush1.bf16.msra.mxu0 %v989
      %1033 = vmatprep.subr.bf16.mxu0 %v987
      %1034 = vmatpush1.bf16.msra.mxu0 %v986
      %1035 = vmatprep.subr.bf16.mxu0 %v984
      %1036 = vmatpush1.bf16.msra.mxu0 %v983
      %1037 = vmatprep.subr.bf16.mxu0 %v981
      %1038 = vmatpush1.bf16.msra.mxu0 %v980
      %1039 = vmatprep.subr.bf16.mxu0 %v978
      %1040 = vmatpush1.bf16.msra.mxu0 %v977
      %1041 = vmatprep.subr.bf16.mxu0 0
      %1042 = vmatpush2.bf16.msra.mxu0 0
      %1043 = vmatprep.subr.bf16.mxu0 0
      %1044 = vmatpush2.bf16.msra.mxu0 0
      %1045 = vmatprep.subr.bf16.mxu0 0
      %1046 = vmatpush2.bf16.msra.mxu0 0
      %1047 = vmatprep.subr.bf16.mxu0 0
      %1048 = vmatpush2.bf16.msra.mxu0 0
      %1049 = vmatprep.subr.bf16.mxu0 0
      %1050 = vmatpush2.bf16.msra.mxu0 0
      %1051 = vmatprep.subr.bf16.mxu0 0
      %1052 = vmatpush2.bf16.msra.mxu0 0
      %1053 = vmatprep.subr.bf16.mxu0 0
      %1054 = vmatpush2.bf16.msra.mxu0 0
      %1055 = vmatprep.subr.bf16.mxu0 0
      %1056 = vmatpush2.bf16.msra.mxu0 0
      %1057 = vmatprep.mubr.bf16.mxu0 0
      %1058 = vmatmul.mubr.bf16.gmra.mxu0 %v853
      %v1059 = vpop.f32.mrf.mxu0
      %v1060 = vadd.f32 0.0, %v1059
      %v1061 = vpop.f32.mrf.mxu0
      %v1062 = vpop.f32.mrf.mxu0
      %v1063 = vadd.f32 0.0, %v1062
      %v1064 = vpop.f32.mrf.mxu0
      %1065 = vmatprep.mubr.bf16.mxu0 0
      %1066 = vmatmul.mubr.bf16.gmra.mxu0 %v854
      %v1067 = vpop.f32.mrf.mxu0
      %v1068 = vadd.f32 0.0, %v1067
      %v1069 = vpop.f32.mrf.mxu0
      %v1070 = vadd.f32 0.0, %v1069
      %v1071 = vpop.f32.mrf.mxu0
      %v1072 = vadd.f32 0.0, %v1071
      %v1073 = vpop.f32.mrf.mxu0
      %v1074 = vadd.f32 0.0, %v1073
      %1075 = vmatprep.mubr.bf16.mxu0 0
      %1076 = vmatmul.mubr.bf16.gmra.mxu0 %v855
      %v1077 = vpop.f32.mrf.mxu0
      %v1078 = vadd.f32 0.0, %v1077
      %v1079 = vpop.f32.mrf.mxu0
      %v1080 = vadd.f32 0.0, %v1079
      %v1081 = vpop.f32.mrf.mxu0
      %v1082 = vadd.f32 0.0, %v1081
      %v1083 = vpop.f32.mrf.mxu0
      %v1084 = vadd.f32 0.0, %v1083
      %1085 = vmatprep.mubr.bf16.mxu0 0
      %1086 = vmatmul.mubr.bf16.gmra.mxu0 %v856
      %v1087 = vpop.f32.mrf.mxu0
      %v1088 = vadd.f32 0.0, %v1087
      %v1089 = vpop.f32.mrf.mxu0
      %v1090 = vadd.f32 0.0, %v1089
      %v1091 = vpop.f32.mrf.mxu0
      %v1092 = vadd.f32 0.0, %v1091
      %v1093 = vpop.f32.mrf.mxu0
      %v1094 = vadd.f32 0.0, %v1093
      %1095 = vmatprep.mubr.bf16.mxu0 0
      %1096 = vmatmul.mubr.bf16.gmra.mxu0 %v857
      %v1097 = vpop.f32.mrf.mxu0
      %v1098 = vadd.f32 0.0, %v1097
      %v1099 = vpop.f32.mrf.mxu0
      %v1100 = vadd.f32 0.0, %v1099
      %v1101 = vpop.f32.mrf.mxu0
      %v1102 = vadd.f32 0.0, %v1101
      %v1103 = vpop.f32.mrf.mxu0
      %v1104 = vadd.f32 0.0, %v1103
      %1105 = vmatprep.mubr.bf16.mxu0 0
      %1106 = vmatmul.mubr.bf16.gmra.mxu0 %v858
      %v1107 = vpop.f32.mrf.mxu0
      %v1108 = vadd.f32 0.0, %v1107
      %v1109 = vpop.f32.mrf.mxu0
      %v1110 = vadd.f32 0.0, %v1109
      %v1111 = vpop.f32.mrf.mxu0
      %v1112 = vadd.f32 0.0, %v1111
      %v1113 = vpop.f32.mrf.mxu0
      %v1114 = vadd.f32 0.0, %v1113
      %1115 = vmatprep.mubr.bf16.mxu0 0
      %1116 = vmatmul.mubr.bf16.gmra.mxu0 %v859
      %v1117 = vpop.f32.mrf.mxu0
      %v1118 = vadd.f32 0.0, %v1117
      %v1119 = vpop.f32.mrf.mxu0
      %v1120 = vadd.f32 0.0, %v1119
      %v1121 = vpop.f32.mrf.mxu0
      %v1122 = vadd.f32 0.0, %v1121
      %v1123 = vpop.f32.mrf.mxu0
      %v1124 = vadd.f32 0.0, %v1123
      %1125 = vmatprep.mubr.bf16.mxu0 0
      %1126 = vmatmul.mubr.bf16.gmra.mxu0 %v860
      %v1127 = vpop.f32.mrf.mxu0
      %v1128 = vadd.f32 0.0, %v1127
      %v1129 = vpop.f32.mrf.mxu0
      %v1130 = vadd.f32 0.0, %v1129
      %v1131 = vpop.f32.mrf.mxu0
      %v1132 = vadd.f32 0.0, %v1131
      %v1133 = vpop.f32.mrf.mxu0
      %v1134 = vadd.f32 0.0, %v1133
      %1135 = vmatprep.mubr.bf16.mxu0 0
      %1136 = vmatmul.mubr.bf16.gmra.mxu0 %v861
      %v1137 = vpop.f32.mrf.mxu0
      %v1138 = vadd.f32 0.0, %v1137
      %v1139 = vpop.f32.mrf.mxu0
      %v1140 = vadd.f32 0.0, %v1139
      %v1141 = vpop.f32.mrf.mxu0
      %v1142 = vadd.f32 0.0, %v1141
      %v1143 = vpop.f32.mrf.mxu0
      %v1144 = vadd.f32 0.0, %v1143
      %1145 = vmatprep.mubr.bf16.mxu0 0
      %1146 = vmatmul.mubr.bf16.gmra.mxu0 %v862
      %v1147 = vpop.f32.mrf.mxu0
      %v1148 = vadd.f32 0.0, %v1147
      %v1149 = vpop.f32.mrf.mxu0
      %v1150 = vadd.f32 0.0, %v1149
      %v1151 = vpop.f32.mrf.mxu0
      %v1152 = vadd.f32 0.0, %v1151
      %v1153 = vpop.f32.mrf.mxu0
      %v1154 = vadd.f32 0.0, %v1153
      %1155 = vmatprep.mubr.bf16.mxu0 0
      %1156 = vmatmul.mubr.bf16.gmra.mxu0 %v863
      %v1157 = vpop.f32.mrf.mxu0
      %v1158 = vadd.f32 0.0, %v1157
      %v1159 = vpop.f32.mrf.mxu0
      %v1160 = vadd.f32 0.0, %v1159
      %v1161 = vpop.f32.mrf.mxu0
      %v1162 = vadd.f32 0.0, %v1161
      %v1163 = vpop.f32.mrf.mxu0
      %v1164 = vadd.f32 0.0, %v1163
      %1165 = vmatprep.mubr.bf16.mxu0 0
      %1166 = vmatmul.mubr.bf16.gmra.mxu0 %v864
      %v1167 = vpop.f32.mrf.mxu0
      %v1168 = vpop.f32.mrf.mxu0
      %v1169 = vadd.f32 0.0, %v1168
      %v1170 = vpop.f32.mrf.mxu0
      %v1171 = vpop.f32.mrf.mxu0
      %v1172 = vadd.f32 0.0, %v1171
      %1173 = vmatprep.mubr.bf16.mxu0 0
      %1174 = vmatmul.mubr.bf16.gmra.mxu0 %v853
      %v1175 = vpop.f32.mrf.mxu0
      %v1176 = vpop.f32.mrf.mxu0
      %v1177 = vadd.f32 0.0, %v1176
      %v1178 = vpop.f32.mrf.mxu0
      %v1179 = vpop.f32.mrf.mxu0
      %1180 = vdwg.mxu0
      %1181 = vmatprep.subr.bf16.mxu0 0
      %1182 = vmatpush1.bf16.msra.mxu0 %v1000
      %1183 = vmatprep.subr.bf16.mxu0 0
      %1184 = vmatpush1.bf16.msra.mxu0 %v997
      %1185 = vmatprep.subr.bf16.mxu0 0
      %1186 = vmatpush1.bf16.msra.mxu0 %v994
      %1187 = vmatprep.subr.bf16.mxu0 0
      %1188 = vmatpush1.bf16.msra.mxu0 %v991
      %1189 = vmatprep.subr.bf16.mxu0 0
      %1190 = vmatpush1.bf16.msra.mxu0 %v988
      %1191 = vmatprep.subr.bf16.mxu0 0
      %1192 = vmatpush1.bf16.msra.mxu0 %v985
      %1193 = vmatprep.subr.bf16.mxu0 0
      %1194 = vmatpush1.bf16.msra.mxu0 %v982
      %1195 = vmatprep.subr.bf16.mxu0 0
      %1196 = vmatpush1.bf16.msra.mxu0 %v979
      %1197 = vmatprep.subr.bf16.mxu0 0
      %1198 = vmatpush2.bf16.msra.mxu0 0
      %1199 = vmatprep.subr.bf16.mxu0 0
      %1200 = vmatpush2.bf16.msra.mxu0 0
      %1201 = vmatprep.subr.bf16.mxu0 0
      %1202 = vmatpush2.bf16.msra.mxu0 0
      %1203 = vmatprep.subr.bf16.mxu0 0
      %1204 = vmatpush2.bf16.msra.mxu0 0
      %1205 = vmatprep.subr.bf16.mxu0 0
      %1206 = vmatpush2.bf16.msra.mxu0 0
      %1207 = vmatprep.subr.bf16.mxu0 0
      %1208 = vmatpush2.bf16.msra.mxu0 0
      %1209 = vmatprep.subr.bf16.mxu0 0
      %1210 = vmatpush2.bf16.msra.mxu0 0
      %1211 = vmatprep.subr.bf16.mxu0 0
      %1212 = vmatpush2.bf16.msra.mxu0 0
      %1213 = vmatprep.mubr.bf16.mxu0 0
      %1214 = vmatmul.mubr.bf16.gmra.mxu0 %v853
      %v1215 = vpop.f32.mrf.mxu0
      %v1216 = vpop.f32.mrf.mxu0
      %v1217 = vpop.f32.mrf.mxu0
      %v1218 = vpop.f32.mrf.mxu0
      %1219 = vmatprep.mubr.bf16.mxu0 0
      %1220 = vmatmul.mubr.bf16.gmra.mxu0 %v854
      %v1221 = vpop.f32.mrf.mxu0
      %v1222 = vpop.f32.mrf.mxu0
      %v1223 = vpop.f32.mrf.mxu0
      %v1224 = vpop.f32.mrf.mxu0
      %1225 = vmatprep.mubr.bf16.mxu0 0
      %1226 = vmatmul.mubr.bf16.gmra.mxu0 %v855
      %v1227 = vpop.f32.mrf.mxu0
      %v1228 = vadd.f32 0.0, %v1227
      %v1229 = vpop.f32.mrf.mxu0
      %v1230 = vpop.f32.mrf.mxu0
      %v1231 = vadd.f32 0.0, %v1230
      %v1232 = vpop.f32.mrf.mxu0
      %1233 = vmatprep.mubr.bf16.mxu0 0
      %1234 = vmatmul.mubr.bf16.gmra.mxu0 %v856
      %v1235 = vpop.f32.mrf.mxu0
      %v1236 = vadd.f32 0.0, %v1235
      %v1237 = vpop.f32.mrf.mxu0
      %v1238 = vpop.f32.mrf.mxu0
      %v1239 = vadd.f32 0.0, %v1238
      %v1240 = vpop.f32.mrf.mxu0
      %1241 = vmatprep.mubr.bf16.mxu0 0
      %1242 = vmatmul.mubr.bf16.gmra.mxu0 %v857
      %v1243 = vpop.f32.mrf.mxu0
      %v1244 = vadd.f32 0.0, %v1243
      %v1245 = vpop.f32.mrf.mxu0
      %v1246 = vpop.f32.mrf.mxu0
      %v1247 = vadd.f32 0.0, %v1246
      %v1248 = vpop.f32.mrf.mxu0
      %1249 = vmatprep.mubr.bf16.mxu0 0
      %1250 = vmatmul.mubr.bf16.gmra.mxu0 %v858
      %v1251 = vpop.f32.mrf.mxu0
      %v1252 = vadd.f32 0.0, %v1251
      %v1253 = vpop.f32.mrf.mxu0
      %v1254 = vpop.f32.mrf.mxu0
      %v1255 = vadd.f32 0.0, %v1254
      %v1256 = vpop.f32.mrf.mxu0
      %1257 = vmatprep.mubr.bf16.mxu0 0
      %1258 = vmatmul.mubr.bf16.gmra.mxu0 %v859
      %v1259 = vpop.f32.mrf.mxu0
      %v1260 = vadd.f32 0.0, %v1259
      %v1261 = vpop.f32.mrf.mxu0
      %v1262 = vpop.f32.mrf.mxu0
      %v1263 = vadd.f32 0.0, %v1262
      %v1264 = vpop.f32.mrf.mxu0
      %1265 = vmatprep.mubr.bf16.mxu0 0
      %1266 = vmatmul.mubr.bf16.gmra.mxu0 %v860
      %v1267 = vpop.f32.mrf.mxu0
      %v1268 = vadd.f32 0.0, %v1267
      %v1269 = vpop.f32.mrf.mxu0
      %v1270 = vpop.f32.mrf.mxu0
      %v1271 = vadd.f32 0.0, %v1270
      %v1272 = vpop.f32.mrf.mxu0
      %1273 = vmatprep.mubr.bf16.mxu0 0
      %1274 = vmatmul.mubr.bf16.gmra.mxu0 %v861
      %v1275 = vpop.f32.mrf.mxu0
      %v1276 = vadd.f32 0.0, %v1275
      %v1277 = vpop.f32.mrf.mxu0
      %v1278 = vpop.f32.mrf.mxu0
      %v1279 = vadd.f32 0.0, %v1278
      %v1280 = vpop.f32.mrf.mxu0
      %1281 = vmatprep.mubr.bf16.mxu0 0
      %1282 = vmatmul.mubr.bf16.gmra.mxu0 %v862
      %v1283 = vpop.f32.mrf.mxu0
      %v1284 = vadd.f32 0.0, %v1283
      %v1285 = vpop.f32.mrf.mxu0
      %v1286 = vpop.f32.mrf.mxu0
      %v1287 = vadd.f32 0.0, %v1286
      %v1288 = vpop.f32.mrf.mxu0
      %1289 = vmatprep.mubr.bf16.mxu0 0
      %1290 = vmatmul.mubr.bf16.gmra.mxu0 %v863
      %v1291 = vpop.f32.mrf.mxu0
      %v1292 = vadd.f32 0.0, %v1291
      %v1293 = vpop.f32.mrf.mxu0
      %v1294 = vpop.f32.mrf.mxu0
      %v1295 = vadd.f32 0.0, %v1294
      %v1296 = vpop.f32.mrf.mxu0
      %1297 = vmatprep.mubr.bf16.mxu0 0
      %1298 = vmatmul.mubr.bf16.gmra.mxu0 %v864
      %v1299 = vpop.f32.mrf.mxu0
      %v1300 = vadd.f32 0.0, %v1299
      %v1301 = vpop.f32.mrf.mxu0
      %v1302 = vpop.f32.mrf.mxu0
      %v1303 = vadd.f32 0.0, %v1302
      %v1304 = vpop.f32.mrf.mxu0
      %1305 = vmatprep.mubr.bf16.mxu0 0
      %1306 = vmatmul.mubr.bf16.gmra.mxu0 %v853
      %v1307 = vpop.f32.mrf.mxu0
      %v1308 = vadd.f32 0.0, %v1307
      %v1309 = vpop.f32.mrf.mxu0
      %v1310 = vpop.f32.mrf.mxu0
      %v1311 = vpop.f32.mrf.mxu0
      %1312 = vdwg.mxu0
      %vm1334 = vcmask 1046528
      %v1335 = vrot.slane %v1060, 1
      %v1336 = vrot.slane %v1063, 1
      %v1337 = vsel %vm1334, %v1335, %v1336
      %v1338 = vrot.slane %v1068, 1
      %v1339 = vsel %vm1334, %v1336, %v1338
      %v1340 = vrot.slane %v1072, 1
      %v1341 = vsel %vm1334, %v1338, %v1340
      %v1342 = vrot.slane %v1078, 1
      %v1343 = vsel %vm1334, %v1340, %v1342
      %v1344 = vrot.slane %v1082, 1
      %v1345 = vsel %vm1334, %v1342, %v1344
      %v1346 = vrot.slane %v1088, 1
      %v1347 = vsel %vm1334, %v1344, %v1346
      %v1348 = vrot.slane %v1092, 1
      %v1349 = vsel %vm1334, %v1346, %v1348
      %v1350 = vrot.slane %v1098, 1
      %v1351 = vsel %vm1334, %v1348, %v1350
      %v1352 = vrot.slane %v1102, 1
      %v1353 = vsel %vm1334, %v1350, %v1352
      %v1354 = vrot.slane %v1108, 1
      %v1355 = vsel %vm1334, %v1352, %v1354
      %v1356 = vrot.slane %v1112, 1
      %v1357 = vsel %vm1334, %v1354, %v1356
      %v1358 = vrot.slane %v1118, 1
      %v1359 = vsel %vm1334, %v1356, %v1358
      %v1360 = vrot.slane %v1122, 1
      %v1361 = vsel %vm1334, %v1358, %v1360
      %v1362 = vrot.slane %v1128, 1
      %v1363 = vsel %vm1334, %v1360, %v1362
      %v1364 = vrot.slane %v1132, 1
      %v1365 = vsel %vm1334, %v1362, %v1364
      %v1366 = vrot.slane %v1138, 1
      %v1367 = vsel %vm1334, %v1364, %v1366
      %v1368 = vrot.slane %v1142, 1
      %v1369 = vsel %vm1334, %v1366, %v1368
      %v1370 = vrot.slane %v1148, 1
      %v1371 = vsel %vm1334, %v1368, %v1370
      %v1372 = vrot.slane %v1152, 1
      %v1373 = vsel %vm1334, %v1370, %v1372
      %v1374 = vrot.slane %v1158, 1
      %v1375 = vsel %vm1334, %v1372, %v1374
      %1376 = vrot.lane.b32.xlu0 %v1337, 96
      %v1377 = vpop.permute.xlu0 %1376
      %1378 = vrot.lane.b32.xlu0 %v1339, 96
      %v1379 = vpop.permute.xlu0 %1378
      %1380 = vrot.lane.b32.xlu0 %v1341, 96
      %v1381 = vpop.permute.xlu0 %1380
      %1382 = vrot.lane.b32.xlu0 %v1343, 96
      %v1383 = vpop.permute.xlu0 %1382
      %1384 = vrot.lane.b32.xlu0 %v1345, 96
      %v1385 = vpop.permute.xlu0 %1384
      %1386 = vrot.lane.b32.xlu0 %v1347, 96
      %v1387 = vpop.permute.xlu0 %1386
      %1388 = vrot.lane.b32.xlu0 %v1349, 96
      %v1389 = vpop.permute.xlu0 %1388
      %1390 = vrot.lane.b32.xlu0 %v1351, 96
      %v1391 = vpop.permute.xlu0 %1390
      %1392 = vrot.lane.b32.xlu0 %v1353, 96
      %v1393 = vpop.permute.xlu0 %1392
      %1394 = vrot.lane.b32.xlu0 %v1355, 96
      %v1395 = vpop.permute.xlu0 %1394
      %1396 = vrot.lane.b32.xlu0 %v1357, 96
      %v1397 = vpop.permute.xlu0 %1396
      %1398 = vrot.lane.b32.xlu0 %v1359, 96
      %v1399 = vpop.permute.xlu0 %1398
      %1400 = vrot.lane.b32.xlu0 %v1361, 96
      %v1401 = vpop.permute.xlu0 %1400
      %1402 = vrot.lane.b32.xlu0 %v1363, 96
      %v1403 = vpop.permute.xlu0 %1402
      %1404 = vrot.lane.b32.xlu0 %v1365, 96
      %v1405 = vpop.permute.xlu0 %1404
      %1406 = vrot.lane.b32.xlu0 %v1367, 96
      %v1407 = vpop.permute.xlu0 %1406
      %1408 = vrot.lane.b32.xlu0 %v1369, 96
      %v1409 = vpop.permute.xlu0 %1408
      %1410 = vrot.lane.b32.xlu0 %v1371, 96
      %v1411 = vpop.permute.xlu0 %1410
      %1412 = vrot.lane.b32.xlu0 %v1373, 96
      %v1413 = vpop.permute.xlu0 %1412
      %1414 = vrot.lane.b32.xlu0 %v1375, 96
      %v1415 = vpop.permute.xlu0 %1414
      %v1436 = vadd.f32 %v1060, %v1377
      %v1437 = vadd.f32 %v1063, %v1379
      %v1438 = vadd.f32 %v1068, %v1381
      %v1439 = vadd.f32 %v1072, %v1383
      %v1440 = vadd.f32 %v1078, %v1385
      %v1441 = vadd.f32 %v1082, %v1387
      %v1442 = vadd.f32 %v1088, %v1389
      %v1443 = vadd.f32 %v1092, %v1391
      %v1444 = vadd.f32 %v1098, %v1393
      %v1445 = vadd.f32 %v1102, %v1395
      %v1446 = vadd.f32 %v1108, %v1397
      %v1447 = vadd.f32 %v1112, %v1399
      %v1448 = vadd.f32 %v1118, %v1401
      %v1449 = vadd.f32 %v1122, %v1403
      %v1450 = vadd.f32 %v1128, %v1405
      %v1451 = vadd.f32 %v1132, %v1407
      %v1452 = vadd.f32 %v1138, %v1409
      %v1453 = vadd.f32 %v1142, %v1411
      %v1454 = vadd.f32 %v1148, %v1413
      %v1455 = vadd.f32 %v1152, %v1415
      %vm1456 = vcmask 1045504
      %v1457 = vrot.slane %v1060, 2
      %v1458 = vrot.slane %v1063, 2
      %v1459 = vsel %vm1456, %v1457, %v1458
      %v1460 = vrot.slane %v1068, 2
      %v1461 = vsel %vm1456, %v1458, %v1460
      %v1462 = vrot.slane %v1072, 2
      %v1463 = vsel %vm1456, %v1460, %v1462
      %v1464 = vrot.slane %v1078, 2
      %v1465 = vsel %vm1456, %v1462, %v1464
      %v1466 = vrot.slane %v1082, 2
      %v1467 = vsel %vm1456, %v1464, %v1466
      %v1468 = vrot.slane %v1088, 2
      %v1469 = vsel %vm1456, %v1466, %v1468
      %v1470 = vrot.slane %v1092, 2
      %v1471 = vsel %vm1456, %v1468, %v1470
      %v1472 = vrot.slane %v1098, 2
      %v1473 = vsel %vm1456, %v1470, %v1472
      %v1474 = vrot.slane %v1102, 2
      %v1475 = vsel %vm1456, %v1472, %v1474
      %v1476 = vrot.slane %v1108, 2
      %v1477 = vsel %vm1456, %v1474, %v1476
      %v1478 = vrot.slane %v1112, 2
      %v1479 = vsel %vm1456, %v1476, %v1478
      %v1480 = vrot.slane %v1118, 2
      %v1481 = vsel %vm1456, %v1478, %v1480
      %v1482 = vrot.slane %v1122, 2
      %v1483 = vsel %vm1456, %v1480, %v1482
      %v1484 = vrot.slane %v1128, 2
      %v1485 = vsel %vm1456, %v1482, %v1484
      %v1486 = vrot.slane %v1132, 2
      %v1487 = vsel %vm1456, %v1484, %v1486
      %v1488 = vrot.slane %v1138, 2
      %v1489 = vsel %vm1456, %v1486, %v1488
      %v1490 = vrot.slane %v1142, 2
      %v1491 = vsel %vm1456, %v1488, %v1490
      %v1492 = vrot.slane %v1148, 2
      %v1493 = vsel %vm1456, %v1490, %v1492
      %v1494 = vrot.slane %v1152, 2
      %v1495 = vsel %vm1456, %v1492, %v1494
      %v1496 = vrot.slane %v1158, 2
      %v1497 = vsel %vm1456, %v1494, %v1496
      %1498 = vrot.lane.b32.xlu0 %v1459, 64
      %v1499 = vpop.permute.xlu0 %1498
      %1500 = vrot.lane.b32.xlu0 %v1461, 64
      %v1501 = vpop.permute.xlu0 %1500
      %1502 = vrot.lane.b32.xlu0 %v1463, 64
      %v1503 = vpop.permute.xlu0 %1502
      %1504 = vrot.lane.b32.xlu0 %v1465, 64
      %v1505 = vpop.permute.xlu0 %1504
      %1506 = vrot.lane.b32.xlu0 %v1467, 64
      %v1507 = vpop.permute.xlu0 %1506
      %1508 = vrot.lane.b32.xlu0 %v1469, 64
      %v1509 = vpop.permute.xlu0 %1508
      %1510 = vrot.lane.b32.xlu0 %v1471, 64
      %v1511 = vpop.permute.xlu0 %1510
      %1512 = vrot.lane.b32.xlu0 %v1473, 64
      %v1513 = vpop.permute.xlu0 %1512
      %1514 = vrot.lane.b32.xlu0 %v1475, 64
      %v1515 = vpop.permute.xlu0 %1514
      %1516 = vrot.lane.b32.xlu0 %v1477, 64
      %v1517 = vpop.permute.xlu0 %1516
      %1518 = vrot.lane.b32.xlu0 %v1479, 64
      %v1519 = vpop.permute.xlu0 %1518
      %1520 = vrot.lane.b32.xlu0 %v1481, 64
      %v1521 = vpop.permute.xlu0 %1520
      %1522 = vrot.lane.b32.xlu0 %v1483, 64
      %v1523 = vpop.permute.xlu0 %1522
      %1524 = vrot.lane.b32.xlu0 %v1485, 64
      %v1525 = vpop.permute.xlu0 %1524
      %1526 = vrot.lane.b32.xlu0 %v1487, 64
      %v1527 = vpop.permute.xlu0 %1526
      %1528 = vrot.lane.b32.xlu0 %v1489, 64
      %v1529 = vpop.permute.xlu0 %1528
      %1530 = vrot.lane.b32.xlu0 %v1491, 64
      %v1531 = vpop.permute.xlu0 %1530
      %1532 = vrot.lane.b32.xlu0 %v1493, 64
      %v1533 = vpop.permute.xlu0 %1532
      %1534 = vrot.lane.b32.xlu0 %v1495, 64
      %v1535 = vpop.permute.xlu0 %1534
      %1536 = vrot.lane.b32.xlu0 %v1497, 64
      %v1537 = vpop.permute.xlu0 %1536
      %v1558 = vadd.f32 %v1436, %v1499
      %v1559 = vadd.f32 %v1437, %v1501
      %v1560 = vadd.f32 %v1438, %v1503
      %v1561 = vadd.f32 %v1439, %v1505
      %v1562 = vadd.f32 %v1440, %v1507
      %v1563 = vadd.f32 %v1441, %v1509
      %v1564 = vadd.f32 %v1442, %v1511
      %v1565 = vadd.f32 %v1443, %v1513
      %v1566 = vadd.f32 %v1444, %v1515
      %v1567 = vadd.f32 %v1445, %v1517
      %v1568 = vadd.f32 %v1446, %v1519
      %v1569 = vadd.f32 %v1447, %v1521
      %v1570 = vadd.f32 %v1448, %v1523
      %v1571 = vadd.f32 %v1449, %v1525
      %v1572 = vadd.f32 %v1450, %v1527
      %v1573 = vadd.f32 %v1451, %v1529
      %v1574 = vadd.f32 %v1452, %v1531
      %v1575 = vadd.f32 %v1453, %v1533
      %v1576 = vadd.f32 %v1454, %v1535
      %v1577 = vadd.f32 %v1455, %v1537
      %1579 = vrot.lane.b32.xlu0 %v1068, 32
      %v1580 = vpop.permute.xlu0 %1579
      %1581 = vrot.lane.b32.xlu0 %v1072, 32
      %v1582 = vpop.permute.xlu0 %1581
      %1583 = vrot.lane.b32.xlu0 %v1078, 32
      %v1584 = vpop.permute.xlu0 %1583
      %1585 = vrot.lane.b32.xlu0 %v1082, 32
      %v1586 = vpop.permute.xlu0 %1585
      %1587 = vrot.lane.b32.xlu0 %v1088, 32
      %v1588 = vpop.permute.xlu0 %1587
      %1589 = vrot.lane.b32.xlu0 %v1092, 32
      %v1590 = vpop.permute.xlu0 %1589
      %1591 = vrot.lane.b32.xlu0 %v1098, 32
      %v1592 = vpop.permute.xlu0 %1591
      %1593 = vrot.lane.b32.xlu0 %v1102, 32
      %v1594 = vpop.permute.xlu0 %1593
      %1595 = vrot.lane.b32.xlu0 %v1108, 32
      %v1596 = vpop.permute.xlu0 %1595
      %1597 = vrot.lane.b32.xlu0 %v1112, 32
      %v1598 = vpop.permute.xlu0 %1597
      %1599 = vrot.lane.b32.xlu0 %v1118, 32
      %v1600 = vpop.permute.xlu0 %1599
      %1601 = vrot.lane.b32.xlu0 %v1122, 32
      %v1602 = vpop.permute.xlu0 %1601
      %1603 = vrot.lane.b32.xlu0 %v1128, 32
      %v1604 = vpop.permute.xlu0 %1603
      %1605 = vrot.lane.b32.xlu0 %v1132, 32
      %v1606 = vpop.permute.xlu0 %1605
      %1607 = vrot.lane.b32.xlu0 %v1138, 32
      %v1608 = vpop.permute.xlu0 %1607
      %1609 = vrot.lane.b32.xlu0 %v1142, 32
      %v1610 = vpop.permute.xlu0 %1609
      %1611 = vrot.lane.b32.xlu0 %v1148, 32
      %v1612 = vpop.permute.xlu0 %1611
      %1613 = vrot.lane.b32.xlu0 %v1152, 32
      %v1614 = vpop.permute.xlu0 %1613
      %1615 = vrot.lane.b32.xlu0 %v1158, 32
      %v1616 = vpop.permute.xlu0 %1615
      %1617 = vrot.lane.b32.xlu0 %v1162, 32
      %v1618 = vpop.permute.xlu0 %1617
      %v1639 = vadd.f32 %v1558, %v1580
      %v1640 = vadd.f32 %v1559, %v1582
      %v1641 = vadd.f32 %v1560, %v1584
      %v1642 = vadd.f32 %v1561, %v1586
      %v1643 = vadd.f32 %v1562, %v1588
      %v1644 = vadd.f32 %v1563, %v1590
      %v1645 = vadd.f32 %v1564, %v1592
      %v1646 = vadd.f32 %v1565, %v1594
      %v1647 = vadd.f32 %v1566, %v1596
      %v1648 = vadd.f32 %v1567, %v1598
      %v1649 = vadd.f32 %v1568, %v1600
      %v1650 = vadd.f32 %v1569, %v1602
      %v1651 = vadd.f32 %v1570, %v1604
      %v1652 = vadd.f32 %v1571, %v1606
      %v1653 = vadd.f32 %v1572, %v1608
      %v1654 = vadd.f32 %v1573, %v1610
      %v1655 = vadd.f32 %v1574, %v1612
      %v1656 = vadd.f32 %v1575, %v1614
      %v1657 = vadd.f32 %v1576, %v1616
      %v1658 = vadd.f32 %v1577, %v1618
      %v1680 = vrot.slane %v1070, 1
      %v1681 = vrot.slane %v1074, 1
      %v1682 = vsel %vm1334, %v1680, %v1681
      %v1683 = vrot.slane %v1080, 1
      %v1684 = vsel %vm1334, %v1681, %v1683
      %v1685 = vrot.slane %v1084, 1
      %v1686 = vsel %vm1334, %v1683, %v1685
      %v1687 = vrot.slane %v1090, 1
      %v1688 = vsel %vm1334, %v1685, %v1687
      %v1689 = vrot.slane %v1094, 1
      %v1690 = vsel %vm1334, %v1687, %v1689
      %v1691 = vrot.slane %v1100, 1
      %v1692 = vsel %vm1334, %v1689, %v1691
      %v1693 = vrot.slane %v1104, 1
      %v1694 = vsel %vm1334, %v1691, %v1693
      %v1695 = vrot.slane %v1110, 1
      %v1696 = vsel %vm1334, %v1693, %v1695
      %v1697 = vrot.slane %v1114, 1
      %v1698 = vsel %vm1334, %v1695, %v1697
      %v1699 = vrot.slane %v1120, 1
      %v1700 = vsel %vm1334, %v1697, %v1699
      %v1701 = vrot.slane %v1124, 1
      %v1702 = vsel %vm1334, %v1699, %v1701
      %v1703 = vrot.slane %v1130, 1
      %v1704 = vsel %vm1334, %v1701, %v1703
      %v1705 = vrot.slane %v1134, 1
      %v1706 = vsel %vm1334, %v1703, %v1705
      %v1707 = vrot.slane %v1140, 1
      %v1708 = vsel %vm1334, %v1705, %v1707
      %v1709 = vrot.slane %v1144, 1
      %v1710 = vsel %vm1334, %v1707, %v1709
      %v1711 = vrot.slane %v1150, 1
      %v1712 = vsel %vm1334, %v1709, %v1711
      %v1713 = vrot.slane %v1154, 1
      %v1714 = vsel %vm1334, %v1711, %v1713
      %v1715 = vrot.slane %v1160, 1
      %v1716 = vsel %vm1334, %v1713, %v1715
      %v1717 = vrot.slane %v1164, 1
      %v1718 = vsel %vm1334, %v1715, %v1717
      %v1719 = vrot.slane %v1169, 1
      %v1720 = vsel %vm1334, %v1717, %v1719
      %v1741 = vadd.f32 %v1639, %v1682
      %v1742 = vadd.f32 %v1640, %v1684
      %v1743 = vadd.f32 %v1641, %v1686
      %v1744 = vadd.f32 %v1642, %v1688
      %v1745 = vadd.f32 %v1643, %v1690
      %v1746 = vadd.f32 %v1644, %v1692
      %v1747 = vadd.f32 %v1645, %v1694
      %v1748 = vadd.f32 %v1646, %v1696
      %v1749 = vadd.f32 %v1647, %v1698
      %v1750 = vadd.f32 %v1648, %v1700
      %v1751 = vadd.f32 %v1649, %v1702
      %v1752 = vadd.f32 %v1650, %v1704
      %v1753 = vadd.f32 %v1651, %v1706
      %v1754 = vadd.f32 %v1652, %v1708
      %v1755 = vadd.f32 %v1653, %v1710
      %v1756 = vadd.f32 %v1654, %v1712
      %v1757 = vadd.f32 %v1655, %v1714
      %v1758 = vadd.f32 %v1656, %v1716
      %v1759 = vadd.f32 %v1657, %v1718
      %v1760 = vadd.f32 %v1658, %v1720
      %v1761 = vrot.slane %v1070, 2
      %v1762 = vrot.slane %v1074, 2
      %v1763 = vsel %vm1456, %v1761, %v1762
      %v1764 = vrot.slane %v1080, 2
      %v1765 = vsel %vm1456, %v1762, %v1764
      %v1766 = vrot.slane %v1084, 2
      %v1767 = vsel %vm1456, %v1764, %v1766
      %v1768 = vrot.slane %v1090, 2
      %v1769 = vsel %vm1456, %v1766, %v1768
      %v1770 = vrot.slane %v1094, 2
      %v1771 = vsel %vm1456, %v1768, %v1770
      %v1772 = vrot.slane %v1100, 2
      %v1773 = vsel %vm1456, %v1770, %v1772
      %v1774 = vrot.slane %v1104, 2
      %v1775 = vsel %vm1456, %v1772, %v1774
      %v1776 = vrot.slane %v1110, 2
      %v1777 = vsel %vm1456, %v1774, %v1776
      %v1778 = vrot.slane %v1114, 2
      %v1779 = vsel %vm1456, %v1776, %v1778
      %v1780 = vrot.slane %v1120, 2
      %v1781 = vsel %vm1456, %v1778, %v1780
      %v1782 = vrot.slane %v1124, 2
      %v1783 = vsel %vm1456, %v1780, %v1782
      %v1784 = vrot.slane %v1130, 2
      %v1785 = vsel %vm1456, %v1782, %v1784
      %v1786 = vrot.slane %v1134, 2
      %v1787 = vsel %vm1456, %v1784, %v1786
      %v1788 = vrot.slane %v1140, 2
      %v1789 = vsel %vm1456, %v1786, %v1788
      %v1790 = vrot.slane %v1144, 2
      %v1791 = vsel %vm1456, %v1788, %v1790
      %v1792 = vrot.slane %v1150, 2
      %v1793 = vsel %vm1456, %v1790, %v1792
      %v1794 = vrot.slane %v1154, 2
      %v1795 = vsel %vm1456, %v1792, %v1794
      %v1796 = vrot.slane %v1160, 2
      %v1797 = vsel %vm1456, %v1794, %v1796
      %v1798 = vrot.slane %v1164, 2
      %v1799 = vsel %vm1456, %v1796, %v1798
      %v1800 = vrot.slane %v1169, 2
      %v1801 = vsel %vm1456, %v1798, %v1800
      %1802 = vrot.lane.b32.xlu0 %v1763, 96
      %v1803 = vpop.permute.xlu0 %1802
      %1804 = vrot.lane.b32.xlu0 %v1765, 96
      %v1805 = vpop.permute.xlu0 %1804
      %1806 = vrot.lane.b32.xlu0 %v1767, 96
      %v1807 = vpop.permute.xlu0 %1806
      %1808 = vrot.lane.b32.xlu0 %v1769, 96
      %v1809 = vpop.permute.xlu0 %1808
      %1810 = vrot.lane.b32.xlu0 %v1771, 96
      %v1811 = vpop.permute.xlu0 %1810
      %1812 = vrot.lane.b32.xlu0 %v1773, 96
      %v1813 = vpop.permute.xlu0 %1812
      %1814 = vrot.lane.b32.xlu0 %v1775, 96
      %v1815 = vpop.permute.xlu0 %1814
      %1816 = vrot.lane.b32.xlu0 %v1777, 96
      %v1817 = vpop.permute.xlu0 %1816
      %1818 = vrot.lane.b32.xlu0 %v1779, 96
      %v1819 = vpop.permute.xlu0 %1818
      %1820 = vrot.lane.b32.xlu0 %v1781, 96
      %v1821 = vpop.permute.xlu0 %1820
      %1822 = vrot.lane.b32.xlu0 %v1783, 96
      %v1823 = vpop.permute.xlu0 %1822
      %1824 = vrot.lane.b32.xlu0 %v1785, 96
      %v1825 = vpop.permute.xlu0 %1824
      %1826 = vrot.lane.b32.xlu0 %v1787, 96
      %v1827 = vpop.permute.xlu0 %1826
      %1828 = vrot.lane.b32.xlu0 %v1789, 96
      %v1829 = vpop.permute.xlu0 %1828
      %1830 = vrot.lane.b32.xlu0 %v1791, 96
      %v1831 = vpop.permute.xlu0 %1830
      %1832 = vrot.lane.b32.xlu0 %v1793, 96
      %v1833 = vpop.permute.xlu0 %1832
      %1834 = vrot.lane.b32.xlu0 %v1795, 96
      %v1835 = vpop.permute.xlu0 %1834
      %1836 = vrot.lane.b32.xlu0 %v1797, 96
      %v1837 = vpop.permute.xlu0 %1836
      %1838 = vrot.lane.b32.xlu0 %v1799, 96
      %v1839 = vpop.permute.xlu0 %1838
      %1840 = vrot.lane.b32.xlu0 %v1801, 96
      %v1841 = vpop.permute.xlu0 %1840
      %v1862 = vadd.f32 %v1741, %v1803
      %v1863 = vadd.f32 %v1742, %v1805
      %v1864 = vadd.f32 %v1743, %v1807
      %v1865 = vadd.f32 %v1744, %v1809
      %v1866 = vadd.f32 %v1745, %v1811
      %v1867 = vadd.f32 %v1746, %v1813
      %v1868 = vadd.f32 %v1747, %v1815
      %v1869 = vadd.f32 %v1748, %v1817
      %v1870 = vadd.f32 %v1749, %v1819
      %v1871 = vadd.f32 %v1750, %v1821
      %v1872 = vadd.f32 %v1751, %v1823
      %v1873 = vadd.f32 %v1752, %v1825
      %v1874 = vadd.f32 %v1753, %v1827
      %v1875 = vadd.f32 %v1754, %v1829
      %v1876 = vadd.f32 %v1755, %v1831
      %v1877 = vadd.f32 %v1756, %v1833
      %v1878 = vadd.f32 %v1757, %v1835
      %v1879 = vadd.f32 %v1758, %v1837
      %v1880 = vadd.f32 %v1759, %v1839
      %v1881 = vadd.f32 %v1760, %v1841
      %1883 = vrot.lane.b32.xlu0 %v1080, 64
      %v1884 = vpop.permute.xlu0 %1883
      %1885 = vrot.lane.b32.xlu0 %v1084, 64
      %v1886 = vpop.permute.xlu0 %1885
      %1887 = vrot.lane.b32.xlu0 %v1090, 64
      %v1888 = vpop.permute.xlu0 %1887
      %1889 = vrot.lane.b32.xlu0 %v1094, 64
      %v1890 = vpop.permute.xlu0 %1889
      %1891 = vrot.lane.b32.xlu0 %v1100, 64
      %v1892 = vpop.permute.xlu0 %1891
      %1893 = vrot.lane.b32.xlu0 %v1104, 64
      %v1894 = vpop.permute.xlu0 %1893
      %1895 = vrot.lane.b32.xlu0 %v1110, 64
      %v1896 = vpop.permute.xlu0 %1895
      %1897 = vrot.lane.b32.xlu0 %v1114, 64
      %v1898 = vpop.permute.xlu0 %1897
      %1899 = vrot.lane.b32.xlu0 %v1120, 64
      %v1900 = vpop.permute.xlu0 %1899
      %1901 = vrot.lane.b32.xlu0 %v1124, 64
      %v1902 = vpop.permute.xlu0 %1901
      %1903 = vrot.lane.b32.xlu0 %v1130, 64
      %v1904 = vpop.permute.xlu0 %1903
      %1905 = vrot.lane.b32.xlu0 %v1134, 64
      %v1906 = vpop.permute.xlu0 %1905
      %1907 = vrot.lane.b32.xlu0 %v1140, 64
      %v1908 = vpop.permute.xlu0 %1907
      %1909 = vrot.lane.b32.xlu0 %v1144, 64
      %v1910 = vpop.permute.xlu0 %1909
      %1911 = vrot.lane.b32.xlu0 %v1150, 64
      %v1912 = vpop.permute.xlu0 %1911
      %1913 = vrot.lane.b32.xlu0 %v1154, 64
      %v1914 = vpop.permute.xlu0 %1913
      %1915 = vrot.lane.b32.xlu0 %v1160, 64
      %v1916 = vpop.permute.xlu0 %1915
      %1917 = vrot.lane.b32.xlu0 %v1164, 64
      %v1918 = vpop.permute.xlu0 %1917
      %1919 = vrot.lane.b32.xlu0 %v1169, 64
      %v1920 = vpop.permute.xlu0 %1919
      %1921 = vrot.lane.b32.xlu0 %v1172, 64
      %v1922 = vpop.permute.xlu0 %1921
      %v1943 = vadd.f32 %v1862, %v1884
      %v1944 = vadd.f32 %v1863, %v1886
      %v1945 = vadd.f32 %v1864, %v1888
      %v1946 = vadd.f32 %v1865, %v1890
      %v1947 = vadd.f32 %v1866, %v1892
      %v1948 = vadd.f32 %v1867, %v1894
      %v1949 = vadd.f32 %v1868, %v1896
      %v1950 = vadd.f32 %v1869, %v1898
      %v1951 = vadd.f32 %v1870, %v1900
      %v1952 = vadd.f32 %v1871, %v1902
      %v1953 = vadd.f32 %v1872, %v1904
      %v1954 = vadd.f32 %v1873, %v1906
      %v1955 = vadd.f32 %v1874, %v1908
      %v1956 = vadd.f32 %v1875, %v1910
      %v1957 = vadd.f32 %v1876, %v1912
      %v1958 = vadd.f32 %v1877, %v1914
      %v1959 = vadd.f32 %v1878, %v1916
      %v1960 = vadd.f32 %v1879, %v1918
      %v1961 = vadd.f32 %v1880, %v1920
      %v1962 = vadd.f32 %v1881, %v1922
      %v1964 = vrot.slane %v1172, 1
      %v1965 = vsel %vm1334, %v1719, %v1964
      %v1966 = vrot.slane %v1177, 1
      %v1967 = vsel %vm1334, %v1964, %v1966
      %1968 = vrot.lane.b32.xlu0 %v1686, 32
      %v1969 = vpop.permute.xlu0 %1968
      %1970 = vrot.lane.b32.xlu0 %v1688, 32
      %v1971 = vpop.permute.xlu0 %1970
      %1972 = vrot.lane.b32.xlu0 %v1690, 32
      %v1973 = vpop.permute.xlu0 %1972
      %1974 = vrot.lane.b32.xlu0 %v1692, 32
      %v1975 = vpop.permute.xlu0 %1974
      %1976 = vrot.lane.b32.xlu0 %v1694, 32
      %v1977 = vpop.permute.xlu0 %1976
      %1978 = vrot.lane.b32.xlu0 %v1696, 32
      %v1979 = vpop.permute.xlu0 %1978
      %1980 = vrot.lane.b32.xlu0 %v1698, 32
      %v1981 = vpop.permute.xlu0 %1980
      %1982 = vrot.lane.b32.xlu0 %v1700, 32
      %v1983 = vpop.permute.xlu0 %1982
      %1984 = vrot.lane.b32.xlu0 %v1702, 32
      %v1985 = vpop.permute.xlu0 %1984
      %1986 = vrot.lane.b32.xlu0 %v1704, 32
      %v1987 = vpop.permute.xlu0 %1986
      %1988 = vrot.lane.b32.xlu0 %v1706, 32
      %v1989 = vpop.permute.xlu0 %1988
      %1990 = vrot.lane.b32.xlu0 %v1708, 32
      %v1991 = vpop.permute.xlu0 %1990
      %1992 = vrot.lane.b32.xlu0 %v1710, 32
      %v1993 = vpop.permute.xlu0 %1992
      %1994 = vrot.lane.b32.xlu0 %v1712, 32
      %v1995 = vpop.permute.xlu0 %1994
      %1996 = vrot.lane.b32.xlu0 %v1714, 32
      %v1997 = vpop.permute.xlu0 %1996
      %1998 = vrot.lane.b32.xlu0 %v1716, 32
      %v1999 = vpop.permute.xlu0 %1998
      %2000 = vrot.lane.b32.xlu0 %v1718, 32
      %v2001 = vpop.permute.xlu0 %2000
      %2002 = vrot.lane.b32.xlu0 %v1720, 32
      %v2003 = vpop.permute.xlu0 %2002
      %2004 = vrot.lane.b32.xlu0 %v1965, 32
      %v2005 = vpop.permute.xlu0 %2004
      %2006 = vrot.lane.b32.xlu0 %v1967, 32
      %v2007 = vpop.permute.xlu0 %2006
      %v2028 = vadd.f32 %v1943, %v1969
      %v2029 = vadd.f32 %v1944, %v1971
      %v2030 = vadd.f32 %v1945, %v1973
      %v2031 = vadd.f32 %v1946, %v1975
      %v2032 = vadd.f32 %v1947, %v1977
      %v2033 = vadd.f32 %v1948, %v1979
      %v2034 = vadd.f32 %v1949, %v1981
      %v2035 = vadd.f32 %v1950, %v1983
      %v2036 = vadd.f32 %v1951, %v1985
      %v2037 = vadd.f32 %v1952, %v1987
      %v2038 = vadd.f32 %v1953, %v1989
      %v2039 = vadd.f32 %v1954, %v1991
      %v2040 = vadd.f32 %v1955, %v1993
      %v2041 = vadd.f32 %v1956, %v1995
      %v2042 = vadd.f32 %v1957, %v1997
      %v2043 = vadd.f32 %v1958, %v1999
      %v2044 = vadd.f32 %v1959, %v2001
      %v2045 = vadd.f32 %v1960, %v2003
      %v2046 = vadd.f32 %v1961, %v2005
      %v2047 = vadd.f32 %v1962, %v2007
      %v2069 = vrot.slane %v1228, 2
      %v2070 = vrot.slane %v1231, 2
      %v2071 = vsel %vm1456, %v2069, %v2070
      %v2072 = vrot.slane %v1236, 2
      %v2073 = vsel %vm1456, %v2070, %v2072
      %v2074 = vrot.slane %v1239, 2
      %v2075 = vsel %vm1456, %v2072, %v2074
      %v2076 = vrot.slane %v1244, 2
      %v2077 = vsel %vm1456, %v2074, %v2076
      %v2078 = vrot.slane %v1247, 2
      %v2079 = vsel %vm1456, %v2076, %v2078
      %v2080 = vrot.slane %v1252, 2
      %v2081 = vsel %vm1456, %v2078, %v2080
      %v2082 = vrot.slane %v1255, 2
      %v2083 = vsel %vm1456, %v2080, %v2082
      %v2084 = vrot.slane %v1260, 2
      %v2085 = vsel %vm1456, %v2082, %v2084
      %v2086 = vrot.slane %v1263, 2
      %v2087 = vsel %vm1456, %v2084, %v2086
      %v2088 = vrot.slane %v1268, 2
      %v2089 = vsel %vm1456, %v2086, %v2088
      %v2090 = vrot.slane %v1271, 2
      %v2091 = vsel %vm1456, %v2088, %v2090
      %v2092 = vrot.slane %v1276, 2
      %v2093 = vsel %vm1456, %v2090, %v2092
      %v2094 = vrot.slane %v1279, 2
      %v2095 = vsel %vm1456, %v2092, %v2094
      %v2096 = vrot.slane %v1284, 2
      %v2097 = vsel %vm1456, %v2094, %v2096
      %v2098 = vrot.slane %v1287, 2
      %v2099 = vsel %vm1456, %v2096, %v2098
      %v2100 = vrot.slane %v1292, 2
      %v2101 = vsel %vm1456, %v2098, %v2100
      %v2102 = vrot.slane %v1295, 2
      %v2103 = vsel %vm1456, %v2100, %v2102
      %v2104 = vrot.slane %v1300, 2
      %v2105 = vsel %vm1456, %v2102, %v2104
      %v2106 = vrot.slane %v1303, 2
      %v2107 = vsel %vm1456, %v2104, %v2106
      %v2108 = vrot.slane %v1308, 2
      %v2109 = vsel %vm1456, %v2106, %v2108
      %v2130 = vadd.f32 %v2028, %v2071
      %v2131 = vadd.f32 %v2029, %v2073
      %v2132 = vadd.f32 %v2030, %v2075
      %v2133 = vadd.f32 %v2031, %v2077
      %v2134 = vadd.f32 %v2032, %v2079
      %v2135 = vadd.f32 %v2033, %v2081
      %v2136 = vadd.f32 %v2034, %v2083
      %v2137 = vadd.f32 %v2035, %v2085
      %v2138 = vadd.f32 %v2036, %v2087
      %v2139 = vadd.f32 %v2037, %v2089
      %v2140 = vadd.f32 %v2038, %v2091
      %v2141 = vadd.f32 %v2039, %v2093
      %v2142 = vadd.f32 %v2040, %v2095
      %v2143 = vadd.f32 %v2041, %v2097
      %v2144 = vadd.f32 %v2042, %v2099
      %v2145 = vadd.f32 %v2043, %v2101
      %v2146 = vadd.f32 %v2044, %v2103
      %v2147 = vadd.f32 %v2045, %v2105
      %v2148 = vadd.f32 %v2046, %v2107
      %v2149 = vadd.f32 %v2047, %v2109
      %v2150 = vld [vmem:[%s7] sm:$0x1]
      %v2152 = vlaneseq
      %v2153 = vshrl.u32 %v2152, 7
      %v2154 = vsub.s32 0, %v2153
      %v2155 = vrot.slane %v2150, %v2154
      %v2157 = vadd.f32 %v2130, %v2155
      %v2158 = vadd.f32 %v2131, %v2155
      %v2159 = vadd.f32 %v2132, %v2155
      %v2160 = vadd.f32 %v2133, %v2155
      %v2161 = vadd.f32 %v2134, %v2155
      %v2162 = vadd.f32 %v2135, %v2155
      %v2163 = vadd.f32 %v2136, %v2155
      %v2164 = vadd.f32 %v2137, %v2155
      %v2165 = vadd.f32 %v2138, %v2155
      %v2166 = vadd.f32 %v2139, %v2155
      %v2167 = vadd.f32 %v2140, %v2155
      %v2168 = vadd.f32 %v2141, %v2155
      %v2169 = vadd.f32 %v2142, %v2155
      %v2170 = vadd.f32 %v2143, %v2155
      %v2171 = vadd.f32 %v2144, %v2155
      %v2172 = vadd.f32 %v2145, %v2155
      %v2173 = vadd.f32 %v2146, %v2155
      %v2174 = vadd.f32 %v2147, %v2155
      %v2175 = vadd.f32 %v2148, %v2155
      %v2176 = vadd.f32 %v2149, %v2155
      %v2177 = vmul.f32 %v2157, %v653
      %v2178 = vmul.f32 %v2158, %v658
      %v2179 = vmul.f32 %v2159, %v663
      %v2180 = vmul.f32 %v2160, %v668
      %v2181 = vmul.f32 %v2161, %v673
      %v2182 = vmul.f32 %v2162, %v678
      %v2183 = vmul.f32 %v2163, %v683
      %v2184 = vmul.f32 %v2164, %v688
      %v2185 = vmul.f32 %v2165, %v693
      %v2186 = vmul.f32 %v2166, %v698
      %v2187 = vmul.f32 %v2167, %v703
      %v2188 = vmul.f32 %v2168, %v708
      %v2189 = vmul.f32 %v2169, %v713
      %v2190 = vmul.f32 %v2170, %v718
      %v2191 = vmul.f32 %v2171, %v723
      %v2192 = vmul.f32 %v2172, %v728
      %v2193 = vmul.f32 %v2173, %v733
      %v2194 = vmul.f32 %v2174, %v738
      %v2195 = vmul.f32 %v2175, %v743
      %v2196 = vmul.f32 %v2176, %v748
      %vm2197 = vcmask 261120
      %v2198 = vsel %vm2197, %v2177, 0.0
      %v2199 = vsel %vm2197, %v2178, 0.0
      %v2200 = vsel %vm2197, %v2179, 0.0
      %v2201 = vsel %vm2197, %v2180, 0.0
      %v2202 = vsel %vm2197, %v2181, 0.0
      %v2203 = vsel %vm2197, %v2182, 0.0
      %v2204 = vsel %vm2197, %v2183, 0.0
      %v2205 = vsel %vm2197, %v2184, 0.0
      %v2206 = vsel %vm2197, %v2185, 0.0
      %v2207 = vsel %vm2197, %v2186, 0.0
      %v2208 = vsel %vm2197, %v2187, 0.0
      %v2209 = vsel %vm2197, %v2188, 0.0
      %v2210 = vsel %vm2197, %v2189, 0.0
      %v2211 = vsel %vm2197, %v2190, 0.0
      %v2212 = vsel %vm2197, %v2191, 0.0
      %v2213 = vsel %vm2197, %v2192, 0.0
      %v2214 = vsel %vm2197, %v2193, 0.0
      %v2215 = vsel %vm2197, %v2194, 0.0
      %v2216 = vsel %vm2197, %v2195, 0.0
      %v2217 = vsel %vm2197, %v2196, 0.0
      %2218 = vst [vmem:[%s305] sm:$0xff] %v2198
      %2219 = vst [vmem:[%s305 + $0x8] sm:$0xff] %v2199
      %2220 = vst [vmem:[%s305 + $0x10] sm:$0xff] %v2200
      %2221 = vst [vmem:[%s305 + $0x18] sm:$0xff] %v2201
      %2222 = vst [vmem:[%s305 + $0x20] sm:$0xff] %v2202
      %2223 = vst [vmem:[%s305 + $0x28] sm:$0xff] %v2203
      %2224 = vst [vmem:[%s305 + $0x30] sm:$0xff] %v2204
      %2225 = vst [vmem:[%s305 + $0x38] sm:$0xff] %v2205
      %2226 = vst [vmem:[%s305 + $0x40] sm:$0xff] %v2206
      %2227 = vst [vmem:[%s305 + $0x48] sm:$0xff] %v2207
      %2228 = vst [vmem:[%s305 + $0x50] sm:$0xff] %v2208
      %2229 = vst [vmem:[%s305 + $0x58] sm:$0xff] %v2209
      %2230 = vst [vmem:[%s305 + $0x60] sm:$0xff] %v2210
      %2231 = vst [vmem:[%s305 + $0x68] sm:$0xff] %v2211
      %2232 = vst [vmem:[%s305 + $0x70] sm:$0xff] %v2212
      %2233 = vst [vmem:[%s305 + $0x78] sm:$0xff] %v2213
      %2234 = vst [vmem:[%s305 + $0x80] sm:$0xff] %v2214
      %2235 = vst [vmem:[%s305 + $0x88] sm:$0xff] %v2215
      %2236 = vst [vmem:[%s305 + $0x90] sm:$0xff] %v2216
      %2237 = vst [vmem:[%s305 + $0x98] sm:$0xff] %v2217
      %p2238 = scmp.lt.s32.totalorder %s19, 1
      %s2239 = scalar_select %p2238, %s19, 1
      %s2240 = smul.addr %s2239, 20
      %s2241 = smul.addr %s2240, 8
      %s2242 = scalar_lea.vmem %s8, %s2241
      // Predicated region
      $region53: #{dense_block_forward.5} parent=51 // pred_check
        %p2243 = pneg %p210
      $region54: #{dense_block_forward.5} parent=51 // pred_check_branch
        %2245 = sbr.rel (%p2243) target = $region56
      $region55: #{dense_block_forward.5} parent=51 // pred_region
        _
      $region56: #{dense_block_forward.5} parent=51 // pred_fallthru
        _
    $region52: #{dense_block_forward.5} parent=5 // pred_fallthru
      _
    %p2246 = scmp.le.s32.totalorder 2, %s14
    // Predicated region
    $region57: #{dense_block_forward.5} parent=5 // pred_check
      %p2247 = pneg %p2246
    $region58: #{dense_block_forward.5} parent=5 // pred_check_branch
      %2249 = sbr.rel (%p2247) target = $region60
    $region59: #{dense_block_forward.5} parent=5 // pred_region
      %s2250 = ssub.s32 %s14, 2
      // Predicated region
      $region61: #{dense_block_forward.5} parent=59 // pred_check
        %p2251 = pneg %p216
      $region62: #{dense_block_forward.5} parent=59 // pred_check_branch
        %2253 = sbr.rel (%p2251) target = $region64
      $region63: #{dense_block_forward.5} parent=59 // pred_region
        %p2254 = scmp.lt.s32.totalorder %s20, 1
        %s2255 = scalar_select %p2254, %s20, 1
        %s2256 = smul.addr %s2255, 20
        %s2257 = smul.addr %s2256, 8
        %s2258 = scalar_lea.vmem %s8, %s2257
      $region64: #{dense_block_forward.5} parent=59 // pred_fallthru
        _
    $region60: #{dense_block_forward.5} parent=5 // pred_fallthru
      _
  $region6: #{dense_block_forward.5} parent=0 // loop_footer
    %s18 = sadd.s32 1, %s14
  $region7: #{dense_block_forward.5} parent=0 // loop_footer_branch
    %13 = sbr.rel target = $region3
  $region8: #{dense_block_forward.5} parent=0 // loop_exit
    _

</llo_original>
